<compile_context>
chip_gen: v5e
topology: v5e:2x2
jax: 0.10.0
libtpu: 0.0.40
codegen_flags: <defaults>
</compile_context>

<pallas_src>
import functools

import jax
import jax.numpy as jnp
from jax import lax
from jax.experimental import pallas as pl
from jax.experimental.pallas import tpu as pltpu


def _round_up(n, m):
    return ((n + m - 1) // m) * m


def _largest_divisor_leq(n, cap):
    cap = max(1, min(n, cap))
    for d in range(cap, 0, -1):
        if n % d == 0:
            return d
    return 1


@functools.lru_cache(None)
def _vmem_limit():
    """Per-TensorCore VMEM budget: physical capacity minus headroom.

    ~48 MiB on v7x (64 MiB physical), ~112 MiB on v5e/v6e (128 MiB physical).
    Falls back to the conservative v7x number if the query is unavailable.
    """
    cap = 64 * 1024 * 1024
    try:
        info_fn = getattr(pltpu, "get_tpu_info", None)
        if info_fn is not None:
            cap = int(info_fn().vmem_capacity_bytes)
    except Exception:
        pass
    return max(cap - 16 * 1024 * 1024, 32 * 1024 * 1024)


# ----------------------------------------------------------------------------
# Kernels
# ----------------------------------------------------------------------------
def _rowmm_kernel(*refs, act, n_in):
    """One (row-block, col-block) tile of (optional SiLU ->) sum_i x_i @ W_i + b.

    refs = (x_0..x_{n_in-1}, w_0..w_{n_in-1}, b, out)
      x_i: [bn, K_i]   w_i: [K_i, gn]   b: [1, gn]   out: [bn, gn]

    Trailing partial row blocks compute on padded/garbage rows (including SiLU
    of garbage); those rows are never stored, so this is benign — do not add a
    cross-row reduction here.
    """
    x_refs = refs[:n_in]
    w_refs = refs[n_in:2 * n_in]
    b_ref = refs[2 * n_in]
    o_ref = refs[2 * n_in + 1]

    acc = None
    for x_ref, w_ref in zip(x_refs, w_refs):
        x = x_ref[...]
        if act == "silu":
            xf = x.astype(jnp.float32)
            x = xf * jax.nn.sigmoid(xf)          # SiLU in f32 (VPU + EUP)
        d = jnp.dot(x.astype(w_ref.dtype), w_ref[...],
                    preferred_element_type=jnp.float32)
        acc = d if acc is None else acc + d
    o_ref[...] = (acc + b_ref[...]).astype(o_ref.dtype)


def _bilstm_kernel(gxf_ref, gxb_ref, whf_ref, whb_ref, of_ref, ob_ref,
                   hf_sc, cf_sc, hb_sc, cb_sc):
    """One (batch-chunk, time-chunk) step of the fused bidirectional recurrence.

    gxf_ref: [Tc, Bb, 4Hp]  fwd gate pre-activations for time chunk t
    gxb_ref: [Tc, Bb, 4Hp]  bwd gate pre-activations for time chunk nT-1-t
    whf/whb: [Hp, 4Hp]      dense recurrent weights per direction
    of/ob  : [Tc, Bb, Hp]   per-direction hidden outputs (bf16)
    scratch: h/c per direction, f32, carried across the "arbitrary" time axis.

    Gate column order within a direction: [i | f | o | g], each Hp wide
    (sigmoid gates first, tanh gate last -> two contiguous activation slabs).
    """
    Tc = gxf_ref.shape[0]
    Hp = whf_ref.shape[0]

    @pl.when(pl.program_id(1) == 0)
    def _():
        hf_sc[...] = jnp.zeros_like(hf_sc)
        cf_sc[...] = jnp.zeros_like(cf_sc)
        hb_sc[...] = jnp.zeros_like(hb_sc)
        cb_sc[...] = jnp.zeros_like(cb_sc)

    def cell(gx_slab, h, c, whh_ref):
        gates = gx_slab.astype(jnp.float32) + jnp.dot(
            h.astype(whh_ref.dtype), whh_ref[...],
            preferred_element_type=jnp.float32)          # [Bb, 4Hp] f32
        sig = jax.nn.sigmoid(gates[:, 0:3 * Hp])
        g = jnp.tanh(gates[:, 3 * Hp:4 * Hp])
        i = sig[:, 0:Hp]
        f = sig[:, Hp:2 * Hp]
        o = sig[:, 2 * Hp:3 * Hp]
        c_new = f * c + i * g
        h_new = o * jnp.tanh(c_new)
        return h_new, c_new

    def step(s, carry):
        hf, cf, hb, cb = carry
        # forward direction: increasing time within the chunk
        hf, cf = cell(gxf_ref[s], hf, cf, whf_ref)
        of_ref[s] = hf.astype(of_ref.dtype)
        # backward direction: decreasing time within its (reversed-order) chunk
        sb = Tc - 1 - s
        hb, cb = cell(gxb_ref[sb], hb, cb, whb_ref)
        ob_ref[sb] = hb.astype(ob_ref.dtype)
        return (hf, cf, hb, cb)

    hf, cf, hb, cb = lax.fori_loop(
        0, Tc, step, (hf_sc[...], cf_sc[...], hb_sc[...], cb_sc[...]))
    hf_sc[...] = hf
    cf_sc[...] = cf
    hb_sc[...] = hb
    cb_sc[...] = cb


# ----------------------------------------------------------------------------
# pallas_call wrappers
# ----------------------------------------------------------------------------
def _project(xs, ws, bias, *, act=None, out_dtype=jnp.bfloat16):
    """Row/column-tiled matmul: sum_i xs[i] @ ws[i] + bias (optional SiLU on xs)."""
    N = xs[0].shape[0]
    G = ws[0].shape[1]
    vmem = _vmem_limit()

    row_cap = 1024 if vmem >= 96 * 1024 * 1024 else 512   # bigger blocks on 128 MiB parts
    if N % 8 == 0:
        bn = min(row_cap, N)
    else:
        bn = N          # full-dim block keeps the (8,128) rule satisfied
    gn = min(G, 2048)   # column tiling keeps large 8H weights within budget

    in_specs = [pl.BlockSpec((bn, x.shape[1]), lambda i, j: (i, 0)) for x in xs]
    in_specs += [pl.BlockSpec((w.shape[0], gn), lambda i, j: (0, j)) for w in ws]
    in_specs.append(pl.BlockSpec((1, gn), lambda i, j: (0, j)))

    return pl.pallas_call(
        functools.partial(_rowmm_kernel, act=act, n_in=len(xs)),
        out_shape=jax.ShapeDtypeStruct((N, G), out_dtype),
        grid=(pl.cdiv(N, bn), pl.cdiv(G, gn)),
        in_specs=in_specs,
        out_specs=pl.BlockSpec((bn, gn), lambda i, j: (i, j)),
        compiler_params=pltpu.CompilerParams(
            dimension_semantics=("parallel", "parallel"),
            vmem_limit_bytes=vmem),
    )(*xs, *ws, bias)


def _bilstm(gx, whh_f, whh_b, *, out_dtype=jnp.bfloat16):
    """Fused bidirectional recurrence, T-chunked and batch-chunked.

    gx: [T, B, 8Hp] bf16, columns [fwd i,f,o,g | bwd i,f,o,g] (Hp each).
    Returns (o_fwd, o_bwd), each [T, B, Hp].
    """
    T, B, G8 = gx.shape
    Hp = G8 // 8
    vmem = _vmem_limit()

    # Batch chunking: split when each chunk stays a multiple of 8 (lets the
    # "parallel" axis shard across v7x's two TensorCores / improves overlap).
    Bb = B // 2 if (B >= 16 and (B // 2) % 8 == 0) else B
    nb = B // Bb

    # Time chunking: streamed bytes per unit of Tc (double-buffered):
    #   gx fwd+bwd (bf16) + out fwd+bwd (bf16)  = 40 * Bb * Hp bytes.
    resident = 2 * (Hp * 4 * Hp * 2) * 2 + 4 * (Bb * Hp * 4)   # whh (x2 buf) + h/c scratch
    stream_budget = max(int(vmem * 0.6) - resident, 40 * Bb * Hp)
    t_cap = max(1, stream_budget // (40 * Bb * Hp))
    Tc = _largest_divisor_leq(T, int(t_cap))   # must divide T (bwd chunk reversal)
    nt = T // Tc

    return pl.pallas_call(
        _bilstm_kernel,
        out_shape=(jax.ShapeDtypeStruct((T, B, Hp), out_dtype),
                   jax.ShapeDtypeStruct((T, B, Hp), out_dtype)),
        grid=(nb, nt),
        in_specs=[
            # fwd direction reads chunk t, gate-column block 0 (cols 0:4Hp)
            pl.BlockSpec((Tc, Bb, 4 * Hp), lambda b, t: (t, b, 0)),
            # bwd direction reads chunk nt-1-t, gate-column block 1 (cols 4Hp:8Hp)
            pl.BlockSpec((Tc, Bb, 4 * Hp), lambda b, t: (nt - 1 - t, b, 1)),
            pl.BlockSpec((Hp, 4 * Hp), lambda b, t: (0, 0)),
            pl.BlockSpec((Hp, 4 * Hp), lambda b, t: (0, 0)),
        ],
        out_specs=(
            pl.BlockSpec((Tc, Bb, Hp), lambda b, t: (t, b, 0)),
            pl.BlockSpec((Tc, Bb, Hp), lambda b, t: (nt - 1 - t, b, 0)),
        ),
        scratch_shapes=[pltpu.VMEM((Bb, Hp), jnp.float32) for _ in range(4)],
        compiler_params=pltpu.CompilerParams(
            dimension_semantics=("parallel", "arbitrary"),
            vmem_limit_bytes=vmem),
    )(gx, gx, whh_f, whh_b)


def rnn_fc_forward(x, packed, *, output_size):
    """x: [B, T, input_size] -> [B, T, output_size] (matches RNN_FC.forward)."""
    B, T, F = x.shape
    # TODO(synk): fold this transpose (and the exit one) into the first/last
    # projection via (time-block, batch) grids; for now it is one extra HBM pass.
    x_tm = jnp.transpose(x, (1, 0, 2))                      # [T, B, F]
    feats = [x_tm.reshape(T * B, F)]

    for layer in packed["lstm"]:
        Hp = layer["whh_f"].shape[0]
        # Input projection (no sequential dependence) -> gate pre-activations,
        # emitted in bf16 to halve the largest HBM intermediate.
        gx = _project(feats, layer["wih"], layer["bias"],
                      out_dtype=jnp.bfloat16)               # [T*B, 8Hp]
        o_f, o_b = _bilstm(gx.reshape(T, B, 8 * Hp),
                           layer["whh_f"], layer["whh_b"])  # 2 x [T, B, Hp]
        feats = [o_f.reshape(T * B, Hp), o_b.reshape(T * B, Hp)]

    # act_funcs = ('SiLU', '') -> SiLU on the LSTM output, then FC, no 2nd act.
    # SiLU is elementwise, so applying it per direction-half before the split
    # FC matmuls equals SiLU(concat([h_f, h_b])) @ W_fc^T.
    y2d = _project(feats, packed["fc_w"], packed["fc_b"],
                   act="silu", out_dtype=jnp.float32)       # [T*B, Opad]
    Opad = packed["fc_w"][0].shape[1]
    y = y2d.reshape(T, B, Opad).transpose(1, 0, 2)          # [B, T, Opad]
    return y[:, :, :output_size]


# ----------------------------------------------------------------------------
# Parameters: PyTorch-layout init + one-time packing into the kernel layout
# ----------------------------------------------------------------------------
def init_params(key, input_size, output_size, hidden_size, num_layers=2):
    """PyTorch-layout params: W_ih [4H, Din], W_hh [4H, H], gate order (i,f,g,o)."""
    k = 1.0 / jnp.sqrt(jnp.float32(hidden_size))
    lstm_layers = []
    in_sz = input_size
    for _ in range(num_layers):
        layer = {}
        for dname in ("fwd", "bwd"):
            key, k1, k2, k3, k4 = jax.random.split(key, 5)
            w_ih = jax.random.uniform(k1, (4 * hidden_size, in_sz),
                                      jnp.float32, -k, k)
            w_hh = jax.random.uniform(k2, (4 * hidden_size, hidden_size),
                                      jnp.float32, -k, k)
            b_ih = jax.random.uniform(k3, (4 * hidden_size,), jnp.float32, -k, k)
            b_hh = jax.random.uniform(k4, (4 * hidden_size,), jnp.float32, -k, k)
            layer[dname] = (w_ih, w_hh, b_ih, b_hh)
        lstm_layers.append(layer)
        in_sz = 2 * hidden_size  # bidirectional -> next layer input is 2H

    key, kf1, kf2 = jax.random.split(key, 3)
    kfc = 1.0 / jnp.sqrt(jnp.float32(2 * hidden_size))
    w_fc = jax.random.uniform(kf1, (output_size, 2 * hidden_size),
                              jnp.float32, -kfc, kfc)
    b_fc = jax.random.uniform(kf2, (output_size,), jnp.float32, -kfc, kfc)
    return {"lstm": lstm_layers, "fc": (w_fc, b_fc)}


def _pad_axis(a, axis, new):
    pads = [(0, 0)] * a.ndim
    pads[axis] = (0, new - a.shape[axis])
    return jnp.pad(a, pads)


def _gate_cols(w, H, Hp):
    """[..., 4H] in PyTorch gate order (i,f,g,o) -> [..., 4Hp] in kernel order
    (i,f,o,g), each gate zero-padded to Hp lanes (sigmoid gates first, tanh last)."""
    i, f, g, o = (w[..., n * H:(n + 1) * H] for n in range(4))
    return jnp.concatenate([_pad_axis(b, -1, Hp) for b in (i, f, o, g)], axis=-1)


def pack_params(params, mxu_dtype=jnp.bfloat16):
    """Pre-transpose / reorder / pad parameters into the kernel layout (once).

    bf16 MXU operands are the default (native MXU dtype on v5e/v6e/v7x);
    gate math and accumulation stay float32 inside the kernels.
    Zero padding of H -> Hp is self-consistent: padded gate columns get zero
    weights/bias, so padded h/c lanes stay exactly 0 through the recurrence.
    """
    packed_layers = []
    first = True
    for layer in params["lstm"]:
        w_ih_f, w_hh_f, b_ih_f, b_hh_f = layer["fwd"]
        w_ih_b, w_hh_b, b_ih_b, b_hh_b = layer["bwd"]
        H = w_hh_f.shape[1]
        Hp = _round_up(H, 128)

        def rec(w_hh):                                    # dense [Hp, 4Hp]
            w = _gate_cols(w_hh.T, H, Hp)                 # [H, 4Hp]
            return _pad_axis(w, 0, Hp)
        whh_f = rec(w_hh_f)
        whh_b = rec(w_hh_b)

        bias = jnp.concatenate(
            [_gate_cols((b_ih_f + b_hh_f)[None, :], H, Hp),
             _gate_cols((b_ih_b + b_hh_b)[None, :], H, Hp)], axis=-1)  # [1, 8Hp]

        wf = _gate_cols(w_ih_f.T, H, Hp)                  # [Din, 4Hp]
        wb = _gate_cols(w_ih_b.T, H, Hp)                  # [Din, 4Hp]
        w_full = jnp.concatenate([wf, wb], axis=-1)       # [Din, 8Hp]
        if first:
            wih = [w_full]                                # layer 0: raw x input
        else:
            # layer >=1: input is [h_fwd | h_bwd] (Hp each from the prev layer);
            # split the Din=2H rows and pad each half to Hp rows.
            wih = [_pad_axis(w_full[:H], 0, Hp),
                   _pad_axis(w_full[H:2 * H], 0, Hp)]

        packed_layers.append({
            "wih": [w.astype(mxu_dtype) for w in wih],
            "whh_f": whh_f.astype(mxu_dtype),
            "whh_b": whh_b.astype(mxu_dtype),
            "bias": bias.astype(jnp.float32),
        })
        first = False

    w_fc, b_fc = params["fc"]
    O = w_fc.shape[0]
    H = w_fc.shape[1] // 2
    Hp = _round_up(H, 128)
    Opad = _round_up(O, 128)                 # lane-dense FC output columns
    wt = w_fc.T                              # [2H, O]
    fc_top = _pad_axis(_pad_axis(wt[:H], 0, Hp), -1, Opad)
    fc_bot = _pad_axis(_pad_axis(wt[H:2 * H], 0, Hp), -1, Opad)
    fc_b = _pad_axis(b_fc[None, :], -1, Opad)
    return {
        "lstm": packed_layers,
        "fc_w": [fc_top.astype(mxu_dtype), fc_bot.astype(mxu_dtype)],
        "fc_b": fc_b.astype(jnp.float32),
    }


# ----------------------------------------------------------------------------
if __name__ == "__main__":
    B, T = 2, 8
    input_size, hidden_size, output_size = 16, 32, 16

    key = jax.random.PRNGKey(0)
    key, kx, kp = jax.random.split(key, 3)
    x = jax.random.normal(kx, (B, T, input_size), jnp.float32)
    params = init_params(kp, input_size, output_size, hidden_size, num_layers=2)
    packed = pack_params(params)   # bf16 MXU operands by default

    fwd = jax.jit(functools.partial(rnn_fc_forward, output_size=output_size))
    y = fwd(x, packed)
    jax.block_until_ready(y)

    assert y.shape == (B, T, output_size), y.shape
    assert bool(jnp.all(jnp.isfinite(y)))
    print("KERNEL_OK")
</pallas_src>

<mosaic_0001>
module attributes {stable_mosaic.version = 11 : i64} {
  func.func @_rowmm_kernel(%arg0: i32, %arg1: i32, %arg2: memref<16x16xf32, #tpu.memory_space<vmem>>, %arg3: memref<16x1024xbf16, #tpu.memory_space<vmem>>, %arg4: memref<1x1024xf32, #tpu.memory_space<vmem>>, %arg5: memref<16x1024xbf16, #tpu.memory_space<vmem>>) attributes {dimension_semantics = [#tpu.dimension_semantics<parallel>, #tpu.dimension_semantics<parallel>], iteration_bounds = array<i64: 1, 1>, scalar_prefetch = 0 : i64, scratch_operands = 0 : i64, tpu.core_type = #tpu.core_type<tc>, window_params = [{transform_indices = @transform_0, window_bounds = array<i64: 16, 16>}, {transform_indices = @transform_1, window_bounds = array<i64: 16, 1024>}, {transform_indices = @transform_2, window_bounds = array<i64: 1, 1024>}, {transform_indices = @transform_3, window_bounds = array<i64: 16, 1024>}]} {
    %c0 = arith.constant 0 : index
    %c0_0 = arith.constant 0 : index
    %0 = vector.load %arg2[%c0, %c0_0] : memref<16x16xf32, #tpu.memory_space<vmem>>, vector<16x16xf32>
    %1 = arith.truncf %0 : vector<16x16xf32> to vector<16x16xbf16>
    %c0_1 = arith.constant 0 : index
    %c0_2 = arith.constant 0 : index
    %2 = vector.load %arg3[%c0_1, %c0_2] : memref<16x1024xbf16, #tpu.memory_space<vmem>>, vector<16x1024xbf16>
    %cst = arith.constant dense<0.000000e+00> : vector<16x1024xf32>
    %3 = tpu.matmul %1, %2, %cst {dimension_numbers = #tpu.dot_dimension_numbers<[1], [0], [0], [1], [0, 0, 1, 1], [], []>} : vector<16x16xbf16>, vector<16x1024xbf16>, vector<16x1024xf32> -> vector<16x1024xf32>
    %c0_3 = arith.constant 0 : index
    %c0_4 = arith.constant 0 : index
    %4 = vector.load %arg4[%c0_3, %c0_4] : memref<1x1024xf32, #tpu.memory_space<vmem>>, vector<1x1024xf32>
    %5 = vector.broadcast %4 : vector<1x1024xf32> to vector<16x1024xf32>
    %6 = arith.addf %3, %5 : vector<16x1024xf32>
    %7 = arith.truncf %6 : vector<16x1024xf32> to vector<16x1024xbf16>
    %c0_5 = arith.constant 0 : index
    %c0_6 = arith.constant 0 : index
    %8 = vector.load %arg5[%c0_5, %c0_6] : memref<16x1024xbf16, #tpu.memory_space<vmem>>, vector<16x1024xbf16>
    tpu.vector_store %arg5[%c0_5, %c0_6], %7 {strides = array<i32>} : memref<16x1024xbf16, #tpu.memory_space<vmem>>, vector<16x1024xbf16>,
    return
  }
  func.func @transform_0(%arg0: i32, %arg1: i32) -> (i32, i32) {
    %c0_i32 = arith.constant 0 : i32
    %c0_i32_0 = arith.constant 0 : i32
    return %arg0, %c0_i32 : i32, i32
  }
  func.func @transform_1(%arg0: i32, %arg1: i32) -> (i32, i32) {
    %c0_i32 = arith.constant 0 : i32
    %c0_i32_0 = arith.constant 0 : i32
    return %c0_i32, %arg1 : i32, i32
  }
  func.func @transform_2(%arg0: i32, %arg1: i32) -> (i32, i32) {
    %c0_i32 = arith.constant 0 : i32
    %c0_i32_0 = arith.constant 0 : i32
    return %c0_i32, %arg1 : i32, i32
  }
  func.func @transform_3(%arg0: i32, %arg1: i32) -> (i32, i32) {
    %c0_i32 = arith.constant 0 : i32
    return %arg0, %arg1 : i32, i32
  }
}

module attributes {stable_mosaic.version = 11 : i64} {
  func.func @_bilstm_kernel(%arg0: i32, %arg1: i32, %arg2: memref<8x2x512xbf16, #tpu.memory_space<vmem>>, %arg3: memref<8x2x512xbf16, #tpu.memory_space<vmem>>, %arg4: memref<128x512xbf16, #tpu.memory_space<vmem>>, %arg5: memref<128x512xbf16, #tpu.memory_space<vmem>>, %arg6: memref<8x2x128xbf16, #tpu.memory_space<vmem>>, %arg7: memref<8x2x128xbf16, #tpu.memory_space<vmem>>, %arg8: memref<2x128xf32, #tpu.memory_space<vmem>>, %arg9: memref<2x128xf32, #tpu.memory_space<vmem>>, %arg10: memref<2x128xf32, #tpu.memory_space<vmem>>, %arg11: memref<2x128xf32, #tpu.memory_space<vmem>>) attributes {dimension_semantics = [#tpu.dimension_semantics<parallel>, #tpu.dimension_semantics<arbitrary>], iteration_bounds = array<i64: 1, 1>, scalar_prefetch = 0 : i64, scratch_operands = 4 : i64, tpu.core_type = #tpu.core_type<tc>, window_params = [{transform_indices = @transform_0, window_bounds = array<i64: 8, 2, 512>}, {transform_indices = @transform_1, window_bounds = array<i64: 8, 2, 512>}, {pipeline_mode = #tpu.pipeline_mode<synchronous>, transform_indices = @transform_2, window_bounds = array<i64: 128, 512>}, {pipeline_mode = #tpu.pipeline_mode<synchronous>, transform_indices = @transform_3, window_bounds = array<i64: 128, 512>}, {transform_indices = @transform_4, window_bounds = array<i64: 8, 2, 128>}, {transform_indices = @transform_5, window_bounds = array<i64: 8, 2, 128>}]} {
    %c0_i32 = arith.constant 0 : i32
    %0 = arith.cmpi eq, %arg1, %c0_i32 : i32
    %1 = arith.extui %0 : i1 to i32
    %c0_i32_0 = arith.constant 0 : i32
    %2 = arith.cmpi ne, %1, %c0_i32_0 : i32
    scf.if %2 {
      %cst = arith.constant 0.000000e+00 : f32
      %13 = vector.broadcast %cst : f32 to vector<2x128xf32>
      %c0_18 = arith.constant 0 : index
      %c0_19 = arith.constant 0 : index
      %14 = vector.load %arg8[%c0_18, %c0_19] : memref<2x128xf32, #tpu.memory_space<vmem>>, vector<2x128xf32>
      tpu.vector_store %arg8[%c0_18, %c0_19], %13 {strides = array<i32>} : memref<2x128xf32, #tpu.memory_space<vmem>>, vector<2x128xf32>,
      %cst_20 = arith.constant 0.000000e+00 : f32
      %15 = vector.broadcast %cst_20 : f32 to vector<2x128xf32>
      %c0_21 = arith.constant 0 : index
      %c0_22 = arith.constant 0 : index
      %16 = vector.load %arg9[%c0_21, %c0_22] : memref<2x128xf32, #tpu.memory_space<vmem>>, vector<2x128xf32>
      tpu.vector_store %arg9[%c0_21, %c0_22], %15 {strides = array<i32>} : memref<2x128xf32, #tpu.memory_space<vmem>>, vector<2x128xf32>,
      %cst_23 = arith.constant 0.000000e+00 : f32
      %17 = vector.broadcast %cst_23 : f32 to vector<2x128xf32>
      %c0_24 = arith.constant 0 : index
      %c0_25 = arith.constant 0 : index
      %18 = vector.load %arg10[%c0_24, %c0_25] : memref<2x128xf32, #tpu.memory_space<vmem>>, vector<2x128xf32>
      tpu.vector_store %arg10[%c0_24, %c0_25], %17 {strides = array<i32>} : memref<2x128xf32, #tpu.memory_space<vmem>>, vector<2x128xf32>,
      %cst_26 = arith.constant 0.000000e+00 : f32
      %19 = vector.broadcast %cst_26 : f32 to vector<2x128xf32>
      %c0_27 = arith.constant 0 : index
      %c0_28 = arith.constant 0 : index
      %20 = vector.load %arg11[%c0_27, %c0_28] : memref<2x128xf32, #tpu.memory_space<vmem>>, vector<2x128xf32>
      tpu.vector_store %arg11[%c0_27, %c0_28], %19 {strides = array<i32>} : memref<2x128xf32, #tpu.memory_space<vmem>>, vector<2x128xf32>,
    } else {
    }
    %c0 = arith.constant 0 : index
    %c0_1 = arith.constant 0 : index
    %3 = vector.load %arg8[%c0, %c0_1] : memref<2x128xf32, #tpu.memory_space<vmem>>, vector<2x128xf32>
    %c0_2 = arith.constant 0 : index
    %c0_3 = arith.constant 0 : index
    %4 = vector.load %arg9[%c0_2, %c0_3] : memref<2x128xf32, #tpu.memory_space<vmem>>, vector<2x128xf32>
    %c0_4 = arith.constant 0 : index
    %c0_5 = arith.constant 0 : index
    %5 = vector.load %arg10[%c0_4, %c0_5] : memref<2x128xf32, #tpu.memory_space<vmem>>, vector<2x128xf32>
    %c0_6 = arith.constant 0 : index
    %c0_7 = arith.constant 0 : index
    %6 = vector.load %arg11[%c0_6, %c0_7] : memref<2x128xf32, #tpu.memory_space<vmem>>, vector<2x128xf32>
    %c0_i32_8 = arith.constant 0 : i32
    %c8_i32 = arith.constant 8 : i32
    %7 = arith.addi %c0_i32_8, %c8_i32 : i32
    %c1_i32 = arith.constant 1 : i32
    %8:4 = scf.for %arg12 = %c0_i32_8 to %7 step %c1_i32 iter_args(%arg13 = %3, %arg14 = %4, %arg15 = %5, %arg16 = %6) -> (vector<2x128xf32>, vector<2x128xf32>, vector<2x128xf32>, vector<2x128xf32>)  : i32 {
      %13 = arith.index_cast %arg12 : i32 to index
      %c0_18 = arith.constant 0 : index
      %c0_19 = arith.constant 0 : index
      %14 = vector.load %arg2[%13, %c0_18, %c0_19] : memref<8x2x512xbf16, #tpu.memory_space<vmem>>, vector<1x2x512xbf16>
      %15 = vector.shape_cast %14 : vector<1x2x512xbf16> to vector<2x512xbf16>
      %16 = arith.extf %15 : vector<2x512xbf16> to vector<2x512xf32>
      %17 = arith.truncf %arg13 : vector<2x128xf32> to vector<2x128xbf16>
      %c0_20 = arith.constant 0 : index
      %c0_21 = arith.constant 0 : index
      %18 = vector.load %arg4[%c0_20, %c0_21] : memref<128x512xbf16, #tpu.memory_space<vmem>>, vector<128x512xbf16>
      %cst = arith.constant dense<0.000000e+00> : vector<2x512xf32>
      %19 = tpu.matmul %17, %18, %cst {dimension_numbers = #tpu.dot_dimension_numbers<[1], [0], [0], [1], [0, 0, 1, 1], [], []>} : vector<2x128xbf16>, vector<128x512xbf16>, vector<2x512xf32> -> vector<2x512xf32>
      %20 = arith.addf %16, %19 : vector<2x512xf32>
      %21 = vector.extract_strided_slice %20 {offsets = [0, 0], sizes = [2, 384], strides = [1, 1]} : vector<2x512xf32> to vector<2x384xf32>
      %22 = arith.negf %21 : vector<2x384xf32>
      %23 = math.exp %22 : vector<2x384xf32>
      %cst_22 = arith.constant 1.000000e+00 : f32
      %24 = vector.broadcast %cst_22 : f32 to vector<2x384xf32>
      %25 = arith.addf %24, %23 : vector<2x384xf32>
      %26 = arith.divf %24, %25 : vector<2x384xf32>
      %27 = vector.extract_strided_slice %20 {offsets = [0, 384], sizes = [2, 128], strides = [1, 1]} : vector<2x512xf32> to vector<2x128xf32>
      %28 = math.tanh %27 : vector<2x128xf32>
      %29 = vector.extract_strided_slice %26 {offsets = [0, 0], sizes = [2, 128], strides = [1, 1]} : vector<2x384xf32> to vector<2x128xf32>
      %30 = vector.extract_strided_slice %26 {offsets = [0, 128], sizes = [2, 128], strides = [1, 1]} : vector<2x384xf32> to vector<2x128xf32>
      %31 = vector.extract_strided_slice %26 {offsets = [0, 256], sizes = [2, 128], strides = [1, 1]} : vector<2x384xf32> to vector<2x128xf32>
      %32 = arith.mulf %30, %arg14 : vector<2x128xf32>
      %33 = arith.mulf %29, %28 : vector<2x128xf32>
      %34 = arith.addf %32, %33 : vector<2x128xf32>
      %35 = math.tanh %34 : vector<2x128xf32>
      %36 = arith.mulf %31, %35 : vector<2x128xf32>
      %37 = arith.truncf %36 : vector<2x128xf32> to vector<2x128xbf16>
      %38 = arith.index_cast %arg12 : i32 to index
      %c0_23 = arith.constant 0 : index
      %c0_24 = arith.constant 0 : index
      %39 = vector.load %arg6[%38, %c0_23, %c0_24] : memref<8x2x128xbf16, #tpu.memory_space<vmem>>, vector<1x2x128xbf16>
      %40 = vector.shape_cast %39 : vector<1x2x128xbf16> to vector<2x128xbf16>
      %41 = vector.shape_cast %37 : vector<2x128xbf16> to vector<1x2x128xbf16>
      tpu.vector_store %arg6[%38, %c0_23, %c0_24], %41 {strides = array<i32>} : memref<8x2x128xbf16, #tpu.memory_space<vmem>>, vector<1x2x128xbf16>,
      %c7_i32 = arith.constant 7 : i32
      %42 = arith.subi %c7_i32, %arg12 : i32
      %43 = arith.index_cast %42 : i32 to index
      %c0_25 = arith.constant 0 : index
      %c0_26 = arith.constant 0 : index
      %44 = vector.load %arg3[%43, %c0_25, %c0_26] : memref<8x2x512xbf16, #tpu.memory_space<vmem>>, vector<1x2x512xbf16>
      %45 = vector.shape_cast %44 : vector<1x2x512xbf16> to vector<2x512xbf16>
      %46 = arith.extf %45 : vector<2x512xbf16> to vector<2x512xf32>
      %47 = arith.truncf %arg15 : vector<2x128xf32> to vector<2x128xbf16>
      %c0_27 = arith.constant 0 : index
      %c0_28 = arith.constant 0 : index
      %48 = vector.load %arg5[%c0_27, %c0_28] : memref<128x512xbf16, #tpu.memory_space<vmem>>, vector<128x512xbf16>
      %cst_29 = arith.constant dense<0.000000e+00> : vector<2x512xf32>
      %49 = tpu.matmul %47, %48, %cst_29 {dimension_numbers = #tpu.dot_dimension_numbers<[1], [0], [0], [1], [0, 0, 1, 1], [], []>} : vector<2x128xbf16>, vector<128x512xbf16>, vector<2x512xf32> -> vector<2x512xf32>
      %50 = arith.addf %46, %49 : vector<2x512xf32>
      %51 = vector.extract_strided_slice %50 {offsets = [0, 0], sizes = [2, 384], strides = [1, 1]} : vector<2x512xf32> to vector<2x384xf32>
      %52 = arith.negf %51 : vector<2x384xf32>
      %53 = math.exp %52 : vector<2x384xf32>
      %cst_30 = arith.constant 1.000000e+00 : f32
      %54 = vector.broadcast %cst_30 : f32 to vector<2x384xf32>
      %55 = arith.addf %54, %53 : vector<2x384xf32>
      %56 = arith.divf %54, %55 : vector<2x384xf32>
      %57 = vector.extract_strided_slice %50 {offsets = [0, 384], sizes = [2, 128], strides = [1, 1]} : vector<2x512xf32> to vector<2x128xf32>
      %58 = math.tanh %57 : vector<2x128xf32>
      %59 = vector.extract_strided_slice %56 {offsets = [0, 0], sizes = [2, 128], strides = [1, 1]} : vector<2x384xf32> to vector<2x128xf32>
      %60 = vector.extract_strided_slice %56 {offsets = [0, 128], sizes = [2, 128], strides = [1, 1]} : vector<2x384xf32> to vector<2x128xf32>
      %61 = vector.extract_strided_slice %56 {offsets = [0, 256], sizes = [2, 128], strides = [1, 1]} : vector<2x384xf32> to vector<2x128xf32>
      %62 = arith.mulf %60, %arg16 : vector<2x128xf32>
      %63 = arith.mulf %59, %58 : vector<2x128xf32>
      %64 = arith.addf %62, %63 : vector<2x128xf32>
      %65 = math.tanh %64 : vector<2x128xf32>
      %66 = arith.mulf %61, %65 : vector<2x128xf32>
      %67 = arith.truncf %66 : vector<2x128xf32> to vector<2x128xbf16>
      %68 = arith.index_cast %42 : i32 to index
      %c0_31 = arith.constant 0 : index
      %c0_32 = arith.constant 0 : index
      %69 = vector.load %arg7[%68, %c0_31, %c0_32] : memref<8x2x128xbf16, #tpu.memory_space<vmem>>, vector<1x2x128xbf16>
      %70 = vector.shape_cast %69 : vector<1x2x128xbf16> to vector<2x128xbf16>
      %71 = vector.shape_cast %67 : vector<2x128xbf16> to vector<1x2x128xbf16>
      tpu.vector_store %arg7[%68, %c0_31, %c0_32], %71 {strides = array<i32>} : memref<8x2x128xbf16, #tpu.memory_space<vmem>>, vector<1x2x128xbf16>,
      scf.yield %36, %34, %66, %64 : vector<2x128xf32>, vector<2x128xf32>, vector<2x128xf32>, vector<2x128xf32>
    }
    %c8_i32_9 = arith.constant 8 : i32
    %c0_10 = arith.constant 0 : index
    %c0_11 = arith.constant 0 : index
    %9 = vector.load %arg8[%c0_10, %c0_11] : memref<2x128xf32, #tpu.memory_space<vmem>>, vector<2x128xf32>
    tpu.vector_store %arg8[%c0_10, %c0_11], %8#0 {strides = array<i32>} : memref<2x128xf32, #tpu.memory_space<vmem>>, vector<2x128xf32>,
    %c0_12 = arith.constant 0 : index
    %c0_13 = arith.constant 0 : index
    %10 = vector.load %arg9[%c0_12, %c0_13] : memref<2x128xf32, #tpu.memory_space<vmem>>, vector<2x128xf32>
    tpu.vector_store %arg9[%c0_12, %c0_13], %8#1 {strides = array<i32>} : memref<2x128xf32, #tpu.memory_space<vmem>>, vector<2x128xf32>,
    %c0_14 = arith.constant 0 : index
    %c0_15 = arith.constant 0 : index
    %11 = vector.load %arg10[%c0_14, %c0_15] : memref<2x128xf32, #tpu.memory_space<vmem>>, vector<2x128xf32>
    tpu.vector_store %arg10[%c0_14, %c0_15], %8#2 {strides = array<i32>} : memref<2x128xf32, #tpu.memory_space<vmem>>, vector<2x128xf32>,
    %c0_16 = arith.constant 0 : index
    %c0_17 = arith.constant 0 : index
    %12 = vector.load %arg11[%c0_16, %c0_17] : memref<2x128xf32, #tpu.memory_space<vmem>>, vector<2x128xf32>
    tpu.vector_store %arg11[%c0_16, %c0_17], %8#3 {strides = array<i32>} : memref<2x128xf32, #tpu.memory_space<vmem>>, vector<2x128xf32>,
    return
  }
  func.func @transform_0(%arg0: i32, %arg1: i32) -> (i32, i32, i32) {
    %c0_i32 = arith.constant 0 : i32
    %c0_i32_0 = arith.constant 0 : i32
    return %arg1, %arg0, %c0_i32 : i32, i32, i32
  }
  func.func @transform_1(%arg0: i32, %arg1: i32) -> (i32, i32, i32) {
    %c0_i32 = arith.constant 0 : i32
    %0 = arith.subi %c0_i32, %arg1 : i32
    %c1_i32 = arith.constant 1 : i32
    %c0_i32_0 = arith.constant 0 : i32
    return %0, %arg0, %c1_i32 : i32, i32, i32
  }
  func.func @transform_2(%arg0: i32, %arg1: i32) -> (i32, i32) {
    %c0_i32 = arith.constant 0 : i32
    %c0_i32_0 = arith.constant 0 : i32
    %c0_i32_1 = arith.constant 0 : i32
    return %c0_i32, %c0_i32_0 : i32, i32
  }
  func.func @transform_3(%arg0: i32, %arg1: i32) -> (i32, i32) {
    %c0_i32 = arith.constant 0 : i32
    %c0_i32_0 = arith.constant 0 : i32
    %c0_i32_1 = arith.constant 0 : i32
    return %c0_i32, %c0_i32_0 : i32, i32
  }
  func.func @transform_4(%arg0: i32, %arg1: i32) -> (i32, i32, i32) {
    %c0_i32 = arith.constant 0 : i32
    %c0_i32_0 = arith.constant 0 : i32
    return %arg1, %arg0, %c0_i32 : i32, i32, i32
  }
  func.func @transform_5(%arg0: i32, %arg1: i32) -> (i32, i32, i32) {
    %c0_i32 = arith.constant 0 : i32
    %0 = arith.subi %c0_i32, %arg1 : i32
    %c0_i32_0 = arith.constant 0 : i32
    %c0_i32_1 = arith.constant 0 : i32
    return %0, %arg0, %c0_i32_0 : i32, i32, i32
  }
}

module attributes {stable_mosaic.version = 11 : i64} {
  func.func @_rowmm_kernel(%arg0: i32, %arg1: i32, %arg2: memref<16x128xbf16, #tpu.memory_space<vmem>>, %arg3: memref<16x128xbf16, #tpu.memory_space<vmem>>, %arg4: memref<128x1024xbf16, #tpu.memory_space<vmem>>, %arg5: memref<128x1024xbf16, #tpu.memory_space<vmem>>, %arg6: memref<1x1024xf32, #tpu.memory_space<vmem>>, %arg7: memref<16x1024xbf16, #tpu.memory_space<vmem>>) attributes {dimension_semantics = [#tpu.dimension_semantics<parallel>, #tpu.dimension_semantics<parallel>], iteration_bounds = array<i64: 1, 1>, scalar_prefetch = 0 : i64, scratch_operands = 0 : i64, tpu.core_type = #tpu.core_type<tc>, window_params = [{transform_indices = @transform_0, window_bounds = array<i64: 16, 128>}, {transform_indices = @transform_1, window_bounds = array<i64: 16, 128>}, {transform_indices = @transform_2, window_bounds = array<i64: 128, 1024>}, {transform_indices = @transform_3, window_bounds = array<i64: 128, 1024>}, {transform_indices = @transform_4, window_bounds = array<i64: 1, 1024>}, {transform_indices = @transform_5, window_bounds = array<i64: 16, 1024>}]} {
    %c0 = arith.constant 0 : index
    %c0_0 = arith.constant 0 : index
    %0 = vector.load %arg2[%c0, %c0_0] : memref<16x128xbf16, #tpu.memory_space<vmem>>, vector<16x128xbf16>
    %c0_1 = arith.constant 0 : index
    %c0_2 = arith.constant 0 : index
    %1 = vector.load %arg4[%c0_1, %c0_2] : memref<128x1024xbf16, #tpu.memory_space<vmem>>, vector<128x1024xbf16>
    %cst = arith.constant dense<0.000000e+00> : vector<16x1024xf32>
    %2 = tpu.matmul %0, %1, %cst {dimension_numbers = #tpu.dot_dimension_numbers<[1], [0], [0], [1], [0, 0, 1, 1], [], []>} : vector<16x128xbf16>, vector<128x1024xbf16>, vector<16x1024xf32> -> vector<16x1024xf32>
    %c0_3 = arith.constant 0 : index
    %c0_4 = arith.constant 0 : index
    %3 = vector.load %arg3[%c0_3, %c0_4] : memref<16x128xbf16, #tpu.memory_space<vmem>>, vector<16x128xbf16>
    %c0_5 = arith.constant 0 : index
    %c0_6 = arith.constant 0 : index
    %4 = vector.load %arg5[%c0_5, %c0_6] : memref<128x1024xbf16, #tpu.memory_space<vmem>>, vector<128x1024xbf16>
    %cst_7 = arith.constant dense<0.000000e+00> : vector<16x1024xf32>
    %5 = tpu.matmul %3, %4, %cst_7 {dimension_numbers = #tpu.dot_dimension_numbers<[1], [0], [0], [1], [0, 0, 1, 1], [], []>} : vector<16x128xbf16>, vector<128x1024xbf16>, vector<16x1024xf32> -> vector<16x1024xf32>
    %6 = arith.addf %2, %5 : vector<16x1024xf32>
    %c0_8 = arith.constant 0 : index
    %c0_9 = arith.constant 0 : index
    %7 = vector.load %arg6[%c0_8, %c0_9] : memref<1x1024xf32, #tpu.memory_space<vmem>>, vector<1x1024xf32>
    %8 = vector.broadcast %7 : vector<1x1024xf32> to vector<16x1024xf32>
    %9 = arith.addf %6, %8 : vector<16x1024xf32>
    %10 = arith.truncf %9 : vector<16x1024xf32> to vector<16x1024xbf16>
    %c0_10 = arith.constant 0 : index
    %c0_11 = arith.constant 0 : index
    %11 = vector.load %arg7[%c0_10, %c0_11] : memref<16x1024xbf16, #tpu.memory_space<vmem>>, vector<16x1024xbf16>
    tpu.vector_store %arg7[%c0_10, %c0_11], %10 {strides = array<i32>} : memref<16x1024xbf16, #tpu.memory_space<vmem>>, vector<16x1024xbf16>,
    return
  }
  func.func @transform_0(%arg0: i32, %arg1: i32) -> (i32, i32) {
    %c0_i32 = arith.constant 0 : i32
    %c0_i32_0 = arith.constant 0 : i32
    return %arg0, %c0_i32 : i32, i32
  }
  func.func @transform_1(%arg0: i32, %arg1: i32) -> (i32, i32) {
    %c0_i32 = arith.constant 0 : i32
    %c0_i32_0 = arith.constant 0 : i32
    return %arg0, %c0_i32 : i32, i32
  }
  func.func @transform_2(%arg0: i32, %arg1: i32) -> (i32, i32) {
    %c0_i32 = arith.constant 0 : i32
    %c0_i32_0 = arith.constant 0 : i32
    return %c0_i32, %arg1 : i32, i32
  }
  func.func @transform_3(%arg0: i32, %arg1: i32) -> (i32, i32) {
    %c0_i32 = arith.constant 0 : i32
    %c0_i32_0 = arith.constant 0 : i32
    return %c0_i32, %arg1 : i32, i32
  }
  func.func @transform_4(%arg0: i32, %arg1: i32) -> (i32, i32) {
    %c0_i32 = arith.constant 0 : i32
    %c0_i32_0 = arith.constant 0 : i32
    return %c0_i32, %arg1 : i32, i32
  }
  func.func @transform_5(%arg0: i32, %arg1: i32) -> (i32, i32) {
    %c0_i32 = arith.constant 0 : i32
    return %arg0, %arg1 : i32, i32
  }
}

module attributes {stable_mosaic.version = 11 : i64} {
  func.func @_bilstm_kernel(%arg0: i32, %arg1: i32, %arg2: memref<8x2x512xbf16, #tpu.memory_space<vmem>>, %arg3: memref<8x2x512xbf16, #tpu.memory_space<vmem>>, %arg4: memref<128x512xbf16, #tpu.memory_space<vmem>>, %arg5: memref<128x512xbf16, #tpu.memory_space<vmem>>, %arg6: memref<8x2x128xbf16, #tpu.memory_space<vmem>>, %arg7: memref<8x2x128xbf16, #tpu.memory_space<vmem>>, %arg8: memref<2x128xf32, #tpu.memory_space<vmem>>, %arg9: memref<2x128xf32, #tpu.memory_space<vmem>>, %arg10: memref<2x128xf32, #tpu.memory_space<vmem>>, %arg11: memref<2x128xf32, #tpu.memory_space<vmem>>) attributes {dimension_semantics = [#tpu.dimension_semantics<parallel>, #tpu.dimension_semantics<arbitrary>], iteration_bounds = array<i64: 1, 1>, scalar_prefetch = 0 : i64, scratch_operands = 4 : i64, tpu.core_type = #tpu.core_type<tc>, window_params = [{transform_indices = @transform_0, window_bounds = array<i64: 8, 2, 512>}, {transform_indices = @transform_1, window_bounds = array<i64: 8, 2, 512>}, {pipeline_mode = #tpu.pipeline_mode<synchronous>, transform_indices = @transform_2, window_bounds = array<i64: 128, 512>}, {pipeline_mode = #tpu.pipeline_mode<synchronous>, transform_indices = @transform_3, window_bounds = array<i64: 128, 512>}, {transform_indices = @transform_4, window_bounds = array<i64: 8, 2, 128>}, {transform_indices = @transform_5, window_bounds = array<i64: 8, 2, 128>}]} {
    %c0_i32 = arith.constant 0 : i32
    %0 = arith.cmpi eq, %arg1, %c0_i32 : i32
    %1 = arith.extui %0 : i1 to i32
    %c0_i32_0 = arith.constant 0 : i32
    %2 = arith.cmpi ne, %1, %c0_i32_0 : i32
    scf.if %2 {
      %cst = arith.constant 0.000000e+00 : f32
      %13 = vector.broadcast %cst : f32 to vector<2x128xf32>
      %c0_18 = arith.constant 0 : index
      %c0_19 = arith.constant 0 : index
      %14 = vector.load %arg8[%c0_18, %c0_19] : memref<2x128xf32, #tpu.memory_space<vmem>>, vector<2x128xf32>
      tpu.vector_store %arg8[%c0_18, %c0_19], %13 {strides = array<i32>} : memref<2x128xf32, #tpu.memory_space<vmem>>, vector<2x128xf32>,
      %cst_20 = arith.constant 0.000000e+00 : f32
      %15 = vector.broadcast %cst_20 : f32 to vector<2x128xf32>
      %c0_21 = arith.constant 0 : index
      %c0_22 = arith.constant 0 : index
      %16 = vector.load %arg9[%c0_21, %c0_22] : memref<2x128xf32, #tpu.memory_space<vmem>>, vector<2x128xf32>
      tpu.vector_store %arg9[%c0_21, %c0_22], %15 {strides = array<i32>} : memref<2x128xf32, #tpu.memory_space<vmem>>, vector<2x128xf32>,
      %cst_23 = arith.constant 0.000000e+00 : f32
      %17 = vector.broadcast %cst_23 : f32 to vector<2x128xf32>
      %c0_24 = arith.constant 0 : index
      %c0_25 = arith.constant 0 : index
      %18 = vector.load %arg10[%c0_24, %c0_25] : memref<2x128xf32, #tpu.memory_space<vmem>>, vector<2x128xf32>
      tpu.vector_store %arg10[%c0_24, %c0_25], %17 {strides = array<i32>} : memref<2x128xf32, #tpu.memory_space<vmem>>, vector<2x128xf32>,
      %cst_26 = arith.constant 0.000000e+00 : f32
      %19 = vector.broadcast %cst_26 : f32 to vector<2x128xf32>
      %c0_27 = arith.constant 0 : index
      %c0_28 = arith.constant 0 : index
      %20 = vector.load %arg11[%c0_27, %c0_28] : memref<2x128xf32, #tpu.memory_space<vmem>>, vector<2x128xf32>
      tpu.vector_store %arg11[%c0_27, %c0_28], %19 {strides = array<i32>} : memref<2x128xf32, #tpu.memory_space<vmem>>, vector<2x128xf32>,
    } else {
    }
    %c0 = arith.constant 0 : index
    %c0_1 = arith.constant 0 : index
    %3 = vector.load %arg8[%c0, %c0_1] : memref<2x128xf32, #tpu.memory_space<vmem>>, vector<2x128xf32>
    %c0_2 = arith.constant 0 : index
    %c0_3 = arith.constant 0 : index
    %4 = vector.load %arg9[%c0_2, %c0_3] : memref<2x128xf32, #tpu.memory_space<vmem>>, vector<2x128xf32>
    %c0_4 = arith.constant 0 : index
    %c0_5 = arith.constant 0 : index
    %5 = vector.load %arg10[%c0_4, %c0_5] : memref<2x128xf32, #tpu.memory_space<vmem>>, vector<2x128xf32>
    %c0_6 = arith.constant 0 : index
    %c0_7 = arith.constant 0 : index
    %6 = vector.load %arg11[%c0_6, %c0_7] : memref<2x128xf32, #tpu.memory_space<vmem>>, vector<2x128xf32>
    %c0_i32_8 = arith.constant 0 : i32
    %c8_i32 = arith.constant 8 : i32
    %7 = arith.addi %c0_i32_8, %c8_i32 : i32
    %c1_i32 = arith.constant 1 : i32
    %8:4 = scf.for %arg12 = %c0_i32_8 to %7 step %c1_i32 iter_args(%arg13 = %3, %arg14 = %4, %arg15 = %5, %arg16 = %6) -> (vector<2x128xf32>, vector<2x128xf32>, vector<2x128xf32>, vector<2x128xf32>)  : i32 {
      %13 = arith.index_cast %arg12 : i32 to index
      %c0_18 = arith.constant 0 : index
      %c0_19 = arith.constant 0 : index
      %14 = vector.load %arg2[%13, %c0_18, %c0_19] : memref<8x2x512xbf16, #tpu.memory_space<vmem>>, vector<1x2x512xbf16>
      %15 = vector.shape_cast %14 : vector<1x2x512xbf16> to vector<2x512xbf16>
      %16 = arith.extf %15 : vector<2x512xbf16> to vector<2x512xf32>
      %17 = arith.truncf %arg13 : vector<2x128xf32> to vector<2x128xbf16>
      %c0_20 = arith.constant 0 : index
      %c0_21 = arith.constant 0 : index
      %18 = vector.load %arg4[%c0_20, %c0_21] : memref<128x512xbf16, #tpu.memory_space<vmem>>, vector<128x512xbf16>
      %cst = arith.constant dense<0.000000e+00> : vector<2x512xf32>
      %19 = tpu.matmul %17, %18, %cst {dimension_numbers = #tpu.dot_dimension_numbers<[1], [0], [0], [1], [0, 0, 1, 1], [], []>} : vector<2x128xbf16>, vector<128x512xbf16>, vector<2x512xf32> -> vector<2x512xf32>
      %20 = arith.addf %16, %19 : vector<2x512xf32>
      %21 = vector.extract_strided_slice %20 {offsets = [0, 0], sizes = [2, 384], strides = [1, 1]} : vector<2x512xf32> to vector<2x384xf32>
      %22 = arith.negf %21 : vector<2x384xf32>
      %23 = math.exp %22 : vector<2x384xf32>
      %cst_22 = arith.constant 1.000000e+00 : f32
      %24 = vector.broadcast %cst_22 : f32 to vector<2x384xf32>
      %25 = arith.addf %24, %23 : vector<2x384xf32>
      %26 = arith.divf %24, %25 : vector<2x384xf32>
      %27 = vector.extract_strided_slice %20 {offsets = [0, 384], sizes = [2, 128], strides = [1, 1]} : vector<2x512xf32> to vector<2x128xf32>
      %28 = math.tanh %27 : vector<2x128xf32>
      %29 = vector.extract_strided_slice %26 {offsets = [0, 0], sizes = [2, 128], strides = [1, 1]} : vector<2x384xf32> to vector<2x128xf32>
      %30 = vector.extract_strided_slice %26 {offsets = [0, 128], sizes = [2, 128], strides = [1, 1]} : vector<2x384xf32> to vector<2x128xf32>
      %31 = vector.extract_strided_slice %26 {offsets = [0, 256], sizes = [2, 128], strides = [1, 1]} : vector<2x384xf32> to vector<2x128xf32>
      %32 = arith.mulf %30, %arg14 : vector<2x128xf32>
      %33 = arith.mulf %29, %28 : vector<2x128xf32>
      %34 = arith.addf %32, %33 : vector<2x128xf32>
      %35 = math.tanh %34 : vector<2x128xf32>
      %36 = arith.mulf %31, %35 : vector<2x128xf32>
      %37 = arith.truncf %36 : vector<2x128xf32> to vector<2x128xbf16>
      %38 = arith.index_cast %arg12 : i32 to index
      %c0_23 = arith.constant 0 : index
      %c0_24 = arith.constant 0 : index
      %39 = vector.load %arg6[%38, %c0_23, %c0_24] : memref<8x2x128xbf16, #tpu.memory_space<vmem>>, vector<1x2x128xbf16>
      %40 = vector.shape_cast %39 : vector<1x2x128xbf16> to vector<2x128xbf16>
      %41 = vector.shape_cast %37 : vector<2x128xbf16> to vector<1x2x128xbf16>
      tpu.vector_store %arg6[%38, %c0_23, %c0_24], %41 {strides = array<i32>} : memref<8x2x128xbf16, #tpu.memory_space<vmem>>, vector<1x2x128xbf16>,
      %c7_i32 = arith.constant 7 : i32
      %42 = arith.subi %c7_i32, %arg12 : i32
      %43 = arith.index_cast %42 : i32 to index
      %c0_25 = arith.constant 0 : index
      %c0_26 = arith.constant 0 : index
      %44 = vector.load %arg3[%43, %c0_25, %c0_26] : memref<8x2x512xbf16, #tpu.memory_space<vmem>>, vector<1x2x512xbf16>
      %45 = vector.shape_cast %44 : vector<1x2x512xbf16> to vector<2x512xbf16>
      %46 = arith.extf %45 : vector<2x512xbf16> to vector<2x512xf32>
      %47 = arith.truncf %arg15 : vector<2x128xf32> to vector<2x128xbf16>
      %c0_27 = arith.constant 0 : index
      %c0_28 = arith.constant 0 : index
      %48 = vector.load %arg5[%c0_27, %c0_28] : memref<128x512xbf16, #tpu.memory_space<vmem>>, vector<128x512xbf16>
      %cst_29 = arith.constant dense<0.000000e+00> : vector<2x512xf32>
      %49 = tpu.matmul %47, %48, %cst_29 {dimension_numbers = #tpu.dot_dimension_numbers<[1], [0], [0], [1], [0, 0, 1, 1], [], []>} : vector<2x128xbf16>, vector<128x512xbf16>, vector<2x512xf32> -> vector<2x512xf32>
      %50 = arith.addf %46, %49 : vector<2x512xf32>
      %51 = vector.extract_strided_slice %50 {offsets = [0, 0], sizes = [2, 384], strides = [1, 1]} : vector<2x512xf32> to vector<2x384xf32>
      %52 = arith.negf %51 : vector<2x384xf32>
      %53 = math.exp %52 : vector<2x384xf32>
      %cst_30 = arith.constant 1.000000e+00 : f32
      %54 = vector.broadcast %cst_30 : f32 to vector<2x384xf32>
      %55 = arith.addf %54, %53 : vector<2x384xf32>
      %56 = arith.divf %54, %55 : vector<2x384xf32>
      %57 = vector.extract_strided_slice %50 {offsets = [0, 384], sizes = [2, 128], strides = [1, 1]} : vector<2x512xf32> to vector<2x128xf32>
      %58 = math.tanh %57 : vector<2x128xf32>
      %59 = vector.extract_strided_slice %56 {offsets = [0, 0], sizes = [2, 128], strides = [1, 1]} : vector<2x384xf32> to vector<2x128xf32>
      %60 = vector.extract_strided_slice %56 {offsets = [0, 128], sizes = [2, 128], strides = [1, 1]} : vector<2x384xf32> to vector<2x128xf32>
      %61 = vector.extract_strided_slice %56 {offsets = [0, 256], sizes = [2, 128], strides = [1, 1]} : vector<2x384xf32> to vector<2x128xf32>
      %62 = arith.mulf %60, %arg16 : vector<2x128xf32>
      %63 = arith.mulf %59, %58 : vector<2x128xf32>
      %64 = arith.addf %62, %63 : vector<2x128xf32>
      %65 = math.tanh %64 : vector<2x128xf32>
      %66 = arith.mulf %61, %65 : vector<2x128xf32>
      %67 = arith.truncf %66 : vector<2x128xf32> to vector<2x128xbf16>
      %68 = arith.index_cast %42 : i32 to index
      %c0_31 = arith.constant 0 : index
      %c0_32 = arith.constant 0 : index
      %69 = vector.load %arg7[%68, %c0_31, %c0_32] : memref<8x2x128xbf16, #tpu.memory_space<vmem>>, vector<1x2x128xbf16>
      %70 = vector.shape_cast %69 : vector<1x2x128xbf16> to vector<2x128xbf16>
      %71 = vector.shape_cast %67 : vector<2x128xbf16> to vector<1x2x128xbf16>
      tpu.vector_store %arg7[%68, %c0_31, %c0_32], %71 {strides = array<i32>} : memref<8x2x128xbf16, #tpu.memory_space<vmem>>, vector<1x2x128xbf16>,
      scf.yield %36, %34, %66, %64 : vector<2x128xf32>, vector<2x128xf32>, vector<2x128xf32>, vector<2x128xf32>
    }
    %c8_i32_9 = arith.constant 8 : i32
    %c0_10 = arith.constant 0 : index
    %c0_11 = arith.constant 0 : index
    %9 = vector.load %arg8[%c0_10, %c0_11] : memref<2x128xf32, #tpu.memory_space<vmem>>, vector<2x128xf32>
    tpu.vector_store %arg8[%c0_10, %c0_11], %8#0 {strides = array<i32>} : memref<2x128xf32, #tpu.memory_space<vmem>>, vector<2x128xf32>,
    %c0_12 = arith.constant 0 : index
    %c0_13 = arith.constant 0 : index
    %10 = vector.load %arg9[%c0_12, %c0_13] : memref<2x128xf32, #tpu.memory_space<vmem>>, vector<2x128xf32>
    tpu.vector_store %arg9[%c0_12, %c0_13], %8#1 {strides = array<i32>} : memref<2x128xf32, #tpu.memory_space<vmem>>, vector<2x128xf32>,
    %c0_14 = arith.constant 0 : index
    %c0_15 = arith.constant 0 : index
    %11 = vector.load %arg10[%c0_14, %c0_15] : memref<2x128xf32, #tpu.memory_space<vmem>>, vector<2x128xf32>
    tpu.vector_store %arg10[%c0_14, %c0_15], %8#2 {strides = array<i32>} : memref<2x128xf32, #tpu.memory_space<vmem>>, vector<2x128xf32>,
    %c0_16 = arith.constant 0 : index
    %c0_17 = arith.constant 0 : index
    %12 = vector.load %arg11[%c0_16, %c0_17] : memref<2x128xf32, #tpu.memory_space<vmem>>, vector<2x128xf32>
    tpu.vector_store %arg11[%c0_16, %c0_17], %8#3 {strides = array<i32>} : memref<2x128xf32, #tpu.memory_space<vmem>>, vector<2x128xf32>,
    return
  }
  func.func @transform_0(%arg0: i32, %arg1: i32) -> (i32, i32, i32) {
    %c0_i32 = arith.constant 0 : i32
    %c0_i32_0 = arith.constant 0 : i32
    return %arg1, %arg0, %c0_i32 : i32, i32, i32
  }
  func.func @transform_1(%arg0: i32, %arg1: i32) -> (i32, i32, i32) {
    %c0_i32 = arith.constant 0 : i32
    %0 = arith.subi %c0_i32, %arg1 : i32
    %c1_i32 = arith.constant 1 : i32
    %c0_i32_0 = arith.constant 0 : i32
    return %0, %arg0, %c1_i32 : i32, i32, i32
  }
  func.func @transform_2(%arg0: i32, %arg1: i32) -> (i32, i32) {
    %c0_i32 = arith.constant 0 : i32
    %c0_i32_0 = arith.constant 0 : i32
    %c0_i32_1 = arith.constant 0 : i32
    return %c0_i32, %c0_i32_0 : i32, i32
  }
  func.func @transform_3(%arg0: i32, %arg1: i32) -> (i32, i32) {
    %c0_i32 = arith.constant 0 : i32
    %c0_i32_0 = arith.constant 0 : i32
    %c0_i32_1 = arith.constant 0 : i32
    return %c0_i32, %c0_i32_0 : i32, i32
  }
  func.func @transform_4(%arg0: i32, %arg1: i32) -> (i32, i32, i32) {
    %c0_i32 = arith.constant 0 : i32
    %c0_i32_0 = arith.constant 0 : i32
    return %arg1, %arg0, %c0_i32 : i32, i32, i32
  }
  func.func @transform_5(%arg0: i32, %arg1: i32) -> (i32, i32, i32) {
    %c0_i32 = arith.constant 0 : i32
    %0 = arith.subi %c0_i32, %arg1 : i32
    %c0_i32_0 = arith.constant 0 : i32
    %c0_i32_1 = arith.constant 0 : i32
    return %0, %arg0, %c0_i32_0 : i32, i32, i32
  }
}

module attributes {stable_mosaic.version = 11 : i64} {
  func.func @_rowmm_kernel(%arg0: i32, %arg1: i32, %arg2: memref<16x128xbf16, #tpu.memory_space<vmem>>, %arg3: memref<16x128xbf16, #tpu.memory_space<vmem>>, %arg4: memref<128x128xbf16, #tpu.memory_space<vmem>>, %arg5: memref<128x128xbf16, #tpu.memory_space<vmem>>, %arg6: memref<1x128xf32, #tpu.memory_space<vmem>>, %arg7: memref<16x128xf32, #tpu.memory_space<vmem>>) attributes {dimension_semantics = [#tpu.dimension_semantics<parallel>, #tpu.dimension_semantics<parallel>], iteration_bounds = array<i64: 1, 1>, scalar_prefetch = 0 : i64, scratch_operands = 0 : i64, tpu.core_type = #tpu.core_type<tc>, window_params = [{transform_indices = @transform_0, window_bounds = array<i64: 16, 128>}, {transform_indices = @transform_1, window_bounds = array<i64: 16, 128>}, {transform_indices = @transform_2, window_bounds = array<i64: 128, 128>}, {transform_indices = @transform_3, window_bounds = array<i64: 128, 128>}, {transform_indices = @transform_4, window_bounds = array<i64: 1, 128>}, {transform_indices = @transform_5, window_bounds = array<i64: 16, 128>}]} {
    %c0 = arith.constant 0 : index
    %c0_0 = arith.constant 0 : index
    %0 = vector.load %arg2[%c0, %c0_0] : memref<16x128xbf16, #tpu.memory_space<vmem>>, vector<16x128xbf16>
    %1 = arith.extf %0 : vector<16x128xbf16> to vector<16x128xf32>
    %2 = arith.negf %1 : vector<16x128xf32>
    %3 = math.exp %2 : vector<16x128xf32>
    %cst = arith.constant 1.000000e+00 : f32
    %4 = vector.broadcast %cst : f32 to vector<16x128xf32>
    %5 = arith.addf %4, %3 : vector<16x128xf32>
    %6 = arith.divf %4, %5 : vector<16x128xf32>
    %7 = arith.mulf %1, %6 : vector<16x128xf32>
    %8 = arith.truncf %7 : vector<16x128xf32> to vector<16x128xbf16>
    %c0_1 = arith.constant 0 : index
    %c0_2 = arith.constant 0 : index
    %9 = vector.load %arg4[%c0_1, %c0_2] : memref<128x128xbf16, #tpu.memory_space<vmem>>, vector<128x128xbf16>
    %cst_3 = arith.constant dense<0.000000e+00> : vector<16x128xf32>
    %10 = tpu.matmul %8, %9, %cst_3 {dimension_numbers = #tpu.dot_dimension_numbers<[1], [0], [0], [1], [0, 0, 1, 1], [], []>} : vector<16x128xbf16>, vector<128x128xbf16>, vector<16x128xf32> -> vector<16x128xf32>
    %c0_4 = arith.constant 0 : index
    %c0_5 = arith.constant 0 : index
    %11 = vector.load %arg3[%c0_4, %c0_5] : memref<16x128xbf16, #tpu.memory_space<vmem>>, vector<16x128xbf16>
    %12 = arith.extf %11 : vector<16x128xbf16> to vector<16x128xf32>
    %13 = arith.negf %12 : vector<16x128xf32>
    %14 = math.exp %13 : vector<16x128xf32>
    %cst_6 = arith.constant 1.000000e+00 : f32
    %15 = vector.broadcast %cst_6 : f32 to vector<16x128xf32>
    %16 = arith.addf %15, %14 : vector<16x128xf32>
    %17 = arith.divf %15, %16 : vector<16x128xf32>
    %18 = arith.mulf %12, %17 : vector<16x128xf32>
    %19 = arith.truncf %18 : vector<16x128xf32> to vector<16x128xbf16>
    %c0_7 = arith.constant 0 : index
    %c0_8 = arith.constant 0 : index
    %20 = vector.load %arg5[%c0_7, %c0_8] : memref<128x128xbf16, #tpu.memory_space<vmem>>, vector<128x128xbf16>
    %cst_9 = arith.constant dense<0.000000e+00> : vector<16x128xf32>
    %21 = tpu.matmul %19, %20, %cst_9 {dimension_numbers = #tpu.dot_dimension_numbers<[1], [0], [0], [1], [0, 0, 1, 1], [], []>} : vector<16x128xbf16>, vector<128x128xbf16>, vector<16x128xf32> -> vector<16x128xf32>
    %22 = arith.addf %10, %21 : vector<16x128xf32>
    %c0_10 = arith.constant 0 : index
    %c0_11 = arith.constant 0 : index
    %23 = vector.load %arg6[%c0_10, %c0_11] : memref<1x128xf32, #tpu.memory_space<vmem>>, vector<1x128xf32>
    %24 = vector.broadcast %23 : vector<1x128xf32> to vector<16x128xf32>
    %25 = arith.addf %22, %24 : vector<16x128xf32>
    %c0_12 = arith.constant 0 : index
    %c0_13 = arith.constant 0 : index
    %26 = vector.load %arg7[%c0_12, %c0_13] : memref<16x128xf32, #tpu.memory_space<vmem>>, vector<16x128xf32>
    tpu.vector_store %arg7[%c0_12, %c0_13], %25 {strides = array<i32>} : memref<16x128xf32, #tpu.memory_space<vmem>>, vector<16x128xf32>,
    return
  }
  func.func @transform_0(%arg0: i32, %arg1: i32) -> (i32, i32) {
    %c0_i32 = arith.constant 0 : i32
    %c0_i32_0 = arith.constant 0 : i32
    return %arg0, %c0_i32 : i32, i32
  }
  func.func @transform_1(%arg0: i32, %arg1: i32) -> (i32, i32) {
    %c0_i32 = arith.constant 0 : i32
    %c0_i32_0 = arith.constant 0 : i32
    return %arg0, %c0_i32 : i32, i32
  }
  func.func @transform_2(%arg0: i32, %arg1: i32) -> (i32, i32) {
    %c0_i32 = arith.constant 0 : i32
    %c0_i32_0 = arith.constant 0 : i32
    return %c0_i32, %arg1 : i32, i32
  }
  func.func @transform_3(%arg0: i32, %arg1: i32) -> (i32, i32) {
    %c0_i32 = arith.constant 0 : i32
    %c0_i32_0 = arith.constant 0 : i32
    return %c0_i32, %arg1 : i32, i32
  }
  func.func @transform_4(%arg0: i32, %arg1: i32) -> (i32, i32) {
    %c0_i32 = arith.constant 0 : i32
    %c0_i32_0 = arith.constant 0 : i32
    return %c0_i32, %arg1 : i32, i32
  }
  func.func @transform_5(%arg0: i32, %arg1: i32) -> (i32, i32) {
    %c0_i32 = arith.constant 0 : i32
    return %arg0, %arg1 : i32, i32
  }
}

</mosaic_0001>

<llo_original>
// kernel: rnn_fc_forward.5
$region0: #{rnn_fc_forward.5}
  #allocation0 [shape = 'u32[]', space=smem, size = 0x4, offset = 0x4, fixed_abs, tag = 'smem constant byte address 0x4 - core index']
  #allocation1 [shape = 'u32[72,128]{1,0:T(1,128)}', space=vmem, size = 0x9000, scoped, tag = 'internal scratch']
  %s0 = inlined_call_operand.vmem [shape: f32[16,16], index: 0, kind: input, shape index: {}]
  %s1 = inlined_call_operand.hbm [shape: bf16[16,1024], index: 1, kind: input, shape index: {}]
  %s2 = inlined_call_operand.hbm [shape: f32[1,1024], index: 2, kind: input, shape index: {}]
  %s3 = inlined_call_operand.vmem [shape: bf16[16,1024], index: 3, kind: output, shape index: {}]
  %s4 = sld [smem:[#allocation0]]
  $region30: #{rnn_fc_forward.5} parent=0
    _
  %s6 = ssub.s32 1, %s4
  %s7 = scalar_select 0, %s6, %s4
  $region1: #{rnn_fc_forward.5} parent=0
    #allocation2 [shape = 'u8[32768]{0}', space=vmem, size = 0x8000, scoped, tag = 'input window, operand 1, single buffered']
    #allocation3 [shape = 's32[1]{0}', space=sflag, size = 0x4, scoped, tag = 'scoped memory for rnn_fc_forward.5']
    #allocation4 [shape = 'u8[4096]{0}', space=vmem, size = 0x1000, scoped, tag = 'input window, operand 2, single buffered']
    #allocation5 [shape = 's32[1]{0}', space=sflag, size = 0x4, scoped, tag = 'scoped memory for rnn_fc_forward.5']
    %8 = vsyncpa [#allocation3], 0
    %9 = vsyncpa [#allocation5], 0
    // Predicated region
    $region2: #{rnn_fc_forward.5} parent=1 // pred_check
      _
    $region3: #{rnn_fc_forward.5} parent=1 // pred_check_branch
      %11 = sbr.rel (0) target = $region5
    $region4: #{rnn_fc_forward.5} parent=1 // pred_region
      _
    $region5: #{rnn_fc_forward.5} parent=1 // pred_fallthru
      _
    // Predicated region
    $region6: #{rnn_fc_forward.5} parent=1 // pred_check
      _
    $region7: #{rnn_fc_forward.5} parent=1 // pred_check_branch
      %13 = sbr.rel (0) target = $region9
    $region8: #{rnn_fc_forward.5} parent=1 // pred_region
      %15 = vsyncadd [#allocation3], 0
      %s16 = sshll.u32 %s1, 4
      %s17 = int_to_ptr.hbm [resolvable:$true] %s16
      %s18 = sshll.u32 [#allocation2], 4
      %s19 = int_to_ptr.vmem [resolvable:$true] %s18
      %24 = dma.hbm_to_vmem [thread:$0]  %s17, 1024, %s19, [#allocation3], 512, 512, 32
    $region9: #{rnn_fc_forward.5} parent=1 // pred_fallthru
      _
    // Predicated region
    $region10: #{rnn_fc_forward.5} parent=1 // pred_check
      _
    $region11: #{rnn_fc_forward.5} parent=1 // pred_check_branch
      %26 = sbr.rel (0) target = $region13
    $region12: #{rnn_fc_forward.5} parent=1 // pred_region
      %28 = vsyncadd [#allocation5], 0
      %s30 = sshll.u32 %s2, 4
      %s31 = int_to_ptr.hbm [resolvable:$true] %s30
      %s32 = sshll.u32 [#allocation4], 4
      %s33 = int_to_ptr.vmem [resolvable:$true] %s32
      %35 = dma.hbm_to_vmem [thread:$0]  %s31, 128, %s33, [#allocation5]
    $region13: #{rnn_fc_forward.5} parent=1 // pred_fallthru
      _
    // Predicated region
    $region14: #{rnn_fc_forward.5} parent=1 // pred_check
      _
    $region15: #{rnn_fc_forward.5} parent=1 // pred_check_branch
      %37 = sbr.rel (0) target = $region17
    $region16: #{rnn_fc_forward.5} parent=1 // pred_region
      %39 = dma.done [#allocation3], 1024
    $region17: #{rnn_fc_forward.5} parent=1 // pred_fallthru
      _
    // Predicated region
    $region18: #{rnn_fc_forward.5} parent=1 // pred_check
      _
    $region19: #{rnn_fc_forward.5} parent=1 // pred_check_branch
      %41 = sbr.rel (0) target = $region21
    $region20: #{rnn_fc_forward.5} parent=1 // pred_region
      %43 = dma.done [#allocation5], 128
    $region21: #{rnn_fc_forward.5} parent=1 // pred_fallthru
      _
    %v45 = vld [vmem:[%s0] sm:$0xff]
    %v46 = vld [vmem:[%s0 + $0x8] sm:$0xff]
    %v47 = vpack.c.bf16 %v46, %v45
    %v48 = vld [vmem:[#allocation2] sm:$0xff]
    %v49 = vld [vmem:[#allocation2 + $0x8] sm:$0xff]
    %v50 = vld [vmem:[#allocation2 + $0x10] sm:$0xff]
    %v51 = vld [vmem:[#allocation2 + $0x18] sm:$0xff]
    %v52 = vld [vmem:[#allocation2 + $0x20] sm:$0xff]
    %v53 = vld [vmem:[#allocation2 + $0x28] sm:$0xff]
    %v54 = vld [vmem:[#allocation2 + $0x30] sm:$0xff]
    %v55 = vld [vmem:[#allocation2 + $0x38] sm:$0xff]
    %v56 = vld [vmem:[#allocation4] sm:$0xff]
    %v58 = vperm.slane %v56, 0
    %v59 = vperm.slane %v56, 1
    %v60 = vperm.slane %v56, 2
    %v61 = vperm.slane %v56, 3
    %v62 = vperm.slane %v56, 4
    %v63 = vperm.slane %v56, 5
    %v64 = vperm.slane %v56, 6
    %v65 = vperm.slane %v56, 7
    %v82 = vunpack.c.l.b16 %v48
    %v83 = vunpack.c.h.b16 %v48
    %v84 = vunpack.c.l.b16 %v49
    %v85 = vunpack.c.h.b16 %v49
    %v86 = vunpack.c.l.b16 %v50
    %v87 = vunpack.c.h.b16 %v50
    %v88 = vunpack.c.l.b16 %v51
    %v89 = vunpack.c.h.b16 %v51
    %v90 = vunpack.c.l.b16 %v52
    %v91 = vunpack.c.h.b16 %v52
    %v92 = vunpack.c.l.b16 %v53
    %v93 = vunpack.c.h.b16 %v53
    %v94 = vunpack.c.l.b16 %v54
    %v95 = vunpack.c.h.b16 %v54
    %v96 = vunpack.c.l.b16 %v55
    %v97 = vunpack.c.h.b16 %v55
    %v98 = vpack.c.b16 %v90, %v82
    %v99 = vpack.c.b16 %v91, %v83
    %v100 = vpack.c.b16 %v92, %v84
    %v101 = vpack.c.b16 %v93, %v85
    %v102 = vpack.c.b16 %v94, %v86
    %v103 = vpack.c.b16 %v95, %v87
    %v104 = vpack.c.b16 %v96, %v88
    %v105 = vpack.c.b16 %v97, %v89
    %vm114 = vcmask 130048
    %v116 = vsel %vm114, %v47, 0
    %118 = vmatpush.bf16.msra.mxu0 0
    %119 = vmatpush.bf16.msra.mxu0 0
    %120 = vmatpush.bf16.msra.mxu0 0
    %121 = vmatpush.bf16.msra.mxu0 0
    %122 = vmatpush.bf16.msra.mxu0 0
    %123 = vmatpush.bf16.msra.mxu0 0
    %124 = vmatpush.bf16.msra.mxu0 0
    %125 = vmatpush.bf16.msra.mxu0 %v98
    %126 = vmatmul.bf16.gmra.mxu0 %v116
    %v127 = vpop.f32.mrf.mxu0
    %v128 = vadd.f32 %v58, %v127
    %v129 = vpop.f32.mrf.mxu0
    %v130 = vadd.f32 %v58, %v129
    %131 = vdwg.mxu0
    %132 = vmatpush.bf16.msra.mxu0 0
    %133 = vmatpush.bf16.msra.mxu0 0
    %134 = vmatpush.bf16.msra.mxu0 0
    %135 = vmatpush.bf16.msra.mxu0 0
    %136 = vmatpush.bf16.msra.mxu0 0
    %137 = vmatpush.bf16.msra.mxu0 0
    %138 = vmatpush.bf16.msra.mxu0 0
    %139 = vmatpush.bf16.msra.mxu0 %v99
    %140 = vmatmul.bf16.gmra.mxu0 %v116
    %v141 = vpop.f32.mrf.mxu0
    %v142 = vadd.f32 %v59, %v141
    %v143 = vpop.f32.mrf.mxu0
    %v144 = vadd.f32 %v59, %v143
    %145 = vdwg.mxu0
    %146 = vmatpush.bf16.msra.mxu0 0
    %147 = vmatpush.bf16.msra.mxu0 0
    %148 = vmatpush.bf16.msra.mxu0 0
    %149 = vmatpush.bf16.msra.mxu0 0
    %150 = vmatpush.bf16.msra.mxu0 0
    %151 = vmatpush.bf16.msra.mxu0 0
    %152 = vmatpush.bf16.msra.mxu0 0
    %153 = vmatpush.bf16.msra.mxu0 %v100
    %154 = vmatmul.bf16.gmra.mxu0 %v116
    %v155 = vpop.f32.mrf.mxu0
    %v156 = vadd.f32 %v60, %v155
    %v157 = vpop.f32.mrf.mxu0
    %v158 = vadd.f32 %v60, %v157
    %159 = vdwg.mxu0
    %160 = vmatpush.bf16.msra.mxu0 0
    %161 = vmatpush.bf16.msra.mxu0 0
    %162 = vmatpush.bf16.msra.mxu0 0
    %163 = vmatpush.bf16.msra.mxu0 0
    %164 = vmatpush.bf16.msra.mxu0 0
    %165 = vmatpush.bf16.msra.mxu0 0
    %166 = vmatpush.bf16.msra.mxu0 0
    %167 = vmatpush.bf16.msra.mxu0 %v101
    %168 = vmatmul.bf16.gmra.mxu0 %v116
    %v169 = vpop.f32.mrf.mxu0
    %v170 = vadd.f32 %v61, %v169
    %v171 = vpop.f32.mrf.mxu0
    %v172 = vadd.f32 %v61, %v171
    %173 = vdwg.mxu0
    %174 = vmatpush.bf16.msra.mxu0 0
    %175 = vmatpush.bf16.msra.mxu0 0
    %176 = vmatpush.bf16.msra.mxu0 0
    %177 = vmatpush.bf16.msra.mxu0 0
    %178 = vmatpush.bf16.msra.mxu0 0
    %179 = vmatpush.bf16.msra.mxu0 0
    %180 = vmatpush.bf16.msra.mxu0 0
    %181 = vmatpush.bf16.msra.mxu0 %v102
    %182 = vmatmul.bf16.gmra.mxu0 %v116
    %v183 = vpop.f32.mrf.mxu0
    %v184 = vadd.f32 %v62, %v183
    %v185 = vpop.f32.mrf.mxu0
    %v186 = vadd.f32 %v62, %v185
    %187 = vdwg.mxu0
    %188 = vmatpush.bf16.msra.mxu0 0
    %189 = vmatpush.bf16.msra.mxu0 0
    %190 = vmatpush.bf16.msra.mxu0 0
    %191 = vmatpush.bf16.msra.mxu0 0
    %192 = vmatpush.bf16.msra.mxu0 0
    %193 = vmatpush.bf16.msra.mxu0 0
    %194 = vmatpush.bf16.msra.mxu0 0
    %195 = vmatpush.bf16.msra.mxu0 %v103
    %196 = vmatmul.bf16.gmra.mxu0 %v116
    %v197 = vpop.f32.mrf.mxu0
    %v198 = vadd.f32 %v63, %v197
    %v199 = vpop.f32.mrf.mxu0
    %v200 = vadd.f32 %v63, %v199
    %201 = vdwg.mxu0
    %202 = vmatpush.bf16.msra.mxu0 0
    %203 = vmatpush.bf16.msra.mxu0 0
    %204 = vmatpush.bf16.msra.mxu0 0
    %205 = vmatpush.bf16.msra.mxu0 0
    %206 = vmatpush.bf16.msra.mxu0 0
    %207 = vmatpush.bf16.msra.mxu0 0
    %208 = vmatpush.bf16.msra.mxu0 0
    %209 = vmatpush.bf16.msra.mxu0 %v104
    %210 = vmatmul.bf16.gmra.mxu0 %v116
    %v211 = vpop.f32.mrf.mxu0
    %v212 = vadd.f32 %v64, %v211
    %v213 = vpop.f32.mrf.mxu0
    %v214 = vadd.f32 %v64, %v213
    %215 = vdwg.mxu0
    %216 = vmatpush.bf16.msra.mxu0 0
    %217 = vmatpush.bf16.msra.mxu0 0
    %218 = vmatpush.bf16.msra.mxu0 0
    %219 = vmatpush.bf16.msra.mxu0 0
    %220 = vmatpush.bf16.msra.mxu0 0
    %221 = vmatpush.bf16.msra.mxu0 0
    %222 = vmatpush.bf16.msra.mxu0 0
    %223 = vmatpush.bf16.msra.mxu0 %v105
    %224 = vmatmul.bf16.gmra.mxu0 %v116
    %v225 = vpop.f32.mrf.mxu0
    %v226 = vadd.f32 %v65, %v225
    %v227 = vpop.f32.mrf.mxu0
    %v228 = vadd.f32 %v65, %v227
    %229 = vdwg.mxu0
    %v230 = vpack.c.bf16 %v142, %v128
    %v231 = vpack.c.bf16 %v170, %v156
    %v232 = vpack.c.bf16 %v198, %v184
    %v233 = vpack.c.bf16 %v226, %v212
    %v234 = vpack.c.bf16 %v144, %v130
    %v235 = vpack.c.bf16 %v172, %v158
    %v236 = vpack.c.bf16 %v200, %v186
    %v237 = vpack.c.bf16 %v228, %v214
    %238 = vst [vmem:[%s3] sm:$0xff] %v230
    %239 = vst [vmem:[%s3 + $0x8] sm:$0xff] %v231
    %240 = vst [vmem:[%s3 + $0x10] sm:$0xff] %v232
    %241 = vst [vmem:[%s3 + $0x18] sm:$0xff] %v233
    %242 = vst [vmem:[%s3 + $0x20] sm:$0xff] %v234
    %243 = vst [vmem:[%s3 + $0x28] sm:$0xff] %v235
    %244 = vst [vmem:[%s3 + $0x30] sm:$0xff] %v236
    %245 = vst [vmem:[%s3 + $0x38] sm:$0xff] %v237
    // Predicated region
    $region22: #{rnn_fc_forward.5} parent=1 // pred_check
      _
    $region23: #{rnn_fc_forward.5} parent=1 // pred_check_branch
      %247 = sbr.rel (0) target = $region25
    $region24: #{rnn_fc_forward.5} parent=1 // pred_region
      _
    $region25: #{rnn_fc_forward.5} parent=1 // pred_fallthru
      _
    // Predicated region
    $region26: #{rnn_fc_forward.5} parent=1 // pred_check
      _
    $region27: #{rnn_fc_forward.5} parent=1 // pred_check_branch
      %249 = sbr.rel (0) target = $region29
    $region28: #{rnn_fc_forward.5} parent=1 // pred_region
      _
    $region29: #{rnn_fc_forward.5} parent=1 // pred_fallthru
      _
    %250 = vsyncpa [#allocation3], 1
    %251 = vsyncpa [#allocation5], 1

// kernel: rnn_fc_forward.6
$region0: #{rnn_fc_forward.6}
  #allocation0 [shape = 'u32[]', space=smem, size = 0x4, offset = 0x4, fixed_abs, tag = 'smem constant byte address 0x4 - core index']
  #allocation1 [shape = 'u32[72,128]{1,0:T(1,128)}', space=vmem, size = 0x9000, scoped, tag = 'internal scratch']
  #allocation2 [shape = 'f32[2,128]{1,0:T(2,128)}', space=vmem, size = 0x400, scoped, tag = 'scratch operand']
  #allocation3 [shape = 'f32[2,128]{1,0:T(2,128)}', space=vmem, size = 0x400, scoped, tag = 'scratch operand']
  #allocation4 [shape = 'f32[2,128]{1,0:T(2,128)}', space=vmem, size = 0x400, scoped, tag = 'scratch operand']
  #allocation5 [shape = 'f32[2,128]{1,0:T(2,128)}', space=vmem, size = 0x400, scoped, tag = 'scratch operand']
  %s0 = inlined_call_operand.vmem [shape: bf16[8,2,1024], index: 0, kind: input, shape index: {}, may-alias: {0,1}]
  %s1 = inlined_call_operand.vmem [shape: bf16[8,2,1024], index: 1, kind: input, shape index: {}, may-alias: {0,1}]
  %s2 = inlined_call_operand.hbm [shape: bf16[128,512], index: 2, kind: input, shape index: {}]
  %s3 = inlined_call_operand.hbm [shape: bf16[128,512], index: 3, kind: input, shape index: {}]
  %s4 = inlined_call_operand.vmem [shape: bf16[8,2,128], index: 4, kind: output, shape index: {0}]
  %s5 = inlined_call_operand.vmem [shape: bf16[8,2,128], index: 5, kind: output, shape index: {1}]
  %6 = xla_tuple %s4, %s5
  %s7 = sld [smem:[#allocation0]]
  $region135: #{rnn_fc_forward.6} parent=0
    _
  %s9 = ssub.s32 1, %s7
  %s10 = scalar_select 0, %s9, %s7
  $region1: #{rnn_fc_forward.6} parent=0
    #allocation6 [shape = 'u8[16384]{0}', space=vmem, size = 0x4000, scoped, tag = 'input window, operand 0, single buffered']
    #allocation7 [shape = 'u8[16384]{0}', space=vmem, size = 0x4000, scoped, tag = 'input window, operand 1, single buffered']
    #allocation8 [shape = 'u8[131072]{0}', space=vmem, size = 0x20000, scoped, tag = 'input window, operand 2, single buffered']
    #allocation9 [shape = 's32[1]{0}', space=sflag, size = 0x4, scoped, tag = 'scoped memory for rnn_fc_forward.6']
    #allocation10 [shape = 'u8[131072]{0}', space=vmem, size = 0x20000, scoped, tag = 'input window, operand 3, single buffered']
    #allocation11 [shape = 's32[1]{0}', space=sflag, size = 0x4, scoped, tag = 'scoped memory for rnn_fc_forward.6']
    %11 = vsyncpa [#allocation9], 0
    %12 = vsyncpa [#allocation11], 0
    // Predicated region
    $region2: #{rnn_fc_forward.6} parent=1 // pred_check
      _
    $region3: #{rnn_fc_forward.6} parent=1 // pred_check_branch
      %14 = sbr.rel (0) target = $region5
    $region4: #{rnn_fc_forward.6} parent=1 // pred_region
      // Predicated region
      $region6: #{rnn_fc_forward.6} parent=4 // pred_check
        _
      $region7: #{rnn_fc_forward.6} parent=4 // pred_check_branch
        %16 = sbr.rel (0) target = $region9
      $region8: #{rnn_fc_forward.6} parent=4 // pred_region
        // Predicated region
        $region10: #{rnn_fc_forward.6} parent=8 // pred_check
          _
        $region11: #{rnn_fc_forward.6} parent=8 // pred_check_branch
          %18 = sbr.rel target = $region13
        $region12: #{rnn_fc_forward.6} parent=8 // pred_region
          // Predicated region
          $region25: #{rnn_fc_forward.6} parent=12 // pred_check
            _
          $region26: #{rnn_fc_forward.6} parent=12 // pred_check_branch
            %48 = sbr.rel (0) target = $region28
          $region27: #{rnn_fc_forward.6} parent=12 // pred_region
            loop: start=0, step=1, limit=1
            $region29: #{rnn_fc_forward.6} parent=27 // loop_pre_header
              _
            $region30: #{rnn_fc_forward.6} parent=27 // loop_header
              %s50 = sphi 0, %s54
              %p51 = scmp.ge.s32.totalorder %s50, 1
              %s55 = sphi %s0, %s0
              %s56 = sphi [#allocation6], [#allocation6]
            $region31: #{rnn_fc_forward.6} parent=27 // loop_header_branch
              %53 = sbr.rel (%p51) target = $region35
            $region32: #{rnn_fc_forward.6} parent=27 // loop_body
              _
            $region33: #{rnn_fc_forward.6} parent=27 // loop_footer
              %s54 = sadd.s32 1, %s50
            $region34: #{rnn_fc_forward.6} parent=27 // loop_footer_branch
              %49 = sbr.rel target = $region30
            $region35: #{rnn_fc_forward.6} parent=27 // loop_exit
              _
            %s58 = ssub.s32 16, 1
            loop: start=0, step=1, limit=1
            $region36: #{rnn_fc_forward.6} parent=27 // loop_pre_header
              _
            $region37: #{rnn_fc_forward.6} parent=27 // loop_header
              %s60 = sphi 0, %s64
              %p61 = scmp.ge.s32.totalorder %s60, 1
              %s65 = sphi %s0, %s0
              %s66 = sphi [#allocation6], [#allocation6]
            $region38: #{rnn_fc_forward.6} parent=27 // loop_header_branch
              %63 = sbr.rel (%p61) target = $region42
            $region39: #{rnn_fc_forward.6} parent=27 // loop_body
              %v67 = vld [vmem:[%s65] sm:%s58]
              %68 = vst [vmem:[%s66] sm:%s58] %v67
              %v69 = vld [vmem:[%s65 + $0x8] sm:%s58]
              %70 = vst [vmem:[%s66 + $0x4] sm:%s58] %v69
              %v71 = vld [vmem:[%s65 + $0x10] sm:%s58]
              %72 = vst [vmem:[%s66 + $0x8] sm:%s58] %v71
              %v73 = vld [vmem:[%s65 + $0x18] sm:%s58]
              %74 = vst [vmem:[%s66 + $0xc] sm:%s58] %v73
              %v75 = vld [vmem:[%s65 + $0x20] sm:%s58]
              %76 = vst [vmem:[%s66 + $0x10] sm:%s58] %v75
              %v77 = vld [vmem:[%s65 + $0x28] sm:%s58]
              %78 = vst [vmem:[%s66 + $0x14] sm:%s58] %v77
              %v79 = vld [vmem:[%s65 + $0x30] sm:%s58]
              %80 = vst [vmem:[%s66 + $0x18] sm:%s58] %v79
              %v81 = vld [vmem:[%s65 + $0x38] sm:%s58]
              %82 = vst [vmem:[%s66 + $0x1c] sm:%s58] %v81
            $region40: #{rnn_fc_forward.6} parent=27 // loop_footer
              %s64 = sadd.s32 1, %s60
            $region41: #{rnn_fc_forward.6} parent=27 // loop_footer_branch
              %59 = sbr.rel target = $region37
            $region42: #{rnn_fc_forward.6} parent=27 // loop_exit
              _
          $region28: #{rnn_fc_forward.6} parent=12 // pred_fallthru
            _
        $region13: #{rnn_fc_forward.6} parent=8 // pred_fallthru
          _
        // Predicated region
        $region14: #{rnn_fc_forward.6} parent=8 // pred_check
          _
        $region15: #{rnn_fc_forward.6} parent=8 // pred_check_branch
          %20 = sbr.rel (0) target = $region17
        $region16: #{rnn_fc_forward.6} parent=8 // pred_region
          %s22 = ssub.s32 16, 1
          loop: start=0, step=1, limit=1
          $region18: #{rnn_fc_forward.6} parent=16 // loop_pre_header
            _
          $region19: #{rnn_fc_forward.6} parent=16 // loop_header
            %s24 = sphi 0, %s28
            %p25 = scmp.ge.s32.totalorder %s24, 1
            %s29 = sphi %s0, %s0
            %s30 = sphi [#allocation6], [#allocation6]
          $region20: #{rnn_fc_forward.6} parent=16 // loop_header_branch
            %27 = sbr.rel (%p25) target = $region24
          $region21: #{rnn_fc_forward.6} parent=16 // loop_body
            %v31 = vld [vmem:[%s29] sm:%s22]
            %32 = vst [vmem:[%s30] sm:%s22] %v31
            %v33 = vld [vmem:[%s29 + $0x8] sm:%s22]
            %34 = vst [vmem:[%s30 + $0x4] sm:%s22] %v33
            %v35 = vld [vmem:[%s29 + $0x10] sm:%s22]
            %36 = vst [vmem:[%s30 + $0x8] sm:%s22] %v35
            %v37 = vld [vmem:[%s29 + $0x18] sm:%s22]
            %38 = vst [vmem:[%s30 + $0xc] sm:%s22] %v37
            %v39 = vld [vmem:[%s29 + $0x20] sm:%s22]
            %40 = vst [vmem:[%s30 + $0x10] sm:%s22] %v39
            %v41 = vld [vmem:[%s29 + $0x28] sm:%s22]
            %42 = vst [vmem:[%s30 + $0x14] sm:%s22] %v41
            %v43 = vld [vmem:[%s29 + $0x30] sm:%s22]
            %44 = vst [vmem:[%s30 + $0x18] sm:%s22] %v43
            %v45 = vld [vmem:[%s29 + $0x38] sm:%s22]
            %46 = vst [vmem:[%s30 + $0x1c] sm:%s22] %v45
          $region22: #{rnn_fc_forward.6} parent=16 // loop_footer
            %s28 = sadd.s32 1, %s24
          $region23: #{rnn_fc_forward.6} parent=16 // loop_footer_branch
            %23 = sbr.rel target = $region19
          $region24: #{rnn_fc_forward.6} parent=16 // loop_exit
            _
        $region17: #{rnn_fc_forward.6} parent=8 // pred_fallthru
          _
      $region9: #{rnn_fc_forward.6} parent=4 // pred_fallthru
        _
      %83 = vnop
    $region5: #{rnn_fc_forward.6} parent=1 // pred_fallthru
      _
    // Predicated region
    $region43: #{rnn_fc_forward.6} parent=1 // pred_check
      _
    $region44: #{rnn_fc_forward.6} parent=1 // pred_check_branch
      %85 = sbr.rel (0) target = $region46
    $region45: #{rnn_fc_forward.6} parent=1 // pred_region
      %s86 = ssub.s32 0, 0
      %s87 = smul.u32 8, %s86
      %s88 = smul.addr %s87, 8
      %s89 = sadd.s32 4, %s88
      %s90 = scalar_lea.vmem %s1, %s89
      // Predicated region
      $region47: #{rnn_fc_forward.6} parent=45 // pred_check
        _
      $region48: #{rnn_fc_forward.6} parent=45 // pred_check_branch
        %92 = sbr.rel (0) target = $region50
      $region49: #{rnn_fc_forward.6} parent=45 // pred_region
        // Predicated region
        $region51: #{rnn_fc_forward.6} parent=49 // pred_check
          _
        $region52: #{rnn_fc_forward.6} parent=49 // pred_check_branch
          %94 = sbr.rel target = $region54
        $region53: #{rnn_fc_forward.6} parent=49 // pred_region
          // Predicated region
          $region66: #{rnn_fc_forward.6} parent=53 // pred_check
            _
          $region67: #{rnn_fc_forward.6} parent=53 // pred_check_branch
            %124 = sbr.rel (0) target = $region69
          $region68: #{rnn_fc_forward.6} parent=53 // pred_region
            loop: start=0, step=1, limit=1
            $region70: #{rnn_fc_forward.6} parent=68 // loop_pre_header
              _
            $region71: #{rnn_fc_forward.6} parent=68 // loop_header
              %s126 = sphi 0, %s130
              %p127 = scmp.ge.s32.totalorder %s126, 1
              %s131 = sphi %s90, %s90
              %s132 = sphi [#allocation7], [#allocation7]
            $region72: #{rnn_fc_forward.6} parent=68 // loop_header_branch
              %129 = sbr.rel (%p127) target = $region76
            $region73: #{rnn_fc_forward.6} parent=68 // loop_body
              _
            $region74: #{rnn_fc_forward.6} parent=68 // loop_footer
              %s130 = sadd.s32 1, %s126
            $region75: #{rnn_fc_forward.6} parent=68 // loop_footer_branch
              %125 = sbr.rel target = $region71
            $region76: #{rnn_fc_forward.6} parent=68 // loop_exit
              _
            %s134 = ssub.s32 16, 1
            loop: start=0, step=1, limit=1
            $region77: #{rnn_fc_forward.6} parent=68 // loop_pre_header
              _
            $region78: #{rnn_fc_forward.6} parent=68 // loop_header
              %s136 = sphi 0, %s140
              %p137 = scmp.ge.s32.totalorder %s136, 1
              %s141 = sphi %s90, %s90
              %s142 = sphi [#allocation7], [#allocation7]
            $region79: #{rnn_fc_forward.6} parent=68 // loop_header_branch
              %139 = sbr.rel (%p137) target = $region83
            $region80: #{rnn_fc_forward.6} parent=68 // loop_body
              %v143 = vld [vmem:[%s141] sm:%s134]
              %144 = vst [vmem:[%s142] sm:%s134] %v143
              %v145 = vld [vmem:[%s141 + $0x8] sm:%s134]
              %146 = vst [vmem:[%s142 + $0x4] sm:%s134] %v145
              %v147 = vld [vmem:[%s141 + $0x10] sm:%s134]
              %148 = vst [vmem:[%s142 + $0x8] sm:%s134] %v147
              %v149 = vld [vmem:[%s141 + $0x18] sm:%s134]
              %150 = vst [vmem:[%s142 + $0xc] sm:%s134] %v149
              %v151 = vld [vmem:[%s141 + $0x20] sm:%s134]
              %152 = vst [vmem:[%s142 + $0x10] sm:%s134] %v151
              %v153 = vld [vmem:[%s141 + $0x28] sm:%s134]
              %154 = vst [vmem:[%s142 + $0x14] sm:%s134] %v153
              %v155 = vld [vmem:[%s141 + $0x30] sm:%s134]
              %156 = vst [vmem:[%s142 + $0x18] sm:%s134] %v155
              %v157 = vld [vmem:[%s141 + $0x38] sm:%s134]
              %158 = vst [vmem:[%s142 + $0x1c] sm:%s134] %v157
            $region81: #{rnn_fc_forward.6} parent=68 // loop_footer
              %s140 = sadd.s32 1, %s136
            $region82: #{rnn_fc_forward.6} parent=68 // loop_footer_branch
              %135 = sbr.rel target = $region78
            $region83: #{rnn_fc_forward.6} parent=68 // loop_exit
              _
          $region69: #{rnn_fc_forward.6} parent=53 // pred_fallthru
            _
        $region54: #{rnn_fc_forward.6} parent=49 // pred_fallthru
          _
        // Predicated region
        $region55: #{rnn_fc_forward.6} parent=49 // pred_check
          _
        $region56: #{rnn_fc_forward.6} parent=49 // pred_check_branch
          %96 = sbr.rel (0) target = $region58
        $region57: #{rnn_fc_forward.6} parent=49 // pred_region
          %s98 = ssub.s32 16, 1
          loop: start=0, step=1, limit=1
          $region59: #{rnn_fc_forward.6} parent=57 // loop_pre_header
            _
          $region60: #{rnn_fc_forward.6} parent=57 // loop_header
            %s100 = sphi 0, %s104
            %p101 = scmp.ge.s32.totalorder %s100, 1
            %s105 = sphi %s90, %s90
            %s106 = sphi [#allocation7], [#allocation7]
          $region61: #{rnn_fc_forward.6} parent=57 // loop_header_branch
            %103 = sbr.rel (%p101) target = $region65
          $region62: #{rnn_fc_forward.6} parent=57 // loop_body
            %v107 = vld [vmem:[%s105] sm:%s98]
            %108 = vst [vmem:[%s106] sm:%s98] %v107
            %v109 = vld [vmem:[%s105 + $0x8] sm:%s98]
            %110 = vst [vmem:[%s106 + $0x4] sm:%s98] %v109
            %v111 = vld [vmem:[%s105 + $0x10] sm:%s98]
            %112 = vst [vmem:[%s106 + $0x8] sm:%s98] %v111
            %v113 = vld [vmem:[%s105 + $0x18] sm:%s98]
            %114 = vst [vmem:[%s106 + $0xc] sm:%s98] %v113
            %v115 = vld [vmem:[%s105 + $0x20] sm:%s98]
            %116 = vst [vmem:[%s106 + $0x10] sm:%s98] %v115
            %v117 = vld [vmem:[%s105 + $0x28] sm:%s98]
            %118 = vst [vmem:[%s106 + $0x14] sm:%s98] %v117
            %v119 = vld [vmem:[%s105 + $0x30] sm:%s98]
            %120 = vst [vmem:[%s106 + $0x18] sm:%s98] %v119
            %v121 = vld [vmem:[%s105 + $0x38] sm:%s98]
            %122 = vst [vmem:[%s106 + $0x1c] sm:%s98] %v121
          $region63: #{rnn_fc_forward.6} parent=57 // loop_footer
            %s104 = sadd.s32 1, %s100
          $region64: #{rnn_fc_forward.6} parent=57 // loop_footer_branch
            %99 = sbr.rel target = $region60
          $region65: #{rnn_fc_forward.6} parent=57 // loop_exit
            _
        $region58: #{rnn_fc_forward.6} parent=49 // pred_fallthru
          _
      $region50: #{rnn_fc_forward.6} parent=45 // pred_fallthru
        _
      %159 = vnop
    $region46: #{rnn_fc_forward.6} parent=1 // pred_fallthru
      _
    // Predicated region
    $region84: #{rnn_fc_forward.6} parent=1 // pred_check
      _
    $region85: #{rnn_fc_forward.6} parent=1 // pred_check_branch
      %161 = sbr.rel (0) target = $region87
    $region86: #{rnn_fc_forward.6} parent=1 // pred_region
      %163 = vsyncadd [#allocation9], 0
      %s164 = sshll.u32 %s2, 4
      %s165 = int_to_ptr.hbm [resolvable:$true] %s164
      %s166 = sshll.u32 [#allocation8], 4
      %s167 = int_to_ptr.vmem [resolvable:$true] %s166
      %172 = dma.hbm_to_vmem [thread:$0]  %s165, 4096, %s167, [#allocation9], 256, 256, 16
    $region87: #{rnn_fc_forward.6} parent=1 // pred_fallthru
      _
    // Predicated region
    $region88: #{rnn_fc_forward.6} parent=1 // pred_check
      _
    $region89: #{rnn_fc_forward.6} parent=1 // pred_check_branch
      %174 = sbr.rel (0) target = $region91
    $region90: #{rnn_fc_forward.6} parent=1 // pred_region
      %176 = vsyncadd [#allocation11], 0
      %s177 = sshll.u32 %s3, 4
      %s178 = int_to_ptr.hbm [resolvable:$true] %s177
      %s179 = sshll.u32 [#allocation10], 4
      %s180 = int_to_ptr.vmem [resolvable:$true] %s179
      %185 = dma.hbm_to_vmem [thread:$0]  %s178, 4096, %s180, [#allocation11], 256, 256, 16
    $region91: #{rnn_fc_forward.6} parent=1 // pred_fallthru
      _
    // Predicated region
    $region92: #{rnn_fc_forward.6} parent=1 // pred_check
      _
    $region93: #{rnn_fc_forward.6} parent=1 // pred_check_branch
      %187 = sbr.rel (0) target = $region95
    $region94: #{rnn_fc_forward.6} parent=1 // pred_region
      _
    $region95: #{rnn_fc_forward.6} parent=1 // pred_fallthru
      _
    // Predicated region
    $region96: #{rnn_fc_forward.6} parent=1 // pred_check
      _
    $region97: #{rnn_fc_forward.6} parent=1 // pred_check_branch
      %189 = sbr.rel (0) target = $region99
    $region98: #{rnn_fc_forward.6} parent=1 // pred_region
      _
    $region99: #{rnn_fc_forward.6} parent=1 // pred_fallthru
      _
    // Predicated region
    $region100: #{rnn_fc_forward.6} parent=1 // pred_check
      _
    $region101: #{rnn_fc_forward.6} parent=1 // pred_check_branch
      %191 = sbr.rel (0) target = $region103
    $region102: #{rnn_fc_forward.6} parent=1 // pred_region
      %193 = dma.done [#allocation9], 4096
    $region103: #{rnn_fc_forward.6} parent=1 // pred_fallthru
      _
    // Predicated region
    $region104: #{rnn_fc_forward.6} parent=1 // pred_check
      _
    $region105: #{rnn_fc_forward.6} parent=1 // pred_check_branch
      %195 = sbr.rel (0) target = $region107
    $region106: #{rnn_fc_forward.6} parent=1 // pred_region
      %197 = dma.done [#allocation11], 4096
    $region107: #{rnn_fc_forward.6} parent=1 // pred_fallthru
      _
    %s198 = ssub.s32 0, 0
    %s199 = smul.u32 8, %s198
    %p200 = scmp.lt.s32.totalorder %s199, 7
    %s201 = scalar_select %p200, %s199, 7
    %s202 = scalar_lea.vmem %s5, %s201
    %s203 = ssub.s32 0, 0
    %s204 = smul.u32 8, %s203
    %s205 = ssub.s32 0, 0
    %s206 = smul.u32 8, %s205
    %p207 = scmp.lt.s32.totalorder %s206, 7
    %s208 = scalar_select %p207, %s206, 7
    %s209 = scalar_lea.vmem %s5, %s208
    %s210 = ssub.s32 0, 0
    %s211 = smul.u32 8, %s210
    %p212 = scmp.eq.s32.totalorder 0, 0
    // Predicated region
    $region108: #{rnn_fc_forward.6} parent=1 // pred_check
      %p213 = pneg %p212
    $region109: #{rnn_fc_forward.6} parent=1 // pred_check_branch
      %215 = sbr.rel (%p213) target = $region111
    $region110: #{rnn_fc_forward.6} parent=1 // pred_region
      %216 = vst [vmem:[#allocation2] sm:$0x3] 0.0
      %217 = vst [vmem:[#allocation3] sm:$0x3] 0.0
      %218 = vst [vmem:[#allocation4] sm:$0x3] 0.0
      %219 = vst [vmem:[#allocation5] sm:$0x3] 0.0
    $region111: #{rnn_fc_forward.6} parent=1 // pred_fallthru
      _
    %v220 = vld [vmem:[#allocation2] sm:$0x3]
    %v221 = vld [vmem:[#allocation3] sm:$0x3]
    %v222 = vld [vmem:[#allocation4] sm:$0x3]
    %v223 = vld [vmem:[#allocation5] sm:$0x3]
    loop: start=0, step=1, limit=8
    $region112: #{rnn_fc_forward.6} parent=1 // loop_pre_header
      _
    $region113: #{rnn_fc_forward.6} parent=1 // loop_header
      %s225 = sphi 0, %s229
      %p226 = scmp.ge.s32.totalorder %s225, 8
      %v230 = vphi %v220, %v530
      %v231 = vphi %v221, %v526
      %v232 = vphi %v222, %v828
      %v233 = vphi %v223, %v824
    $region114: #{rnn_fc_forward.6} parent=1 // loop_header_branch
      %228 = sbr.rel (%p226) target = $region118
    $region115: #{rnn_fc_forward.6} parent=1 // loop_body
      %s234 = smul.u32 %s225, 4
      %s235 = scalar_lea.vmem [#allocation6], %s234
      %v236 = vld [vmem:[%s235] sm:$0xf]
      %v237 = vunpack.c.l.bf16 %v236
      %v238 = vpack.c.bf16 %v230, %v230
      %v239 = vld [vmem:[#allocation8] sm:$0xff]
      %v240 = vld [vmem:[#allocation8 + $0x8] sm:$0xff]
      %v241 = vld [vmem:[#allocation8 + $0x10] sm:$0xff]
      %v242 = vld [vmem:[#allocation8 + $0x18] sm:$0xff]
      %v243 = vld [vmem:[#allocation8 + $0x20] sm:$0xff]
      %v244 = vld [vmem:[#allocation8 + $0x28] sm:$0xff]
      %v245 = vld [vmem:[#allocation8 + $0x30] sm:$0xff]
      %v246 = vld [vmem:[#allocation8 + $0x38] sm:$0xff]
      %v247 = vld [vmem:[#allocation8 + $0x40] sm:$0xff]
      %v248 = vld [vmem:[#allocation8 + $0x48] sm:$0xff]
      %v249 = vld [vmem:[#allocation8 + $0x50] sm:$0xff]
      %v250 = vld [vmem:[#allocation8 + $0x58] sm:$0xff]
      %v251 = vld [vmem:[#allocation8 + $0x60] sm:$0xff]
      %v252 = vld [vmem:[#allocation8 + $0x68] sm:$0xff]
      %v253 = vld [vmem:[#allocation8 + $0x70] sm:$0xff]
      %v254 = vld [vmem:[#allocation8 + $0x78] sm:$0xff]
      %v255 = vld [vmem:[#allocation8 + $0x80] sm:$0xff]
      %v256 = vld [vmem:[#allocation8 + $0x88] sm:$0xff]
      %v257 = vld [vmem:[#allocation8 + $0x90] sm:$0xff]
      %v258 = vld [vmem:[#allocation8 + $0x98] sm:$0xff]
      %v259 = vld [vmem:[#allocation8 + $0xa0] sm:$0xff]
      %v260 = vld [vmem:[#allocation8 + $0xa8] sm:$0xff]
      %v261 = vld [vmem:[#allocation8 + $0xb0] sm:$0xff]
      %v262 = vld [vmem:[#allocation8 + $0xb8] sm:$0xff]
      %v263 = vld [vmem:[#allocation8 + $0xc0] sm:$0xff]
      %v264 = vld [vmem:[#allocation8 + $0xc8] sm:$0xff]
      %v265 = vld [vmem:[#allocation8 + $0xd0] sm:$0xff]
      %v266 = vld [vmem:[#allocation8 + $0xd8] sm:$0xff]
      %v267 = vld [vmem:[#allocation8 + $0xe0] sm:$0xff]
      %v268 = vld [vmem:[#allocation8 + $0xe8] sm:$0xff]
      %v269 = vld [vmem:[#allocation8 + $0xf0] sm:$0xff]
      %v270 = vld [vmem:[#allocation8 + $0xf8] sm:$0xff]
      %v303 = vunpack.c.l.b16 %v239
      %v304 = vunpack.c.h.b16 %v239
      %v305 = vunpack.c.l.b16 %v240
      %v306 = vunpack.c.h.b16 %v240
      %v307 = vunpack.c.l.b16 %v241
      %v308 = vunpack.c.h.b16 %v241
      %v309 = vunpack.c.l.b16 %v242
      %v310 = vunpack.c.h.b16 %v242
      %v311 = vunpack.c.l.b16 %v243
      %v312 = vunpack.c.h.b16 %v243
      %v313 = vunpack.c.l.b16 %v244
      %v314 = vunpack.c.h.b16 %v244
      %v315 = vunpack.c.l.b16 %v245
      %v316 = vunpack.c.h.b16 %v245
      %v317 = vunpack.c.l.b16 %v246
      %v318 = vunpack.c.h.b16 %v246
      %v319 = vunpack.c.l.b16 %v247
      %v320 = vunpack.c.h.b16 %v247
      %v321 = vunpack.c.l.b16 %v248
      %v322 = vunpack.c.h.b16 %v248
      %v323 = vunpack.c.l.b16 %v249
      %v324 = vunpack.c.h.b16 %v249
      %v325 = vunpack.c.l.b16 %v250
      %v326 = vunpack.c.h.b16 %v250
      %v327 = vunpack.c.l.b16 %v251
      %v328 = vunpack.c.h.b16 %v251
      %v329 = vunpack.c.l.b16 %v252
      %v330 = vunpack.c.h.b16 %v252
      %v331 = vunpack.c.l.b16 %v253
      %v332 = vunpack.c.h.b16 %v253
      %v333 = vunpack.c.l.b16 %v254
      %v334 = vunpack.c.h.b16 %v254
      %v335 = vunpack.c.l.b16 %v255
      %v336 = vunpack.c.h.b16 %v255
      %v337 = vunpack.c.l.b16 %v256
      %v338 = vunpack.c.h.b16 %v256
      %v339 = vunpack.c.l.b16 %v257
      %v340 = vunpack.c.h.b16 %v257
      %v341 = vunpack.c.l.b16 %v258
      %v342 = vunpack.c.h.b16 %v258
      %v343 = vunpack.c.l.b16 %v259
      %v344 = vunpack.c.h.b16 %v259
      %v345 = vunpack.c.l.b16 %v260
      %v346 = vunpack.c.h.b16 %v260
      %v347 = vunpack.c.l.b16 %v261
      %v348 = vunpack.c.h.b16 %v261
      %v349 = vunpack.c.l.b16 %v262
      %v350 = vunpack.c.h.b16 %v262
      %v351 = vunpack.c.l.b16 %v263
      %v352 = vunpack.c.h.b16 %v263
      %v353 = vunpack.c.l.b16 %v264
      %v354 = vunpack.c.h.b16 %v264
      %v355 = vunpack.c.l.b16 %v265
      %v356 = vunpack.c.h.b16 %v265
      %v357 = vunpack.c.l.b16 %v266
      %v358 = vunpack.c.h.b16 %v266
      %v359 = vunpack.c.l.b16 %v267
      %v360 = vunpack.c.h.b16 %v267
      %v361 = vunpack.c.l.b16 %v268
      %v362 = vunpack.c.h.b16 %v268
      %v363 = vunpack.c.l.b16 %v269
      %v364 = vunpack.c.h.b16 %v269
      %v365 = vunpack.c.l.b16 %v270
      %v366 = vunpack.c.h.b16 %v270
      %v367 = vpack.c.b16 %v307, %v303
      %v368 = vpack.c.b16 %v308, %v304
      %v369 = vpack.c.b16 %v309, %v305
      %v370 = vpack.c.b16 %v310, %v306
      %v371 = vpack.c.b16 %v315, %v311
      %v372 = vpack.c.b16 %v316, %v312
      %v373 = vpack.c.b16 %v317, %v313
      %v374 = vpack.c.b16 %v318, %v314
      %v375 = vpack.c.b16 %v323, %v319
      %v376 = vpack.c.b16 %v324, %v320
      %v377 = vpack.c.b16 %v325, %v321
      %v378 = vpack.c.b16 %v326, %v322
      %v379 = vpack.c.b16 %v331, %v327
      %v380 = vpack.c.b16 %v332, %v328
      %v381 = vpack.c.b16 %v333, %v329
      %v382 = vpack.c.b16 %v334, %v330
      %v383 = vpack.c.b16 %v339, %v335
      %v384 = vpack.c.b16 %v340, %v336
      %v385 = vpack.c.b16 %v341, %v337
      %v386 = vpack.c.b16 %v342, %v338
      %v387 = vpack.c.b16 %v347, %v343
      %v388 = vpack.c.b16 %v348, %v344
      %v389 = vpack.c.b16 %v349, %v345
      %v390 = vpack.c.b16 %v350, %v346
      %v391 = vpack.c.b16 %v355, %v351
      %v392 = vpack.c.b16 %v356, %v352
      %v393 = vpack.c.b16 %v357, %v353
      %v394 = vpack.c.b16 %v358, %v354
      %v395 = vpack.c.b16 %v363, %v359
      %v396 = vpack.c.b16 %v364, %v360
      %v397 = vpack.c.b16 %v365, %v361
      %v398 = vpack.c.b16 %v366, %v362
      %431 = vmatpush.bf16.msra.mxu0 %v395
      %432 = vmatpush.bf16.msra.mxu0 %v391
      %433 = vmatpush.bf16.msra.mxu0 %v387
      %434 = vmatpush.bf16.msra.mxu0 %v383
      %435 = vmatpush.bf16.msra.mxu0 %v379
      %436 = vmatpush.bf16.msra.mxu0 %v375
      %437 = vmatpush.bf16.msra.mxu0 %v371
      %438 = vmatpush.bf16.msra.mxu0 %v367
      %439 = vmatmul.bf16.gmra.mxu0 %v238
      %v440 = vpop.f32.mrf.mxu0
      %v441 = vadd.f32 0.0, %v440
      %v442 = vpop.f32.mrf.mxu0
      %443 = vdwg.mxu0
      %444 = vmatpush.bf16.msra.mxu0 %v396
      %445 = vmatpush.bf16.msra.mxu0 %v392
      %446 = vmatpush.bf16.msra.mxu0 %v388
      %447 = vmatpush.bf16.msra.mxu0 %v384
      %448 = vmatpush.bf16.msra.mxu0 %v380
      %449 = vmatpush.bf16.msra.mxu0 %v376
      %450 = vmatpush.bf16.msra.mxu0 %v372
      %451 = vmatpush.bf16.msra.mxu0 %v368
      %452 = vmatmul.bf16.gmra.mxu0 %v238
      %v453 = vpop.f32.mrf.mxu0
      %v454 = vadd.f32 0.0, %v453
      %v455 = vpop.f32.mrf.mxu0
      %456 = vdwg.mxu0
      %457 = vmatpush.bf16.msra.mxu0 %v397
      %458 = vmatpush.bf16.msra.mxu0 %v393
      %459 = vmatpush.bf16.msra.mxu0 %v389
      %460 = vmatpush.bf16.msra.mxu0 %v385
      %461 = vmatpush.bf16.msra.mxu0 %v381
      %462 = vmatpush.bf16.msra.mxu0 %v377
      %463 = vmatpush.bf16.msra.mxu0 %v373
      %464 = vmatpush.bf16.msra.mxu0 %v369
      %465 = vmatmul.bf16.gmra.mxu0 %v238
      %v466 = vpop.f32.mrf.mxu0
      %v467 = vadd.f32 0.0, %v466
      %v468 = vpop.f32.mrf.mxu0
      %469 = vdwg.mxu0
      %470 = vmatpush.bf16.msra.mxu0 %v398
      %471 = vmatpush.bf16.msra.mxu0 %v394
      %472 = vmatpush.bf16.msra.mxu0 %v390
      %473 = vmatpush.bf16.msra.mxu0 %v386
      %474 = vmatpush.bf16.msra.mxu0 %v382
      %475 = vmatpush.bf16.msra.mxu0 %v378
      %476 = vmatpush.bf16.msra.mxu0 %v374
      %477 = vmatpush.bf16.msra.mxu0 %v370
      %478 = vmatmul.bf16.gmra.mxu0 %v238
      %v479 = vpop.f32.mrf.mxu0
      %v480 = vadd.f32 0.0, %v479
      %v481 = vpop.f32.mrf.mxu0
      %482 = vdwg.mxu0
      %v487 = vrot.slane %v454, 6
      %v488 = vrot.slane %v467, 4
      %v489 = vrot.slane %v480, 2
      %vm490 = vcmask 1041408
      %v491 = vsel %vm490, %v441, %v487
      %vm492 = vcmask 1045508
      %v493 = vsel %vm492, %v488, %v489
      %vm494 = vcmask 1043456
      %v495 = vsel %vm494, %v491, %v493
      %v497 = vadd.f32 %v237, %v495
      %v498 = vxor.u32 %v497, 2147483648
      %v499 = vmul.f32 %v498, 1.442695
      %v500 = vpow.pop %v499
      %v501 = vadd.f32 %v500, 1.0
      %v502 = vrcp.pop %v501
      %v503 = vmul.f32 %v501, %v502
      %v504 = vsub.f32 1.0, %v503
      %v505 = vmul.f32 %v502, %v504
      %v506 = vadd.f32 %v502, %v505
      %vm507 = vweird.f32 %v501
      %vm508 = vweird.f32 %v502
      %vm509 = vmor %vm507, %vm508
      %v510 = vsel %vm509, %v502, %v506
      %v511 = vand.u32 2147483647, %v501
      %vm512 = vcmp.eq.f32.partialorder %v511, 8.507059e+37
      %v513 = vand.u32 %v501, 2147483648
      %v514 = vor.u32 1.1754944e-38, %v513
      %v515 = vsel %vm512, %v514, %v510
      %v516 = vmul.f32 1.0, %v515
      %v518 = vrot.slane %v497, 6
      %v520 = vtanh.pop %v518
      %v522 = vrot.slane %v516, 2
      %v524 = vmul.f32 %v522, %v231
      %v525 = vmul.f32 %v516, %v520
      %v526 = vadd.f32 %v524, %v525
      %v527 = vtanh.pop %v526
      %v528 = vrot.slane %v516, 4
      %v530 = vmul.f32 %v528, %v527
      %v531 = vpack.c.bf16 %v530, %v530
      %s532 = scalar_lea.vmem %s4, %s225
      %533 = vst [vmem:[%s532] sm:$0x1] %v531
      %s534 = ssub.s32 7, %s225
      %s535 = smul.u32 %s534, 4
      %s536 = scalar_lea.vmem [#allocation7], %s535
      %v537 = vld [vmem:[%s536] sm:$0xf]
      %v538 = vunpack.c.l.bf16 %v537
      %v539 = vpack.c.bf16 %v232, %v232
      %v540 = vld [vmem:[#allocation10] sm:$0xff]
      %v541 = vld [vmem:[#allocation10 + $0x8] sm:$0xff]
      %v542 = vld [vmem:[#allocation10 + $0x10] sm:$0xff]
      %v543 = vld [vmem:[#allocation10 + $0x18] sm:$0xff]
      %v544 = vld [vmem:[#allocation10 + $0x20] sm:$0xff]
      %v545 = vld [vmem:[#allocation10 + $0x28] sm:$0xff]
      %v546 = vld [vmem:[#allocation10 + $0x30] sm:$0xff]
      %v547 = vld [vmem:[#allocation10 + $0x38] sm:$0xff]
      %v548 = vld [vmem:[#allocation10 + $0x40] sm:$0xff]
      %v549 = vld [vmem:[#allocation10 + $0x48] sm:$0xff]
      %v550 = vld [vmem:[#allocation10 + $0x50] sm:$0xff]
      %v551 = vld [vmem:[#allocation10 + $0x58] sm:$0xff]
      %v552 = vld [vmem:[#allocation10 + $0x60] sm:$0xff]
      %v553 = vld [vmem:[#allocation10 + $0x68] sm:$0xff]
      %v554 = vld [vmem:[#allocation10 + $0x70] sm:$0xff]
      %v555 = vld [vmem:[#allocation10 + $0x78] sm:$0xff]
      %v556 = vld [vmem:[#allocation10 + $0x80] sm:$0xff]
      %v557 = vld [vmem:[#allocation10 + $0x88] sm:$0xff]
      %v558 = vld [vmem:[#allocation10 + $0x90] sm:$0xff]
      %v559 = vld [vmem:[#allocation10 + $0x98] sm:$0xff]
      %v560 = vld [vmem:[#allocation10 + $0xa0] sm:$0xff]
      %v561 = vld [vmem:[#allocation10 + $0xa8] sm:$0xff]
      %v562 = vld [vmem:[#allocation10 + $0xb0] sm:$0xff]
      %v563 = vld [vmem:[#allocation10 + $0xb8] sm:$0xff]
      %v564 = vld [vmem:[#allocation10 + $0xc0] sm:$0xff]
      %v565 = vld [vmem:[#allocation10 + $0xc8] sm:$0xff]
      %v566 = vld [vmem:[#allocation10 + $0xd0] sm:$0xff]
      %v567 = vld [vmem:[#allocation10 + $0xd8] sm:$0xff]
      %v568 = vld [vmem:[#allocation10 + $0xe0] sm:$0xff]
      %v569 = vld [vmem:[#allocation10 + $0xe8] sm:$0xff]
      %v570 = vld [vmem:[#allocation10 + $0xf0] sm:$0xff]
      %v571 = vld [vmem:[#allocation10 + $0xf8] sm:$0xff]
      %v604 = vunpack.c.l.b16 %v540
      %v605 = vunpack.c.h.b16 %v540
      %v606 = vunpack.c.l.b16 %v541
      %v607 = vunpack.c.h.b16 %v541
      %v608 = vunpack.c.l.b16 %v542
      %v609 = vunpack.c.h.b16 %v542
      %v610 = vunpack.c.l.b16 %v543
      %v611 = vunpack.c.h.b16 %v543
      %v612 = vunpack.c.l.b16 %v544
      %v613 = vunpack.c.h.b16 %v544
      %v614 = vunpack.c.l.b16 %v545
      %v615 = vunpack.c.h.b16 %v545
      %v616 = vunpack.c.l.b16 %v546
      %v617 = vunpack.c.h.b16 %v546
      %v618 = vunpack.c.l.b16 %v547
      %v619 = vunpack.c.h.b16 %v547
      %v620 = vunpack.c.l.b16 %v548
      %v621 = vunpack.c.h.b16 %v548
      %v622 = vunpack.c.l.b16 %v549
      %v623 = vunpack.c.h.b16 %v549
      %v624 = vunpack.c.l.b16 %v550
      %v625 = vunpack.c.h.b16 %v550
      %v626 = vunpack.c.l.b16 %v551
      %v627 = vunpack.c.h.b16 %v551
      %v628 = vunpack.c.l.b16 %v552
      %v629 = vunpack.c.h.b16 %v552
      %v630 = vunpack.c.l.b16 %v553
      %v631 = vunpack.c.h.b16 %v553
      %v632 = vunpack.c.l.b16 %v554
      %v633 = vunpack.c.h.b16 %v554
      %v634 = vunpack.c.l.b16 %v555
      %v635 = vunpack.c.h.b16 %v555
      %v636 = vunpack.c.l.b16 %v556
      %v637 = vunpack.c.h.b16 %v556
      %v638 = vunpack.c.l.b16 %v557
      %v639 = vunpack.c.h.b16 %v557
      %v640 = vunpack.c.l.b16 %v558
      %v641 = vunpack.c.h.b16 %v558
      %v642 = vunpack.c.l.b16 %v559
      %v643 = vunpack.c.h.b16 %v559
      %v644 = vunpack.c.l.b16 %v560
      %v645 = vunpack.c.h.b16 %v560
      %v646 = vunpack.c.l.b16 %v561
      %v647 = vunpack.c.h.b16 %v561
      %v648 = vunpack.c.l.b16 %v562
      %v649 = vunpack.c.h.b16 %v562
      %v650 = vunpack.c.l.b16 %v563
      %v651 = vunpack.c.h.b16 %v563
      %v652 = vunpack.c.l.b16 %v564
      %v653 = vunpack.c.h.b16 %v564
      %v654 = vunpack.c.l.b16 %v565
      %v655 = vunpack.c.h.b16 %v565
      %v656 = vunpack.c.l.b16 %v566
      %v657 = vunpack.c.h.b16 %v566
      %v658 = vunpack.c.l.b16 %v567
      %v659 = vunpack.c.h.b16 %v567
      %v660 = vunpack.c.l.b16 %v568
      %v661 = vunpack.c.h.b16 %v568
      %v662 = vunpack.c.l.b16 %v569
      %v663 = vunpack.c.h.b16 %v569
      %v664 = vunpack.c.l.b16 %v570
      %v665 = vunpack.c.h.b16 %v570
      %v666 = vunpack.c.l.b16 %v571
      %v667 = vunpack.c.h.b16 %v571
      %v668 = vpack.c.b16 %v608, %v604
      %v669 = vpack.c.b16 %v609, %v605
      %v670 = vpack.c.b16 %v610, %v606
      %v671 = vpack.c.b16 %v611, %v607
      %v672 = vpack.c.b16 %v616, %v612
      %v673 = vpack.c.b16 %v617, %v613
      %v674 = vpack.c.b16 %v618, %v614
      %v675 = vpack.c.b16 %v619, %v615
      %v676 = vpack.c.b16 %v624, %v620
      %v677 = vpack.c.b16 %v625, %v621
      %v678 = vpack.c.b16 %v626, %v622
      %v679 = vpack.c.b16 %v627, %v623
      %v680 = vpack.c.b16 %v632, %v628
      %v681 = vpack.c.b16 %v633, %v629
      %v682 = vpack.c.b16 %v634, %v630
      %v683 = vpack.c.b16 %v635, %v631
      %v684 = vpack.c.b16 %v640, %v636
      %v685 = vpack.c.b16 %v641, %v637
      %v686 = vpack.c.b16 %v642, %v638
      %v687 = vpack.c.b16 %v643, %v639
      %v688 = vpack.c.b16 %v648, %v644
      %v689 = vpack.c.b16 %v649, %v645
      %v690 = vpack.c.b16 %v650, %v646
      %v691 = vpack.c.b16 %v651, %v647
      %v692 = vpack.c.b16 %v656, %v652
      %v693 = vpack.c.b16 %v657, %v653
      %v694 = vpack.c.b16 %v658, %v654
      %v695 = vpack.c.b16 %v659, %v655
      %v696 = vpack.c.b16 %v664, %v660
      %v697 = vpack.c.b16 %v665, %v661
      %v698 = vpack.c.b16 %v666, %v662
      %v699 = vpack.c.b16 %v667, %v663
      %732 = vmatpush.bf16.msra.mxu0 %v696
      %733 = vmatpush.bf16.msra.mxu0 %v692
      %734 = vmatpush.bf16.msra.mxu0 %v688
      %735 = vmatpush.bf16.msra.mxu0 %v684
      %736 = vmatpush.bf16.msra.mxu0 %v680
      %737 = vmatpush.bf16.msra.mxu0 %v676
      %738 = vmatpush.bf16.msra.mxu0 %v672
      %739 = vmatpush.bf16.msra.mxu0 %v668
      %740 = vmatmul.bf16.gmra.mxu0 %v539
      %v741 = vpop.f32.mrf.mxu0
      %v742 = vadd.f32 0.0, %v741
      %v743 = vpop.f32.mrf.mxu0
      %744 = vdwg.mxu0
      %745 = vmatpush.bf16.msra.mxu0 %v697
      %746 = vmatpush.bf16.msra.mxu0 %v693
      %747 = vmatpush.bf16.msra.mxu0 %v689
      %748 = vmatpush.bf16.msra.mxu0 %v685
      %749 = vmatpush.bf16.msra.mxu0 %v681
      %750 = vmatpush.bf16.msra.mxu0 %v677
      %751 = vmatpush.bf16.msra.mxu0 %v673
      %752 = vmatpush.bf16.msra.mxu0 %v669
      %753 = vmatmul.bf16.gmra.mxu0 %v539
      %v754 = vpop.f32.mrf.mxu0
      %v755 = vadd.f32 0.0, %v754
      %v756 = vpop.f32.mrf.mxu0
      %757 = vdwg.mxu0
      %758 = vmatpush.bf16.msra.mxu0 %v698
      %759 = vmatpush.bf16.msra.mxu0 %v694
      %760 = vmatpush.bf16.msra.mxu0 %v690
      %761 = vmatpush.bf16.msra.mxu0 %v686
      %762 = vmatpush.bf16.msra.mxu0 %v682
      %763 = vmatpush.bf16.msra.mxu0 %v678
      %764 = vmatpush.bf16.msra.mxu0 %v674
      %765 = vmatpush.bf16.msra.mxu0 %v670
      %766 = vmatmul.bf16.gmra.mxu0 %v539
      %v767 = vpop.f32.mrf.mxu0
      %v768 = vadd.f32 0.0, %v767
      %v769 = vpop.f32.mrf.mxu0
      %770 = vdwg.mxu0
      %771 = vmatpush.bf16.msra.mxu0 %v699
      %772 = vmatpush.bf16.msra.mxu0 %v695
      %773 = vmatpush.bf16.msra.mxu0 %v691
      %774 = vmatpush.bf16.msra.mxu0 %v687
      %775 = vmatpush.bf16.msra.mxu0 %v683
      %776 = vmatpush.bf16.msra.mxu0 %v679
      %777 = vmatpush.bf16.msra.mxu0 %v675
      %778 = vmatpush.bf16.msra.mxu0 %v671
      %779 = vmatmul.bf16.gmra.mxu0 %v539
      %v780 = vpop.f32.mrf.mxu0
      %v781 = vadd.f32 0.0, %v780
      %v782 = vpop.f32.mrf.mxu0
      %783 = vdwg.mxu0
      %v788 = vrot.slane %v755, 6
      %v789 = vrot.slane %v768, 4
      %v790 = vrot.slane %v781, 2
      %v791 = vsel %vm490, %v742, %v788
      %v792 = vsel %vm492, %v789, %v790
      %v793 = vsel %vm494, %v791, %v792
      %v795 = vadd.f32 %v538, %v793
      %v796 = vxor.u32 %v795, 2147483648
      %v797 = vmul.f32 %v796, 1.442695
      %v798 = vpow.pop %v797
      %v799 = vadd.f32 %v798, 1.0
      %v800 = vrcp.pop %v799
      %v801 = vmul.f32 %v799, %v800
      %v802 = vsub.f32 1.0, %v801
      %v803 = vmul.f32 %v800, %v802
      %v804 = vadd.f32 %v800, %v803
      %vm805 = vweird.f32 %v799
      %vm806 = vweird.f32 %v800
      %vm807 = vmor %vm805, %vm806
      %v808 = vsel %vm807, %v800, %v804
      %v809 = vand.u32 2147483647, %v799
      %vm810 = vcmp.eq.f32.partialorder %v809, 8.507059e+37
      %v811 = vand.u32 %v799, 2147483648
      %v812 = vor.u32 1.1754944e-38, %v811
      %v813 = vsel %vm810, %v812, %v808
      %v814 = vmul.f32 1.0, %v813
      %v816 = vrot.slane %v795, 6
      %v818 = vtanh.pop %v816
      %v820 = vrot.slane %v814, 2
      %v822 = vmul.f32 %v820, %v233
      %v823 = vmul.f32 %v814, %v818
      %v824 = vadd.f32 %v822, %v823
      %v825 = vtanh.pop %v824
      %v826 = vrot.slane %v814, 4
      %v828 = vmul.f32 %v826, %v825
      %v829 = vpack.c.bf16 %v828, %v828
      %s830 = scalar_lea.vmem %s209, %s534
      %831 = vst [vmem:[%s830] sm:$0x1] %v829
    $region116: #{rnn_fc_forward.6} parent=1 // loop_footer
      %s229 = sadd.s32 1, %s225
    $region117: #{rnn_fc_forward.6} parent=1 // loop_footer_branch
      %224 = sbr.rel target = $region113
    $region118: #{rnn_fc_forward.6} parent=1 // loop_exit
      _
    %832 = vst [vmem:[#allocation2] sm:$0x3] %v230
    %833 = vst [vmem:[#allocation3] sm:$0x3] %v231
    %834 = vst [vmem:[#allocation4] sm:$0x3] %v232
    %835 = vst [vmem:[#allocation5] sm:$0x3] %v233
    %s836 = ssub.s32 0, 0
    %s837 = smul.u32 8, %s836
    %p838 = scmp.lt.s32.totalorder %s837, 7
    %s839 = scalar_select %p838, %s837, 7
    %s840 = scalar_lea.vmem %s5, %s839
    // Predicated region
    $region119: #{rnn_fc_forward.6} parent=1 // pred_check
      _
    $region120: #{rnn_fc_forward.6} parent=1 // pred_check_branch
      %842 = sbr.rel (0) target = $region122
    $region121: #{rnn_fc_forward.6} parent=1 // pred_region
      _
    $region122: #{rnn_fc_forward.6} parent=1 // pred_fallthru
      _
    // Predicated region
    $region123: #{rnn_fc_forward.6} parent=1 // pred_check
      _
    $region124: #{rnn_fc_forward.6} parent=1 // pred_check_branch
      %844 = sbr.rel (0) target = $region126
    $region125: #{rnn_fc_forward.6} parent=1 // pred_region
      %s845 = ssub.s32 0, 0
      %s846 = smul.u32 8, %s845
    $region126: #{rnn_fc_forward.6} parent=1 // pred_fallthru
      _
    // Predicated region
    $region127: #{rnn_fc_forward.6} parent=1 // pred_check
      _
    $region128: #{rnn_fc_forward.6} parent=1 // pred_check_branch
      %848 = sbr.rel (0) target = $region130
    $region129: #{rnn_fc_forward.6} parent=1 // pred_region
      _
    $region130: #{rnn_fc_forward.6} parent=1 // pred_fallthru
      _
    // Predicated region
    $region131: #{rnn_fc_forward.6} parent=1 // pred_check
      _
    $region132: #{rnn_fc_forward.6} parent=1 // pred_check_branch
      %850 = sbr.rel (0) target = $region134
    $region133: #{rnn_fc_forward.6} parent=1 // pred_region
      %s851 = ssub.s32 0, 0
      %s852 = smul.u32 8, %s851
      %p853 = scmp.lt.s32.totalorder %s852, 7
      %s854 = scalar_select %p853, %s852, 7
      %s855 = scalar_lea.vmem %s5, %s854
    $region134: #{rnn_fc_forward.6} parent=1 // pred_fallthru
      _
    %856 = vsyncpa [#allocation9], 1
    %857 = vsyncpa [#allocation11], 1

// kernel: rnn_fc_forward.8
$region0: #{rnn_fc_forward.8}
  #allocation0 [shape = 'u32[]', space=smem, size = 0x4, offset = 0x4, fixed_abs, tag = 'smem constant byte address 0x4 - core index']
  #allocation1 [shape = 'u32[72,128]{1,0:T(1,128)}', space=vmem, size = 0x9000, scoped, tag = 'internal scratch']
  #allocation2 [shape = 'f32[2,128]{1,0:T(2,128)}', space=vmem, size = 0x400, scoped, tag = 'scratch operand']
  #allocation3 [shape = 'f32[2,128]{1,0:T(2,128)}', space=vmem, size = 0x400, scoped, tag = 'scratch operand']
  #allocation4 [shape = 'f32[2,128]{1,0:T(2,128)}', space=vmem, size = 0x400, scoped, tag = 'scratch operand']
  #allocation5 [shape = 'f32[2,128]{1,0:T(2,128)}', space=vmem, size = 0x400, scoped, tag = 'scratch operand']
  %s0 = inlined_call_operand.vmem [shape: bf16[8,2,1024], index: 0, kind: input, shape index: {}, may-alias: {0,1}]
  %s1 = inlined_call_operand.vmem [shape: bf16[8,2,1024], index: 1, kind: input, shape index: {}, may-alias: {0,1}]
  %s2 = inlined_call_operand.vmem [shape: bf16[128,512], index: 2, kind: input, shape index: {}]
  %s3 = inlined_call_operand.hbm [shape: bf16[128,512], index: 3, kind: input, shape index: {}]
  %s4 = inlined_call_operand.vmem [shape: bf16[8,2,128], index: 4, kind: output, shape index: {0}]
  %s5 = inlined_call_operand.vmem [shape: bf16[8,2,128], index: 5, kind: output, shape index: {1}]
  %6 = xla_tuple %s4, %s5
  %s7 = sld [smem:[#allocation0]]
  $region131: #{rnn_fc_forward.8} parent=0
    _
  %s9 = ssub.s32 1, %s7
  %s10 = scalar_select 0, %s9, %s7
  $region1: #{rnn_fc_forward.8} parent=0
    #allocation6 [shape = 'u8[16384]{0}', space=vmem, size = 0x4000, scoped, tag = 'input window, operand 0, single buffered']
    #allocation7 [shape = 'u8[16384]{0}', space=vmem, size = 0x4000, scoped, tag = 'input window, operand 1, single buffered']
    #allocation8 [shape = 'u8[131072]{0}', space=vmem, size = 0x20000, scoped, tag = 'input window, operand 3, single buffered']
    #allocation9 [shape = 's32[1]{0}', space=sflag, size = 0x4, scoped, tag = 'scoped memory for rnn_fc_forward.8']
    %11 = vsyncpa [#allocation9], 0
    // Predicated region
    $region2: #{rnn_fc_forward.8} parent=1 // pred_check
      _
    $region3: #{rnn_fc_forward.8} parent=1 // pred_check_branch
      %13 = sbr.rel (0) target = $region5
    $region4: #{rnn_fc_forward.8} parent=1 // pred_region
      // Predicated region
      $region6: #{rnn_fc_forward.8} parent=4 // pred_check
        _
      $region7: #{rnn_fc_forward.8} parent=4 // pred_check_branch
        %15 = sbr.rel (0) target = $region9
      $region8: #{rnn_fc_forward.8} parent=4 // pred_region
        // Predicated region
        $region10: #{rnn_fc_forward.8} parent=8 // pred_check
          _
        $region11: #{rnn_fc_forward.8} parent=8 // pred_check_branch
          %17 = sbr.rel target = $region13
        $region12: #{rnn_fc_forward.8} parent=8 // pred_region
          // Predicated region
          $region25: #{rnn_fc_forward.8} parent=12 // pred_check
            _
          $region26: #{rnn_fc_forward.8} parent=12 // pred_check_branch
            %47 = sbr.rel (0) target = $region28
          $region27: #{rnn_fc_forward.8} parent=12 // pred_region
            loop: start=0, step=1, limit=1
            $region29: #{rnn_fc_forward.8} parent=27 // loop_pre_header
              _
            $region30: #{rnn_fc_forward.8} parent=27 // loop_header
              %s49 = sphi 0, %s53
              %p50 = scmp.ge.s32.totalorder %s49, 1
              %s54 = sphi %s0, %s0
              %s55 = sphi [#allocation6], [#allocation6]
            $region31: #{rnn_fc_forward.8} parent=27 // loop_header_branch
              %52 = sbr.rel (%p50) target = $region35
            $region32: #{rnn_fc_forward.8} parent=27 // loop_body
              _
            $region33: #{rnn_fc_forward.8} parent=27 // loop_footer
              %s53 = sadd.s32 1, %s49
            $region34: #{rnn_fc_forward.8} parent=27 // loop_footer_branch
              %48 = sbr.rel target = $region30
            $region35: #{rnn_fc_forward.8} parent=27 // loop_exit
              _
            %s57 = ssub.s32 16, 1
            loop: start=0, step=1, limit=1
            $region36: #{rnn_fc_forward.8} parent=27 // loop_pre_header
              _
            $region37: #{rnn_fc_forward.8} parent=27 // loop_header
              %s59 = sphi 0, %s63
              %p60 = scmp.ge.s32.totalorder %s59, 1
              %s64 = sphi %s0, %s0
              %s65 = sphi [#allocation6], [#allocation6]
            $region38: #{rnn_fc_forward.8} parent=27 // loop_header_branch
              %62 = sbr.rel (%p60) target = $region42
            $region39: #{rnn_fc_forward.8} parent=27 // loop_body
              %v66 = vld [vmem:[%s64] sm:%s57]
              %67 = vst [vmem:[%s65] sm:%s57] %v66
              %v68 = vld [vmem:[%s64 + $0x8] sm:%s57]
              %69 = vst [vmem:[%s65 + $0x4] sm:%s57] %v68
              %v70 = vld [vmem:[%s64 + $0x10] sm:%s57]
              %71 = vst [vmem:[%s65 + $0x8] sm:%s57] %v70
              %v72 = vld [vmem:[%s64 + $0x18] sm:%s57]
              %73 = vst [vmem:[%s65 + $0xc] sm:%s57] %v72
              %v74 = vld [vmem:[%s64 + $0x20] sm:%s57]
              %75 = vst [vmem:[%s65 + $0x10] sm:%s57] %v74
              %v76 = vld [vmem:[%s64 + $0x28] sm:%s57]
              %77 = vst [vmem:[%s65 + $0x14] sm:%s57] %v76
              %v78 = vld [vmem:[%s64 + $0x30] sm:%s57]
              %79 = vst [vmem:[%s65 + $0x18] sm:%s57] %v78
              %v80 = vld [vmem:[%s64 + $0x38] sm:%s57]
              %81 = vst [vmem:[%s65 + $0x1c] sm:%s57] %v80
            $region40: #{rnn_fc_forward.8} parent=27 // loop_footer
              %s63 = sadd.s32 1, %s59
            $region41: #{rnn_fc_forward.8} parent=27 // loop_footer_branch
              %58 = sbr.rel target = $region37
            $region42: #{rnn_fc_forward.8} parent=27 // loop_exit
              _
          $region28: #{rnn_fc_forward.8} parent=12 // pred_fallthru
            _
        $region13: #{rnn_fc_forward.8} parent=8 // pred_fallthru
          _
        // Predicated region
        $region14: #{rnn_fc_forward.8} parent=8 // pred_check
          _
        $region15: #{rnn_fc_forward.8} parent=8 // pred_check_branch
          %19 = sbr.rel (0) target = $region17
        $region16: #{rnn_fc_forward.8} parent=8 // pred_region
          %s21 = ssub.s32 16, 1
          loop: start=0, step=1, limit=1
          $region18: #{rnn_fc_forward.8} parent=16 // loop_pre_header
            _
          $region19: #{rnn_fc_forward.8} parent=16 // loop_header
            %s23 = sphi 0, %s27
            %p24 = scmp.ge.s32.totalorder %s23, 1
            %s28 = sphi %s0, %s0
            %s29 = sphi [#allocation6], [#allocation6]
          $region20: #{rnn_fc_forward.8} parent=16 // loop_header_branch
            %26 = sbr.rel (%p24) target = $region24
          $region21: #{rnn_fc_forward.8} parent=16 // loop_body
            %v30 = vld [vmem:[%s28] sm:%s21]
            %31 = vst [vmem:[%s29] sm:%s21] %v30
            %v32 = vld [vmem:[%s28 + $0x8] sm:%s21]
            %33 = vst [vmem:[%s29 + $0x4] sm:%s21] %v32
            %v34 = vld [vmem:[%s28 + $0x10] sm:%s21]
            %35 = vst [vmem:[%s29 + $0x8] sm:%s21] %v34
            %v36 = vld [vmem:[%s28 + $0x18] sm:%s21]
            %37 = vst [vmem:[%s29 + $0xc] sm:%s21] %v36
            %v38 = vld [vmem:[%s28 + $0x20] sm:%s21]
            %39 = vst [vmem:[%s29 + $0x10] sm:%s21] %v38
            %v40 = vld [vmem:[%s28 + $0x28] sm:%s21]
            %41 = vst [vmem:[%s29 + $0x14] sm:%s21] %v40
            %v42 = vld [vmem:[%s28 + $0x30] sm:%s21]
            %43 = vst [vmem:[%s29 + $0x18] sm:%s21] %v42
            %v44 = vld [vmem:[%s28 + $0x38] sm:%s21]
            %45 = vst [vmem:[%s29 + $0x1c] sm:%s21] %v44
          $region22: #{rnn_fc_forward.8} parent=16 // loop_footer
            %s27 = sadd.s32 1, %s23
          $region23: #{rnn_fc_forward.8} parent=16 // loop_footer_branch
            %22 = sbr.rel target = $region19
          $region24: #{rnn_fc_forward.8} parent=16 // loop_exit
            _
        $region17: #{rnn_fc_forward.8} parent=8 // pred_fallthru
          _
      $region9: #{rnn_fc_forward.8} parent=4 // pred_fallthru
        _
      %82 = vnop
    $region5: #{rnn_fc_forward.8} parent=1 // pred_fallthru
      _
    // Predicated region
    $region43: #{rnn_fc_forward.8} parent=1 // pred_check
      _
    $region44: #{rnn_fc_forward.8} parent=1 // pred_check_branch
      %84 = sbr.rel (0) target = $region46
    $region45: #{rnn_fc_forward.8} parent=1 // pred_region
      %s85 = ssub.s32 0, 0
      %s86 = smul.u32 8, %s85
      %s87 = smul.addr %s86, 8
      %s88 = sadd.s32 4, %s87
      %s89 = scalar_lea.vmem %s1, %s88
      // Predicated region
      $region47: #{rnn_fc_forward.8} parent=45 // pred_check
        _
      $region48: #{rnn_fc_forward.8} parent=45 // pred_check_branch
        %91 = sbr.rel (0) target = $region50
      $region49: #{rnn_fc_forward.8} parent=45 // pred_region
        // Predicated region
        $region51: #{rnn_fc_forward.8} parent=49 // pred_check
          _
        $region52: #{rnn_fc_forward.8} parent=49 // pred_check_branch
          %93 = sbr.rel target = $region54
        $region53: #{rnn_fc_forward.8} parent=49 // pred_region
          // Predicated region
          $region66: #{rnn_fc_forward.8} parent=53 // pred_check
            _
          $region67: #{rnn_fc_forward.8} parent=53 // pred_check_branch
            %123 = sbr.rel (0) target = $region69
          $region68: #{rnn_fc_forward.8} parent=53 // pred_region
            loop: start=0, step=1, limit=1
            $region70: #{rnn_fc_forward.8} parent=68 // loop_pre_header
              _
            $region71: #{rnn_fc_forward.8} parent=68 // loop_header
              %s125 = sphi 0, %s129
              %p126 = scmp.ge.s32.totalorder %s125, 1
              %s130 = sphi %s89, %s89
              %s131 = sphi [#allocation7], [#allocation7]
            $region72: #{rnn_fc_forward.8} parent=68 // loop_header_branch
              %128 = sbr.rel (%p126) target = $region76
            $region73: #{rnn_fc_forward.8} parent=68 // loop_body
              _
            $region74: #{rnn_fc_forward.8} parent=68 // loop_footer
              %s129 = sadd.s32 1, %s125
            $region75: #{rnn_fc_forward.8} parent=68 // loop_footer_branch
              %124 = sbr.rel target = $region71
            $region76: #{rnn_fc_forward.8} parent=68 // loop_exit
              _
            %s133 = ssub.s32 16, 1
            loop: start=0, step=1, limit=1
            $region77: #{rnn_fc_forward.8} parent=68 // loop_pre_header
              _
            $region78: #{rnn_fc_forward.8} parent=68 // loop_header
              %s135 = sphi 0, %s139
              %p136 = scmp.ge.s32.totalorder %s135, 1
              %s140 = sphi %s89, %s89
              %s141 = sphi [#allocation7], [#allocation7]
            $region79: #{rnn_fc_forward.8} parent=68 // loop_header_branch
              %138 = sbr.rel (%p136) target = $region83
            $region80: #{rnn_fc_forward.8} parent=68 // loop_body
              %v142 = vld [vmem:[%s140] sm:%s133]
              %143 = vst [vmem:[%s141] sm:%s133] %v142
              %v144 = vld [vmem:[%s140 + $0x8] sm:%s133]
              %145 = vst [vmem:[%s141 + $0x4] sm:%s133] %v144
              %v146 = vld [vmem:[%s140 + $0x10] sm:%s133]
              %147 = vst [vmem:[%s141 + $0x8] sm:%s133] %v146
              %v148 = vld [vmem:[%s140 + $0x18] sm:%s133]
              %149 = vst [vmem:[%s141 + $0xc] sm:%s133] %v148
              %v150 = vld [vmem:[%s140 + $0x20] sm:%s133]
              %151 = vst [vmem:[%s141 + $0x10] sm:%s133] %v150
              %v152 = vld [vmem:[%s140 + $0x28] sm:%s133]
              %153 = vst [vmem:[%s141 + $0x14] sm:%s133] %v152
              %v154 = vld [vmem:[%s140 + $0x30] sm:%s133]
              %155 = vst [vmem:[%s141 + $0x18] sm:%s133] %v154
              %v156 = vld [vmem:[%s140 + $0x38] sm:%s133]
              %157 = vst [vmem:[%s141 + $0x1c] sm:%s133] %v156
            $region81: #{rnn_fc_forward.8} parent=68 // loop_footer
              %s139 = sadd.s32 1, %s135
            $region82: #{rnn_fc_forward.8} parent=68 // loop_footer_branch
              %134 = sbr.rel target = $region78
            $region83: #{rnn_fc_forward.8} parent=68 // loop_exit
              _
          $region69: #{rnn_fc_forward.8} parent=53 // pred_fallthru
            _
        $region54: #{rnn_fc_forward.8} parent=49 // pred_fallthru
          _
        // Predicated region
        $region55: #{rnn_fc_forward.8} parent=49 // pred_check
          _
        $region56: #{rnn_fc_forward.8} parent=49 // pred_check_branch
          %95 = sbr.rel (0) target = $region58
        $region57: #{rnn_fc_forward.8} parent=49 // pred_region
          %s97 = ssub.s32 16, 1
          loop: start=0, step=1, limit=1
          $region59: #{rnn_fc_forward.8} parent=57 // loop_pre_header
            _
          $region60: #{rnn_fc_forward.8} parent=57 // loop_header
            %s99 = sphi 0, %s103
            %p100 = scmp.ge.s32.totalorder %s99, 1
            %s104 = sphi %s89, %s89
            %s105 = sphi [#allocation7], [#allocation7]
          $region61: #{rnn_fc_forward.8} parent=57 // loop_header_branch
            %102 = sbr.rel (%p100) target = $region65
          $region62: #{rnn_fc_forward.8} parent=57 // loop_body
            %v106 = vld [vmem:[%s104] sm:%s97]
            %107 = vst [vmem:[%s105] sm:%s97] %v106
            %v108 = vld [vmem:[%s104 + $0x8] sm:%s97]
            %109 = vst [vmem:[%s105 + $0x4] sm:%s97] %v108
            %v110 = vld [vmem:[%s104 + $0x10] sm:%s97]
            %111 = vst [vmem:[%s105 + $0x8] sm:%s97] %v110
            %v112 = vld [vmem:[%s104 + $0x18] sm:%s97]
            %113 = vst [vmem:[%s105 + $0xc] sm:%s97] %v112
            %v114 = vld [vmem:[%s104 + $0x20] sm:%s97]
            %115 = vst [vmem:[%s105 + $0x10] sm:%s97] %v114
            %v116 = vld [vmem:[%s104 + $0x28] sm:%s97]
            %117 = vst [vmem:[%s105 + $0x14] sm:%s97] %v116
            %v118 = vld [vmem:[%s104 + $0x30] sm:%s97]
            %119 = vst [vmem:[%s105 + $0x18] sm:%s97] %v118
            %v120 = vld [vmem:[%s104 + $0x38] sm:%s97]
            %121 = vst [vmem:[%s105 + $0x1c] sm:%s97] %v120
          $region63: #{rnn_fc_forward.8} parent=57 // loop_footer
            %s103 = sadd.s32 1, %s99
          $region64: #{rnn_fc_forward.8} parent=57 // loop_footer_branch
            %98 = sbr.rel target = $region60
          $region65: #{rnn_fc_forward.8} parent=57 // loop_exit
            _
        $region58: #{rnn_fc_forward.8} parent=49 // pred_fallthru
          _
      $region50: #{rnn_fc_forward.8} parent=45 // pred_fallthru
        _
      %158 = vnop
    $region46: #{rnn_fc_forward.8} parent=1 // pred_fallthru
      _
    // Predicated region
    $region84: #{rnn_fc_forward.8} parent=1 // pred_check
      _
    $region85: #{rnn_fc_forward.8} parent=1 // pred_check_branch
      %160 = sbr.rel (0) target = $region87
    $region86: #{rnn_fc_forward.8} parent=1 // pred_region
      _
    $region87: #{rnn_fc_forward.8} parent=1 // pred_fallthru
      _
    // Predicated region
    $region88: #{rnn_fc_forward.8} parent=1 // pred_check
      _
    $region89: #{rnn_fc_forward.8} parent=1 // pred_check_branch
      %162 = sbr.rel (0) target = $region91
    $region90: #{rnn_fc_forward.8} parent=1 // pred_region
      %164 = vsyncadd [#allocation9], 0
      %s165 = sshll.u32 %s3, 4
      %s166 = int_to_ptr.hbm [resolvable:$true] %s165
      %s167 = sshll.u32 [#allocation8], 4
      %s168 = int_to_ptr.vmem [resolvable:$true] %s167
      %173 = dma.hbm_to_vmem [thread:$0]  %s166, 4096, %s168, [#allocation9], 256, 256, 16
    $region91: #{rnn_fc_forward.8} parent=1 // pred_fallthru
      _
    // Predicated region
    $region92: #{rnn_fc_forward.8} parent=1 // pred_check
      _
    $region93: #{rnn_fc_forward.8} parent=1 // pred_check_branch
      %175 = sbr.rel (0) target = $region95
    $region94: #{rnn_fc_forward.8} parent=1 // pred_region
      _
    $region95: #{rnn_fc_forward.8} parent=1 // pred_fallthru
      _
    // Predicated region
    $region96: #{rnn_fc_forward.8} parent=1 // pred_check
      _
    $region97: #{rnn_fc_forward.8} parent=1 // pred_check_branch
      %177 = sbr.rel (0) target = $region99
    $region98: #{rnn_fc_forward.8} parent=1 // pred_region
      _
    $region99: #{rnn_fc_forward.8} parent=1 // pred_fallthru
      _
    // Predicated region
    $region100: #{rnn_fc_forward.8} parent=1 // pred_check
      _
    $region101: #{rnn_fc_forward.8} parent=1 // pred_check_branch
      %179 = sbr.rel (0) target = $region103
    $region102: #{rnn_fc_forward.8} parent=1 // pred_region
      %181 = dma.done [#allocation9], 4096
    $region103: #{rnn_fc_forward.8} parent=1 // pred_fallthru
      _
    %s182 = ssub.s32 0, 0
    %s183 = smul.u32 8, %s182
    %p184 = scmp.lt.s32.totalorder %s183, 7
    %s185 = scalar_select %p184, %s183, 7
    %s186 = scalar_lea.vmem %s5, %s185
    %s187 = ssub.s32 0, 0
    %s188 = smul.u32 8, %s187
    %s189 = ssub.s32 0, 0
    %s190 = smul.u32 8, %s189
    %p191 = scmp.lt.s32.totalorder %s190, 7
    %s192 = scalar_select %p191, %s190, 7
    %s193 = scalar_lea.vmem %s5, %s192
    %s194 = ssub.s32 0, 0
    %s195 = smul.u32 8, %s194
    %p196 = scmp.eq.s32.totalorder 0, 0
    // Predicated region
    $region104: #{rnn_fc_forward.8} parent=1 // pred_check
      %p197 = pneg %p196
    $region105: #{rnn_fc_forward.8} parent=1 // pred_check_branch
      %199 = sbr.rel (%p197) target = $region107
    $region106: #{rnn_fc_forward.8} parent=1 // pred_region
      %200 = vst [vmem:[#allocation2] sm:$0x3] 0.0
      %201 = vst [vmem:[#allocation3] sm:$0x3] 0.0
      %202 = vst [vmem:[#allocation4] sm:$0x3] 0.0
      %203 = vst [vmem:[#allocation5] sm:$0x3] 0.0
    $region107: #{rnn_fc_forward.8} parent=1 // pred_fallthru
      _
    %v204 = vld [vmem:[#allocation2] sm:$0x3]
    %v205 = vld [vmem:[#allocation3] sm:$0x3]
    %v206 = vld [vmem:[#allocation4] sm:$0x3]
    %v207 = vld [vmem:[#allocation5] sm:$0x3]
    loop: start=0, step=1, limit=8
    $region108: #{rnn_fc_forward.8} parent=1 // loop_pre_header
      _
    $region109: #{rnn_fc_forward.8} parent=1 // loop_header
      %s209 = sphi 0, %s213
      %p210 = scmp.ge.s32.totalorder %s209, 8
      %v214 = vphi %v204, %v514
      %v215 = vphi %v205, %v510
      %v216 = vphi %v206, %v812
      %v217 = vphi %v207, %v808
    $region110: #{rnn_fc_forward.8} parent=1 // loop_header_branch
      %212 = sbr.rel (%p210) target = $region114
    $region111: #{rnn_fc_forward.8} parent=1 // loop_body
      %s218 = smul.u32 %s209, 4
      %s219 = scalar_lea.vmem [#allocation6], %s218
      %v220 = vld [vmem:[%s219] sm:$0xf]
      %v221 = vunpack.c.l.bf16 %v220
      %v222 = vpack.c.bf16 %v214, %v214
      %v223 = vld [vmem:[%s2] sm:$0xff]
      %v224 = vld [vmem:[%s2 + $0x8] sm:$0xff]
      %v225 = vld [vmem:[%s2 + $0x10] sm:$0xff]
      %v226 = vld [vmem:[%s2 + $0x18] sm:$0xff]
      %v227 = vld [vmem:[%s2 + $0x20] sm:$0xff]
      %v228 = vld [vmem:[%s2 + $0x28] sm:$0xff]
      %v229 = vld [vmem:[%s2 + $0x30] sm:$0xff]
      %v230 = vld [vmem:[%s2 + $0x38] sm:$0xff]
      %v231 = vld [vmem:[%s2 + $0x40] sm:$0xff]
      %v232 = vld [vmem:[%s2 + $0x48] sm:$0xff]
      %v233 = vld [vmem:[%s2 + $0x50] sm:$0xff]
      %v234 = vld [vmem:[%s2 + $0x58] sm:$0xff]
      %v235 = vld [vmem:[%s2 + $0x60] sm:$0xff]
      %v236 = vld [vmem:[%s2 + $0x68] sm:$0xff]
      %v237 = vld [vmem:[%s2 + $0x70] sm:$0xff]
      %v238 = vld [vmem:[%s2 + $0x78] sm:$0xff]
      %v239 = vld [vmem:[%s2 + $0x80] sm:$0xff]
      %v240 = vld [vmem:[%s2 + $0x88] sm:$0xff]
      %v241 = vld [vmem:[%s2 + $0x90] sm:$0xff]
      %v242 = vld [vmem:[%s2 + $0x98] sm:$0xff]
      %v243 = vld [vmem:[%s2 + $0xa0] sm:$0xff]
      %v244 = vld [vmem:[%s2 + $0xa8] sm:$0xff]
      %v245 = vld [vmem:[%s2 + $0xb0] sm:$0xff]
      %v246 = vld [vmem:[%s2 + $0xb8] sm:$0xff]
      %v247 = vld [vmem:[%s2 + $0xc0] sm:$0xff]
      %v248 = vld [vmem:[%s2 + $0xc8] sm:$0xff]
      %v249 = vld [vmem:[%s2 + $0xd0] sm:$0xff]
      %v250 = vld [vmem:[%s2 + $0xd8] sm:$0xff]
      %v251 = vld [vmem:[%s2 + $0xe0] sm:$0xff]
      %v252 = vld [vmem:[%s2 + $0xe8] sm:$0xff]
      %v253 = vld [vmem:[%s2 + $0xf0] sm:$0xff]
      %v254 = vld [vmem:[%s2 + $0xf8] sm:$0xff]
      %v287 = vunpack.c.l.b16 %v223
      %v288 = vunpack.c.h.b16 %v223
      %v289 = vunpack.c.l.b16 %v224
      %v290 = vunpack.c.h.b16 %v224
      %v291 = vunpack.c.l.b16 %v225
      %v292 = vunpack.c.h.b16 %v225
      %v293 = vunpack.c.l.b16 %v226
      %v294 = vunpack.c.h.b16 %v226
      %v295 = vunpack.c.l.b16 %v227
      %v296 = vunpack.c.h.b16 %v227
      %v297 = vunpack.c.l.b16 %v228
      %v298 = vunpack.c.h.b16 %v228
      %v299 = vunpack.c.l.b16 %v229
      %v300 = vunpack.c.h.b16 %v229
      %v301 = vunpack.c.l.b16 %v230
      %v302 = vunpack.c.h.b16 %v230
      %v303 = vunpack.c.l.b16 %v231
      %v304 = vunpack.c.h.b16 %v231
      %v305 = vunpack.c.l.b16 %v232
      %v306 = vunpack.c.h.b16 %v232
      %v307 = vunpack.c.l.b16 %v233
      %v308 = vunpack.c.h.b16 %v233
      %v309 = vunpack.c.l.b16 %v234
      %v310 = vunpack.c.h.b16 %v234
      %v311 = vunpack.c.l.b16 %v235
      %v312 = vunpack.c.h.b16 %v235
      %v313 = vunpack.c.l.b16 %v236
      %v314 = vunpack.c.h.b16 %v236
      %v315 = vunpack.c.l.b16 %v237
      %v316 = vunpack.c.h.b16 %v237
      %v317 = vunpack.c.l.b16 %v238
      %v318 = vunpack.c.h.b16 %v238
      %v319 = vunpack.c.l.b16 %v239
      %v320 = vunpack.c.h.b16 %v239
      %v321 = vunpack.c.l.b16 %v240
      %v322 = vunpack.c.h.b16 %v240
      %v323 = vunpack.c.l.b16 %v241
      %v324 = vunpack.c.h.b16 %v241
      %v325 = vunpack.c.l.b16 %v242
      %v326 = vunpack.c.h.b16 %v242
      %v327 = vunpack.c.l.b16 %v243
      %v328 = vunpack.c.h.b16 %v243
      %v329 = vunpack.c.l.b16 %v244
      %v330 = vunpack.c.h.b16 %v244
      %v331 = vunpack.c.l.b16 %v245
      %v332 = vunpack.c.h.b16 %v245
      %v333 = vunpack.c.l.b16 %v246
      %v334 = vunpack.c.h.b16 %v246
      %v335 = vunpack.c.l.b16 %v247
      %v336 = vunpack.c.h.b16 %v247
      %v337 = vunpack.c.l.b16 %v248
      %v338 = vunpack.c.h.b16 %v248
      %v339 = vunpack.c.l.b16 %v249
      %v340 = vunpack.c.h.b16 %v249
      %v341 = vunpack.c.l.b16 %v250
      %v342 = vunpack.c.h.b16 %v250
      %v343 = vunpack.c.l.b16 %v251
      %v344 = vunpack.c.h.b16 %v251
      %v345 = vunpack.c.l.b16 %v252
      %v346 = vunpack.c.h.b16 %v252
      %v347 = vunpack.c.l.b16 %v253
      %v348 = vunpack.c.h.b16 %v253
      %v349 = vunpack.c.l.b16 %v254
      %v350 = vunpack.c.h.b16 %v254
      %v351 = vpack.c.b16 %v291, %v287
      %v352 = vpack.c.b16 %v292, %v288
      %v353 = vpack.c.b16 %v293, %v289
      %v354 = vpack.c.b16 %v294, %v290
      %v355 = vpack.c.b16 %v299, %v295
      %v356 = vpack.c.b16 %v300, %v296
      %v357 = vpack.c.b16 %v301, %v297
      %v358 = vpack.c.b16 %v302, %v298
      %v359 = vpack.c.b16 %v307, %v303
      %v360 = vpack.c.b16 %v308, %v304
      %v361 = vpack.c.b16 %v309, %v305
      %v362 = vpack.c.b16 %v310, %v306
      %v363 = vpack.c.b16 %v315, %v311
      %v364 = vpack.c.b16 %v316, %v312
      %v365 = vpack.c.b16 %v317, %v313
      %v366 = vpack.c.b16 %v318, %v314
      %v367 = vpack.c.b16 %v323, %v319
      %v368 = vpack.c.b16 %v324, %v320
      %v369 = vpack.c.b16 %v325, %v321
      %v370 = vpack.c.b16 %v326, %v322
      %v371 = vpack.c.b16 %v331, %v327
      %v372 = vpack.c.b16 %v332, %v328
      %v373 = vpack.c.b16 %v333, %v329
      %v374 = vpack.c.b16 %v334, %v330
      %v375 = vpack.c.b16 %v339, %v335
      %v376 = vpack.c.b16 %v340, %v336
      %v377 = vpack.c.b16 %v341, %v337
      %v378 = vpack.c.b16 %v342, %v338
      %v379 = vpack.c.b16 %v347, %v343
      %v380 = vpack.c.b16 %v348, %v344
      %v381 = vpack.c.b16 %v349, %v345
      %v382 = vpack.c.b16 %v350, %v346
      %415 = vmatpush.bf16.msra.mxu0 %v379
      %416 = vmatpush.bf16.msra.mxu0 %v375
      %417 = vmatpush.bf16.msra.mxu0 %v371
      %418 = vmatpush.bf16.msra.mxu0 %v367
      %419 = vmatpush.bf16.msra.mxu0 %v363
      %420 = vmatpush.bf16.msra.mxu0 %v359
      %421 = vmatpush.bf16.msra.mxu0 %v355
      %422 = vmatpush.bf16.msra.mxu0 %v351
      %423 = vmatmul.bf16.gmra.mxu0 %v222
      %v424 = vpop.f32.mrf.mxu0
      %v425 = vadd.f32 0.0, %v424
      %v426 = vpop.f32.mrf.mxu0
      %427 = vdwg.mxu0
      %428 = vmatpush.bf16.msra.mxu0 %v380
      %429 = vmatpush.bf16.msra.mxu0 %v376
      %430 = vmatpush.bf16.msra.mxu0 %v372
      %431 = vmatpush.bf16.msra.mxu0 %v368
      %432 = vmatpush.bf16.msra.mxu0 %v364
      %433 = vmatpush.bf16.msra.mxu0 %v360
      %434 = vmatpush.bf16.msra.mxu0 %v356
      %435 = vmatpush.bf16.msra.mxu0 %v352
      %436 = vmatmul.bf16.gmra.mxu0 %v222
      %v437 = vpop.f32.mrf.mxu0
      %v438 = vadd.f32 0.0, %v437
      %v439 = vpop.f32.mrf.mxu0
      %440 = vdwg.mxu0
      %441 = vmatpush.bf16.msra.mxu0 %v381
      %442 = vmatpush.bf16.msra.mxu0 %v377
      %443 = vmatpush.bf16.msra.mxu0 %v373
      %444 = vmatpush.bf16.msra.mxu0 %v369
      %445 = vmatpush.bf16.msra.mxu0 %v365
      %446 = vmatpush.bf16.msra.mxu0 %v361
      %447 = vmatpush.bf16.msra.mxu0 %v357
      %448 = vmatpush.bf16.msra.mxu0 %v353
      %449 = vmatmul.bf16.gmra.mxu0 %v222
      %v450 = vpop.f32.mrf.mxu0
      %v451 = vadd.f32 0.0, %v450
      %v452 = vpop.f32.mrf.mxu0
      %453 = vdwg.mxu0
      %454 = vmatpush.bf16.msra.mxu0 %v382
      %455 = vmatpush.bf16.msra.mxu0 %v378
      %456 = vmatpush.bf16.msra.mxu0 %v374
      %457 = vmatpush.bf16.msra.mxu0 %v370
      %458 = vmatpush.bf16.msra.mxu0 %v366
      %459 = vmatpush.bf16.msra.mxu0 %v362
      %460 = vmatpush.bf16.msra.mxu0 %v358
      %461 = vmatpush.bf16.msra.mxu0 %v354
      %462 = vmatmul.bf16.gmra.mxu0 %v222
      %v463 = vpop.f32.mrf.mxu0
      %v464 = vadd.f32 0.0, %v463
      %v465 = vpop.f32.mrf.mxu0
      %466 = vdwg.mxu0
      %v471 = vrot.slane %v438, 6
      %v472 = vrot.slane %v451, 4
      %v473 = vrot.slane %v464, 2
      %vm474 = vcmask 1041408
      %v475 = vsel %vm474, %v425, %v471
      %vm476 = vcmask 1045508
      %v477 = vsel %vm476, %v472, %v473
      %vm478 = vcmask 1043456
      %v479 = vsel %vm478, %v475, %v477
      %v481 = vadd.f32 %v221, %v479
      %v482 = vxor.u32 %v481, 2147483648
      %v483 = vmul.f32 %v482, 1.442695
      %v484 = vpow.pop %v483
      %v485 = vadd.f32 %v484, 1.0
      %v486 = vrcp.pop %v485
      %v487 = vmul.f32 %v485, %v486
      %v488 = vsub.f32 1.0, %v487
      %v489 = vmul.f32 %v486, %v488
      %v490 = vadd.f32 %v486, %v489
      %vm491 = vweird.f32 %v485
      %vm492 = vweird.f32 %v486
      %vm493 = vmor %vm491, %vm492
      %v494 = vsel %vm493, %v486, %v490
      %v495 = vand.u32 2147483647, %v485
      %vm496 = vcmp.eq.f32.partialorder %v495, 8.507059e+37
      %v497 = vand.u32 %v485, 2147483648
      %v498 = vor.u32 1.1754944e-38, %v497
      %v499 = vsel %vm496, %v498, %v494
      %v500 = vmul.f32 1.0, %v499
      %v502 = vrot.slane %v481, 6
      %v504 = vtanh.pop %v502
      %v506 = vrot.slane %v500, 2
      %v508 = vmul.f32 %v506, %v215
      %v509 = vmul.f32 %v500, %v504
      %v510 = vadd.f32 %v508, %v509
      %v511 = vtanh.pop %v510
      %v512 = vrot.slane %v500, 4
      %v514 = vmul.f32 %v512, %v511
      %v515 = vpack.c.bf16 %v514, %v514
      %s516 = scalar_lea.vmem %s4, %s209
      %517 = vst [vmem:[%s516] sm:$0x1] %v515
      %s518 = ssub.s32 7, %s209
      %s519 = smul.u32 %s518, 4
      %s520 = scalar_lea.vmem [#allocation7], %s519
      %v521 = vld [vmem:[%s520] sm:$0xf]
      %v522 = vunpack.c.l.bf16 %v521
      %v523 = vpack.c.bf16 %v216, %v216
      %v524 = vld [vmem:[#allocation8] sm:$0xff]
      %v525 = vld [vmem:[#allocation8 + $0x8] sm:$0xff]
      %v526 = vld [vmem:[#allocation8 + $0x10] sm:$0xff]
      %v527 = vld [vmem:[#allocation8 + $0x18] sm:$0xff]
      %v528 = vld [vmem:[#allocation8 + $0x20] sm:$0xff]
      %v529 = vld [vmem:[#allocation8 + $0x28] sm:$0xff]
      %v530 = vld [vmem:[#allocation8 + $0x30] sm:$0xff]
      %v531 = vld [vmem:[#allocation8 + $0x38] sm:$0xff]
      %v532 = vld [vmem:[#allocation8 + $0x40] sm:$0xff]
      %v533 = vld [vmem:[#allocation8 + $0x48] sm:$0xff]
      %v534 = vld [vmem:[#allocation8 + $0x50] sm:$0xff]
      %v535 = vld [vmem:[#allocation8 + $0x58] sm:$0xff]
      %v536 = vld [vmem:[#allocation8 + $0x60] sm:$0xff]
      %v537 = vld [vmem:[#allocation8 + $0x68] sm:$0xff]
      %v538 = vld [vmem:[#allocation8 + $0x70] sm:$0xff]
      %v539 = vld [vmem:[#allocation8 + $0x78] sm:$0xff]
      %v540 = vld [vmem:[#allocation8 + $0x80] sm:$0xff]
      %v541 = vld [vmem:[#allocation8 + $0x88] sm:$0xff]
      %v542 = vld [vmem:[#allocation8 + $0x90] sm:$0xff]
      %v543 = vld [vmem:[#allocation8 + $0x98] sm:$0xff]
      %v544 = vld [vmem:[#allocation8 + $0xa0] sm:$0xff]
      %v545 = vld [vmem:[#allocation8 + $0xa8] sm:$0xff]
      %v546 = vld [vmem:[#allocation8 + $0xb0] sm:$0xff]
      %v547 = vld [vmem:[#allocation8 + $0xb8] sm:$0xff]
      %v548 = vld [vmem:[#allocation8 + $0xc0] sm:$0xff]
      %v549 = vld [vmem:[#allocation8 + $0xc8] sm:$0xff]
      %v550 = vld [vmem:[#allocation8 + $0xd0] sm:$0xff]
      %v551 = vld [vmem:[#allocation8 + $0xd8] sm:$0xff]
      %v552 = vld [vmem:[#allocation8 + $0xe0] sm:$0xff]
      %v553 = vld [vmem:[#allocation8 + $0xe8] sm:$0xff]
      %v554 = vld [vmem:[#allocation8 + $0xf0] sm:$0xff]
      %v555 = vld [vmem:[#allocation8 + $0xf8] sm:$0xff]
      %v588 = vunpack.c.l.b16 %v524
      %v589 = vunpack.c.h.b16 %v524
      %v590 = vunpack.c.l.b16 %v525
      %v591 = vunpack.c.h.b16 %v525
      %v592 = vunpack.c.l.b16 %v526
      %v593 = vunpack.c.h.b16 %v526
      %v594 = vunpack.c.l.b16 %v527
      %v595 = vunpack.c.h.b16 %v527
      %v596 = vunpack.c.l.b16 %v528
      %v597 = vunpack.c.h.b16 %v528
      %v598 = vunpack.c.l.b16 %v529
      %v599 = vunpack.c.h.b16 %v529
      %v600 = vunpack.c.l.b16 %v530
      %v601 = vunpack.c.h.b16 %v530
      %v602 = vunpack.c.l.b16 %v531
      %v603 = vunpack.c.h.b16 %v531
      %v604 = vunpack.c.l.b16 %v532
      %v605 = vunpack.c.h.b16 %v532
      %v606 = vunpack.c.l.b16 %v533
      %v607 = vunpack.c.h.b16 %v533
      %v608 = vunpack.c.l.b16 %v534
      %v609 = vunpack.c.h.b16 %v534
      %v610 = vunpack.c.l.b16 %v535
      %v611 = vunpack.c.h.b16 %v535
      %v612 = vunpack.c.l.b16 %v536
      %v613 = vunpack.c.h.b16 %v536
      %v614 = vunpack.c.l.b16 %v537
      %v615 = vunpack.c.h.b16 %v537
      %v616 = vunpack.c.l.b16 %v538
      %v617 = vunpack.c.h.b16 %v538
      %v618 = vunpack.c.l.b16 %v539
      %v619 = vunpack.c.h.b16 %v539
      %v620 = vunpack.c.l.b16 %v540
      %v621 = vunpack.c.h.b16 %v540
      %v622 = vunpack.c.l.b16 %v541
      %v623 = vunpack.c.h.b16 %v541
      %v624 = vunpack.c.l.b16 %v542
      %v625 = vunpack.c.h.b16 %v542
      %v626 = vunpack.c.l.b16 %v543
      %v627 = vunpack.c.h.b16 %v543
      %v628 = vunpack.c.l.b16 %v544
      %v629 = vunpack.c.h.b16 %v544
      %v630 = vunpack.c.l.b16 %v545
      %v631 = vunpack.c.h.b16 %v545
      %v632 = vunpack.c.l.b16 %v546
      %v633 = vunpack.c.h.b16 %v546
      %v634 = vunpack.c.l.b16 %v547
      %v635 = vunpack.c.h.b16 %v547
      %v636 = vunpack.c.l.b16 %v548
      %v637 = vunpack.c.h.b16 %v548
      %v638 = vunpack.c.l.b16 %v549
      %v639 = vunpack.c.h.b16 %v549
      %v640 = vunpack.c.l.b16 %v550
      %v641 = vunpack.c.h.b16 %v550
      %v642 = vunpack.c.l.b16 %v551
      %v643 = vunpack.c.h.b16 %v551
      %v644 = vunpack.c.l.b16 %v552
      %v645 = vunpack.c.h.b16 %v552
      %v646 = vunpack.c.l.b16 %v553
      %v647 = vunpack.c.h.b16 %v553
      %v648 = vunpack.c.l.b16 %v554
      %v649 = vunpack.c.h.b16 %v554
      %v650 = vunpack.c.l.b16 %v555
      %v651 = vunpack.c.h.b16 %v555
      %v652 = vpack.c.b16 %v592, %v588
      %v653 = vpack.c.b16 %v593, %v589
      %v654 = vpack.c.b16 %v594, %v590
      %v655 = vpack.c.b16 %v595, %v591
      %v656 = vpack.c.b16 %v600, %v596
      %v657 = vpack.c.b16 %v601, %v597
      %v658 = vpack.c.b16 %v602, %v598
      %v659 = vpack.c.b16 %v603, %v599
      %v660 = vpack.c.b16 %v608, %v604
      %v661 = vpack.c.b16 %v609, %v605
      %v662 = vpack.c.b16 %v610, %v606
      %v663 = vpack.c.b16 %v611, %v607
      %v664 = vpack.c.b16 %v616, %v612
      %v665 = vpack.c.b16 %v617, %v613
      %v666 = vpack.c.b16 %v618, %v614
      %v667 = vpack.c.b16 %v619, %v615
      %v668 = vpack.c.b16 %v624, %v620
      %v669 = vpack.c.b16 %v625, %v621
      %v670 = vpack.c.b16 %v626, %v622
      %v671 = vpack.c.b16 %v627, %v623
      %v672 = vpack.c.b16 %v632, %v628
      %v673 = vpack.c.b16 %v633, %v629
      %v674 = vpack.c.b16 %v634, %v630
      %v675 = vpack.c.b16 %v635, %v631
      %v676 = vpack.c.b16 %v640, %v636
      %v677 = vpack.c.b16 %v641, %v637
      %v678 = vpack.c.b16 %v642, %v638
      %v679 = vpack.c.b16 %v643, %v639
      %v680 = vpack.c.b16 %v648, %v644
      %v681 = vpack.c.b16 %v649, %v645
      %v682 = vpack.c.b16 %v650, %v646
      %v683 = vpack.c.b16 %v651, %v647
      %716 = vmatpush.bf16.msra.mxu0 %v680
      %717 = vmatpush.bf16.msra.mxu0 %v676
      %718 = vmatpush.bf16.msra.mxu0 %v672
      %719 = vmatpush.bf16.msra.mxu0 %v668
      %720 = vmatpush.bf16.msra.mxu0 %v664
      %721 = vmatpush.bf16.msra.mxu0 %v660
      %722 = vmatpush.bf16.msra.mxu0 %v656
      %723 = vmatpush.bf16.msra.mxu0 %v652
      %724 = vmatmul.bf16.gmra.mxu0 %v523
      %v725 = vpop.f32.mrf.mxu0
      %v726 = vadd.f32 0.0, %v725
      %v727 = vpop.f32.mrf.mxu0
      %728 = vdwg.mxu0
      %729 = vmatpush.bf16.msra.mxu0 %v681
      %730 = vmatpush.bf16.msra.mxu0 %v677
      %731 = vmatpush.bf16.msra.mxu0 %v673
      %732 = vmatpush.bf16.msra.mxu0 %v669
      %733 = vmatpush.bf16.msra.mxu0 %v665
      %734 = vmatpush.bf16.msra.mxu0 %v661
      %735 = vmatpush.bf16.msra.mxu0 %v657
      %736 = vmatpush.bf16.msra.mxu0 %v653
      %737 = vmatmul.bf16.gmra.mxu0 %v523
      %v738 = vpop.f32.mrf.mxu0
      %v739 = vadd.f32 0.0, %v738
      %v740 = vpop.f32.mrf.mxu0
      %741 = vdwg.mxu0
      %742 = vmatpush.bf16.msra.mxu0 %v682
      %743 = vmatpush.bf16.msra.mxu0 %v678
      %744 = vmatpush.bf16.msra.mxu0 %v674
      %745 = vmatpush.bf16.msra.mxu0 %v670
      %746 = vmatpush.bf16.msra.mxu0 %v666
      %747 = vmatpush.bf16.msra.mxu0 %v662
      %748 = vmatpush.bf16.msra.mxu0 %v658
      %749 = vmatpush.bf16.msra.mxu0 %v654
      %750 = vmatmul.bf16.gmra.mxu0 %v523
      %v751 = vpop.f32.mrf.mxu0
      %v752 = vadd.f32 0.0, %v751
      %v753 = vpop.f32.mrf.mxu0
      %754 = vdwg.mxu0
      %755 = vmatpush.bf16.msra.mxu0 %v683
      %756 = vmatpush.bf16.msra.mxu0 %v679
      %757 = vmatpush.bf16.msra.mxu0 %v675
      %758 = vmatpush.bf16.msra.mxu0 %v671
      %759 = vmatpush.bf16.msra.mxu0 %v667
      %760 = vmatpush.bf16.msra.mxu0 %v663
      %761 = vmatpush.bf16.msra.mxu0 %v659
      %762 = vmatpush.bf16.msra.mxu0 %v655
      %763 = vmatmul.bf16.gmra.mxu0 %v523
      %v764 = vpop.f32.mrf.mxu0
      %v765 = vadd.f32 0.0, %v764
      %v766 = vpop.f32.mrf.mxu0
      %767 = vdwg.mxu0
      %v772 = vrot.slane %v739, 6
      %v773 = vrot.slane %v752, 4
      %v774 = vrot.slane %v765, 2
      %v775 = vsel %vm474, %v726, %v772
      %v776 = vsel %vm476, %v773, %v774
      %v777 = vsel %vm478, %v775, %v776
      %v779 = vadd.f32 %v522, %v777
      %v780 = vxor.u32 %v779, 2147483648
      %v781 = vmul.f32 %v780, 1.442695
      %v782 = vpow.pop %v781
      %v783 = vadd.f32 %v782, 1.0
      %v784 = vrcp.pop %v783
      %v785 = vmul.f32 %v783, %v784
      %v786 = vsub.f32 1.0, %v785
      %v787 = vmul.f32 %v784, %v786
      %v788 = vadd.f32 %v784, %v787
      %vm789 = vweird.f32 %v783
      %vm790 = vweird.f32 %v784
      %vm791 = vmor %vm789, %vm790
      %v792 = vsel %vm791, %v784, %v788
      %v793 = vand.u32 2147483647, %v783
      %vm794 = vcmp.eq.f32.partialorder %v793, 8.507059e+37
      %v795 = vand.u32 %v783, 2147483648
      %v796 = vor.u32 1.1754944e-38, %v795
      %v797 = vsel %vm794, %v796, %v792
      %v798 = vmul.f32 1.0, %v797
      %v800 = vrot.slane %v779, 6
      %v802 = vtanh.pop %v800
      %v804 = vrot.slane %v798, 2
      %v806 = vmul.f32 %v804, %v217
      %v807 = vmul.f32 %v798, %v802
      %v808 = vadd.f32 %v806, %v807
      %v809 = vtanh.pop %v808
      %v810 = vrot.slane %v798, 4
      %v812 = vmul.f32 %v810, %v809
      %v813 = vpack.c.bf16 %v812, %v812
      %s814 = scalar_lea.vmem %s193, %s518
      %815 = vst [vmem:[%s814] sm:$0x1] %v813
    $region112: #{rnn_fc_forward.8} parent=1 // loop_footer
      %s213 = sadd.s32 1, %s209
    $region113: #{rnn_fc_forward.8} parent=1 // loop_footer_branch
      %208 = sbr.rel target = $region109
    $region114: #{rnn_fc_forward.8} parent=1 // loop_exit
      _
    %816 = vst [vmem:[#allocation2] sm:$0x3] %v214
    %817 = vst [vmem:[#allocation3] sm:$0x3] %v215
    %818 = vst [vmem:[#allocation4] sm:$0x3] %v216
    %819 = vst [vmem:[#allocation5] sm:$0x3] %v217
    %s820 = ssub.s32 0, 0
    %s821 = smul.u32 8, %s820
    %p822 = scmp.lt.s32.totalorder %s821, 7
    %s823 = scalar_select %p822, %s821, 7
    %s824 = scalar_lea.vmem %s5, %s823
    // Predicated region
    $region115: #{rnn_fc_forward.8} parent=1 // pred_check
      _
    $region116: #{rnn_fc_forward.8} parent=1 // pred_check_branch
      %826 = sbr.rel (0) target = $region118
    $region117: #{rnn_fc_forward.8} parent=1 // pred_region
      _
    $region118: #{rnn_fc_forward.8} parent=1 // pred_fallthru
      _
    // Predicated region
    $region119: #{rnn_fc_forward.8} parent=1 // pred_check
      _
    $region120: #{rnn_fc_forward.8} parent=1 // pred_check_branch
      %828 = sbr.rel (0) target = $region122
    $region121: #{rnn_fc_forward.8} parent=1 // pred_region
      %s829 = ssub.s32 0, 0
      %s830 = smul.u32 8, %s829
    $region122: #{rnn_fc_forward.8} parent=1 // pred_fallthru
      _
    // Predicated region
    $region123: #{rnn_fc_forward.8} parent=1 // pred_check
      _
    $region124: #{rnn_fc_forward.8} parent=1 // pred_check_branch
      %832 = sbr.rel (0) target = $region126
    $region125: #{rnn_fc_forward.8} parent=1 // pred_region
      _
    $region126: #{rnn_fc_forward.8} parent=1 // pred_fallthru
      _
    // Predicated region
    $region127: #{rnn_fc_forward.8} parent=1 // pred_check
      _
    $region128: #{rnn_fc_forward.8} parent=1 // pred_check_branch
      %834 = sbr.rel (0) target = $region130
    $region129: #{rnn_fc_forward.8} parent=1 // pred_region
      %s835 = ssub.s32 0, 0
      %s836 = smul.u32 8, %s835
      %p837 = scmp.lt.s32.totalorder %s836, 7
      %s838 = scalar_select %p837, %s836, 7
      %s839 = scalar_lea.vmem %s5, %s838
    $region130: #{rnn_fc_forward.8} parent=1 // pred_fallthru
      _
    %840 = vsyncpa [#allocation9], 1

// kernel: rnn_fc_forward.7
$region0: #{rnn_fc_forward.7}
  #allocation0 [shape = 'u32[]', space=smem, size = 0x4, offset = 0x4, fixed_abs, tag = 'smem constant byte address 0x4 - core index']
  #allocation1 [shape = 'u32[72,128]{1,0:T(1,128)}', space=vmem, size = 0x9000, scoped, tag = 'internal scratch']
  %s0 = inlined_call_operand.vmem [shape: bf16[16,128], index: 0, kind: input, shape index: {}]
  %s1 = inlined_call_operand.vmem [shape: bf16[16,128], index: 1, kind: input, shape index: {}]
  %s2 = inlined_call_operand.hbm [shape: bf16[128,1024], index: 2, kind: input, shape index: {}]
  %s3 = inlined_call_operand.hbm [shape: bf16[128,1024], index: 3, kind: input, shape index: {}]
  %s4 = inlined_call_operand.hbm [shape: f32[1,1024], index: 4, kind: input, shape index: {}]
  %s5 = inlined_call_operand.vmem [shape: bf16[16,1024], index: 5, kind: output, shape index: {}]
  %s6 = sld [smem:[#allocation0]]
  $region42: #{rnn_fc_forward.7} parent=0
    _
  %s8 = ssub.s32 1, %s6
  %s9 = scalar_select 0, %s8, %s6
  $region1: #{rnn_fc_forward.7} parent=0
    #allocation2 [shape = 'u8[262144]{0}', space=vmem, size = 0x40000, scoped, tag = 'input window, operand 2, single buffered']
    #allocation3 [shape = 's32[1]{0}', space=sflag, size = 0x4, scoped, tag = 'scoped memory for rnn_fc_forward.7']
    #allocation4 [shape = 'u8[262144]{0}', space=vmem, size = 0x40000, scoped, tag = 'input window, operand 3, single buffered']
    #allocation5 [shape = 's32[1]{0}', space=sflag, size = 0x4, scoped, tag = 'scoped memory for rnn_fc_forward.7']
    #allocation6 [shape = 'u8[4096]{0}', space=vmem, size = 0x1000, scoped, tag = 'input window, operand 4, single buffered']
    %10 = vsyncpa [#allocation3], 0
    %11 = vsyncpa [#allocation5], 0
    // Predicated region
    $region2: #{rnn_fc_forward.7} parent=1 // pred_check
      _
    $region3: #{rnn_fc_forward.7} parent=1 // pred_check_branch
      %13 = sbr.rel (0) target = $region5
    $region4: #{rnn_fc_forward.7} parent=1 // pred_region
      _
    $region5: #{rnn_fc_forward.7} parent=1 // pred_fallthru
      _
    // Predicated region
    $region6: #{rnn_fc_forward.7} parent=1 // pred_check
      _
    $region7: #{rnn_fc_forward.7} parent=1 // pred_check_branch
      %15 = sbr.rel (0) target = $region9
    $region8: #{rnn_fc_forward.7} parent=1 // pred_region
      _
    $region9: #{rnn_fc_forward.7} parent=1 // pred_fallthru
      _
    // Predicated region
    $region10: #{rnn_fc_forward.7} parent=1 // pred_check
      _
    $region11: #{rnn_fc_forward.7} parent=1 // pred_check_branch
      %17 = sbr.rel (0) target = $region13
    $region12: #{rnn_fc_forward.7} parent=1 // pred_region
      %19 = vsyncadd [#allocation3], 0
      %s20 = sshll.u32 %s2, 4
      %s21 = int_to_ptr.hbm [resolvable:$true] %s20
      %s22 = sshll.u32 [#allocation2], 4
      %s23 = int_to_ptr.vmem [resolvable:$true] %s22
      %28 = dma.hbm_to_vmem [thread:$0]  %s21, 8192, %s23, [#allocation3], 512, 512, 32
    $region13: #{rnn_fc_forward.7} parent=1 // pred_fallthru
      _
    // Predicated region
    $region14: #{rnn_fc_forward.7} parent=1 // pred_check
      _
    $region15: #{rnn_fc_forward.7} parent=1 // pred_check_branch
      %30 = sbr.rel (0) target = $region17
    $region16: #{rnn_fc_forward.7} parent=1 // pred_region
      %32 = vsyncadd [#allocation5], 0
      %s33 = sshll.u32 %s3, 4
      %s34 = int_to_ptr.hbm [resolvable:$true] %s33
      %s35 = sshll.u32 [#allocation4], 4
      %s36 = int_to_ptr.vmem [resolvable:$true] %s35
      %41 = dma.hbm_to_vmem [thread:$0]  %s34, 8192, %s36, [#allocation5], 512, 512, 32
    $region17: #{rnn_fc_forward.7} parent=1 // pred_fallthru
      _
    // Predicated region
    $region18: #{rnn_fc_forward.7} parent=1 // pred_check
      _
    $region19: #{rnn_fc_forward.7} parent=1 // pred_check_branch
      %43 = sbr.rel (0) target = $region21
    $region20: #{rnn_fc_forward.7} parent=1 // pred_region
      %45 = vsyncadd [#allocation5], 0
      %s47 = sshll.u32 %s4, 4
      %s48 = int_to_ptr.hbm [resolvable:$true] %s47
      %s49 = sshll.u32 [#allocation6], 4
      %s50 = int_to_ptr.vmem [resolvable:$true] %s49
      %52 = dma.hbm_to_vmem [thread:$0]  %s48, 128, %s50, [#allocation5]
    $region21: #{rnn_fc_forward.7} parent=1 // pred_fallthru
      _
    // Predicated region
    $region22: #{rnn_fc_forward.7} parent=1 // pred_check
      _
    $region23: #{rnn_fc_forward.7} parent=1 // pred_check_branch
      %54 = sbr.rel (0) target = $region25
    $region24: #{rnn_fc_forward.7} parent=1 // pred_region
      %56 = dma.done [#allocation3], 8192
    $region25: #{rnn_fc_forward.7} parent=1 // pred_fallthru
      _
    // Predicated region
    $region26: #{rnn_fc_forward.7} parent=1 // pred_check
      _
    $region27: #{rnn_fc_forward.7} parent=1 // pred_check_branch
      %58 = sbr.rel (0) target = $region29
    $region28: #{rnn_fc_forward.7} parent=1 // pred_region
      %60 = dma.done [#allocation5], 8192
    $region29: #{rnn_fc_forward.7} parent=1 // pred_fallthru
      _
    // Predicated region
    $region30: #{rnn_fc_forward.7} parent=1 // pred_check
      _
    $region31: #{rnn_fc_forward.7} parent=1 // pred_check_branch
      %62 = sbr.rel (0) target = $region33
    $region32: #{rnn_fc_forward.7} parent=1 // pred_region
      %64 = dma.done [#allocation5], 128
    $region33: #{rnn_fc_forward.7} parent=1 // pred_fallthru
      _
    %v65 = vld [vmem:[%s0] sm:$0xf]
    %v66 = vld [vmem:[%s0 + $0x4] sm:$0xf]
    %v67 = vld [vmem:[#allocation2] sm:$0xff]
    %v68 = vld [vmem:[#allocation2 + $0x8] sm:$0xff]
    %v69 = vld [vmem:[#allocation2 + $0x10] sm:$0xff]
    %v70 = vld [vmem:[#allocation2 + $0x18] sm:$0xff]
    %v71 = vld [vmem:[#allocation2 + $0x20] sm:$0xff]
    %v72 = vld [vmem:[#allocation2 + $0x28] sm:$0xff]
    %v73 = vld [vmem:[#allocation2 + $0x30] sm:$0xff]
    %v74 = vld [vmem:[#allocation2 + $0x38] sm:$0xff]
    %v75 = vld [vmem:[#allocation2 + $0x40] sm:$0xff]
    %v76 = vld [vmem:[#allocation2 + $0x48] sm:$0xff]
    %v77 = vld [vmem:[#allocation2 + $0x50] sm:$0xff]
    %v78 = vld [vmem:[#allocation2 + $0x58] sm:$0xff]
    %v79 = vld [vmem:[#allocation2 + $0x60] sm:$0xff]
    %v80 = vld [vmem:[#allocation2 + $0x68] sm:$0xff]
    %v81 = vld [vmem:[#allocation2 + $0x70] sm:$0xff]
    %v82 = vld [vmem:[#allocation2 + $0x78] sm:$0xff]
    %v83 = vld [vmem:[#allocation2 + $0x80] sm:$0xff]
    %v84 = vld [vmem:[#allocation2 + $0x88] sm:$0xff]
    %v85 = vld [vmem:[#allocation2 + $0x90] sm:$0xff]
    %v86 = vld [vmem:[#allocation2 + $0x98] sm:$0xff]
    %v87 = vld [vmem:[#allocation2 + $0xa0] sm:$0xff]
    %v88 = vld [vmem:[#allocation2 + $0xa8] sm:$0xff]
    %v89 = vld [vmem:[#allocation2 + $0xb0] sm:$0xff]
    %v90 = vld [vmem:[#allocation2 + $0xb8] sm:$0xff]
    %v91 = vld [vmem:[#allocation2 + $0xc0] sm:$0xff]
    %v92 = vld [vmem:[#allocation2 + $0xc8] sm:$0xff]
    %v93 = vld [vmem:[#allocation2 + $0xd0] sm:$0xff]
    %v94 = vld [vmem:[#allocation2 + $0xd8] sm:$0xff]
    %v95 = vld [vmem:[#allocation2 + $0xe0] sm:$0xff]
    %v96 = vld [vmem:[#allocation2 + $0xe8] sm:$0xff]
    %v97 = vld [vmem:[#allocation2 + $0xf0] sm:$0xff]
    %v98 = vld [vmem:[#allocation2 + $0xf8] sm:$0xff]
    %v99 = vld [vmem:[#allocation2 + $0x100] sm:$0xff]
    %v100 = vld [vmem:[#allocation2 + $0x108] sm:$0xff]
    %v101 = vld [vmem:[#allocation2 + $0x110] sm:$0xff]
    %v102 = vld [vmem:[#allocation2 + $0x118] sm:$0xff]
    %v103 = vld [vmem:[#allocation2 + $0x120] sm:$0xff]
    %v104 = vld [vmem:[#allocation2 + $0x128] sm:$0xff]
    %v105 = vld [vmem:[#allocation2 + $0x130] sm:$0xff]
    %v106 = vld [vmem:[#allocation2 + $0x138] sm:$0xff]
    %v107 = vld [vmem:[#allocation2 + $0x140] sm:$0xff]
    %v108 = vld [vmem:[#allocation2 + $0x148] sm:$0xff]
    %v109 = vld [vmem:[#allocation2 + $0x150] sm:$0xff]
    %v110 = vld [vmem:[#allocation2 + $0x158] sm:$0xff]
    %v111 = vld [vmem:[#allocation2 + $0x160] sm:$0xff]
    %v112 = vld [vmem:[#allocation2 + $0x168] sm:$0xff]
    %v113 = vld [vmem:[#allocation2 + $0x170] sm:$0xff]
    %v114 = vld [vmem:[#allocation2 + $0x178] sm:$0xff]
    %v115 = vld [vmem:[#allocation2 + $0x180] sm:$0xff]
    %v116 = vld [vmem:[#allocation2 + $0x188] sm:$0xff]
    %v117 = vld [vmem:[#allocation2 + $0x190] sm:$0xff]
    %v118 = vld [vmem:[#allocation2 + $0x198] sm:$0xff]
    %v119 = vld [vmem:[#allocation2 + $0x1a0] sm:$0xff]
    %v120 = vld [vmem:[#allocation2 + $0x1a8] sm:$0xff]
    %v121 = vld [vmem:[#allocation2 + $0x1b0] sm:$0xff]
    %v122 = vld [vmem:[#allocation2 + $0x1b8] sm:$0xff]
    %v123 = vld [vmem:[#allocation2 + $0x1c0] sm:$0xff]
    %v124 = vld [vmem:[#allocation2 + $0x1c8] sm:$0xff]
    %v125 = vld [vmem:[#allocation2 + $0x1d0] sm:$0xff]
    %v126 = vld [vmem:[#allocation2 + $0x1d8] sm:$0xff]
    %v127 = vld [vmem:[#allocation2 + $0x1e0] sm:$0xff]
    %v128 = vld [vmem:[#allocation2 + $0x1e8] sm:$0xff]
    %v129 = vld [vmem:[#allocation2 + $0x1f0] sm:$0xff]
    %v130 = vld [vmem:[#allocation2 + $0x1f8] sm:$0xff]
    %v131 = vld [vmem:[%s1] sm:$0xf]
    %v132 = vld [vmem:[%s1 + $0x4] sm:$0xf]
    %v133 = vld [vmem:[#allocation4] sm:$0xff]
    %v134 = vld [vmem:[#allocation4 + $0x8] sm:$0xff]
    %v135 = vld [vmem:[#allocation4 + $0x10] sm:$0xff]
    %v136 = vld [vmem:[#allocation4 + $0x18] sm:$0xff]
    %v137 = vld [vmem:[#allocation4 + $0x20] sm:$0xff]
    %v138 = vld [vmem:[#allocation4 + $0x28] sm:$0xff]
    %v139 = vld [vmem:[#allocation4 + $0x30] sm:$0xff]
    %v140 = vld [vmem:[#allocation4 + $0x38] sm:$0xff]
    %v141 = vld [vmem:[#allocation4 + $0x40] sm:$0xff]
    %v142 = vld [vmem:[#allocation4 + $0x48] sm:$0xff]
    %v143 = vld [vmem:[#allocation4 + $0x50] sm:$0xff]
    %v144 = vld [vmem:[#allocation4 + $0x58] sm:$0xff]
    %v145 = vld [vmem:[#allocation4 + $0x60] sm:$0xff]
    %v146 = vld [vmem:[#allocation4 + $0x68] sm:$0xff]
    %v147 = vld [vmem:[#allocation4 + $0x70] sm:$0xff]
    %v148 = vld [vmem:[#allocation4 + $0x78] sm:$0xff]
    %v149 = vld [vmem:[#allocation4 + $0x80] sm:$0xff]
    %v150 = vld [vmem:[#allocation4 + $0x88] sm:$0xff]
    %v151 = vld [vmem:[#allocation4 + $0x90] sm:$0xff]
    %v152 = vld [vmem:[#allocation4 + $0x98] sm:$0xff]
    %v153 = vld [vmem:[#allocation4 + $0xa0] sm:$0xff]
    %v154 = vld [vmem:[#allocation4 + $0xa8] sm:$0xff]
    %v155 = vld [vmem:[#allocation4 + $0xb0] sm:$0xff]
    %v156 = vld [vmem:[#allocation4 + $0xb8] sm:$0xff]
    %v157 = vld [vmem:[#allocation4 + $0xc0] sm:$0xff]
    %v158 = vld [vmem:[#allocation4 + $0xc8] sm:$0xff]
    %v159 = vld [vmem:[#allocation4 + $0xd0] sm:$0xff]
    %v160 = vld [vmem:[#allocation4 + $0xd8] sm:$0xff]
    %v161 = vld [vmem:[#allocation4 + $0xe0] sm:$0xff]
    %v162 = vld [vmem:[#allocation4 + $0xe8] sm:$0xff]
    %v163 = vld [vmem:[#allocation4 + $0xf0] sm:$0xff]
    %v164 = vld [vmem:[#allocation4 + $0xf8] sm:$0xff]
    %v165 = vld [vmem:[#allocation4 + $0x100] sm:$0xff]
    %v166 = vld [vmem:[#allocation4 + $0x108] sm:$0xff]
    %v167 = vld [vmem:[#allocation4 + $0x110] sm:$0xff]
    %v168 = vld [vmem:[#allocation4 + $0x118] sm:$0xff]
    %v169 = vld [vmem:[#allocation4 + $0x120] sm:$0xff]
    %v170 = vld [vmem:[#allocation4 + $0x128] sm:$0xff]
    %v171 = vld [vmem:[#allocation4 + $0x130] sm:$0xff]
    %v172 = vld [vmem:[#allocation4 + $0x138] sm:$0xff]
    %v173 = vld [vmem:[#allocation4 + $0x140] sm:$0xff]
    %v174 = vld [vmem:[#allocation4 + $0x148] sm:$0xff]
    %v175 = vld [vmem:[#allocation4 + $0x150] sm:$0xff]
    %v176 = vld [vmem:[#allocation4 + $0x158] sm:$0xff]
    %v177 = vld [vmem:[#allocation4 + $0x160] sm:$0xff]
    %v178 = vld [vmem:[#allocation4 + $0x168] sm:$0xff]
    %v179 = vld [vmem:[#allocation4 + $0x170] sm:$0xff]
    %v180 = vld [vmem:[#allocation4 + $0x178] sm:$0xff]
    %v181 = vld [vmem:[#allocation4 + $0x180] sm:$0xff]
    %v182 = vld [vmem:[#allocation4 + $0x188] sm:$0xff]
    %v183 = vld [vmem:[#allocation4 + $0x190] sm:$0xff]
    %v184 = vld [vmem:[#allocation4 + $0x198] sm:$0xff]
    %v185 = vld [vmem:[#allocation4 + $0x1a0] sm:$0xff]
    %v186 = vld [vmem:[#allocation4 + $0x1a8] sm:$0xff]
    %v187 = vld [vmem:[#allocation4 + $0x1b0] sm:$0xff]
    %v188 = vld [vmem:[#allocation4 + $0x1b8] sm:$0xff]
    %v189 = vld [vmem:[#allocation4 + $0x1c0] sm:$0xff]
    %v190 = vld [vmem:[#allocation4 + $0x1c8] sm:$0xff]
    %v191 = vld [vmem:[#allocation4 + $0x1d0] sm:$0xff]
    %v192 = vld [vmem:[#allocation4 + $0x1d8] sm:$0xff]
    %v193 = vld [vmem:[#allocation4 + $0x1e0] sm:$0xff]
    %v194 = vld [vmem:[#allocation4 + $0x1e8] sm:$0xff]
    %v195 = vld [vmem:[#allocation4 + $0x1f0] sm:$0xff]
    %v196 = vld [vmem:[#allocation4 + $0x1f8] sm:$0xff]
    %v199 = vunpack.c.l.b16 %v131
    %v200 = vunpack.c.l.b16 %v132
    %v201 = vpack.c.b16 %v200, %v199
    %v267 = vunpack.c.l.b16 %v133
    %v268 = vunpack.c.h.b16 %v133
    %v269 = vunpack.c.l.b16 %v134
    %v270 = vunpack.c.h.b16 %v134
    %v271 = vunpack.c.l.b16 %v135
    %v272 = vunpack.c.h.b16 %v135
    %v273 = vunpack.c.l.b16 %v136
    %v274 = vunpack.c.h.b16 %v136
    %v275 = vunpack.c.l.b16 %v137
    %v276 = vunpack.c.h.b16 %v137
    %v277 = vunpack.c.l.b16 %v138
    %v278 = vunpack.c.h.b16 %v138
    %v279 = vunpack.c.l.b16 %v139
    %v280 = vunpack.c.h.b16 %v139
    %v281 = vunpack.c.l.b16 %v140
    %v282 = vunpack.c.h.b16 %v140
    %v283 = vunpack.c.l.b16 %v141
    %v284 = vunpack.c.h.b16 %v141
    %v285 = vunpack.c.l.b16 %v142
    %v286 = vunpack.c.h.b16 %v142
    %v287 = vunpack.c.l.b16 %v143
    %v288 = vunpack.c.h.b16 %v143
    %v289 = vunpack.c.l.b16 %v144
    %v290 = vunpack.c.h.b16 %v144
    %v291 = vunpack.c.l.b16 %v145
    %v292 = vunpack.c.h.b16 %v145
    %v293 = vunpack.c.l.b16 %v146
    %v294 = vunpack.c.h.b16 %v146
    %v295 = vunpack.c.l.b16 %v147
    %v296 = vunpack.c.h.b16 %v147
    %v297 = vunpack.c.l.b16 %v148
    %v298 = vunpack.c.h.b16 %v148
    %v299 = vunpack.c.l.b16 %v149
    %v300 = vunpack.c.h.b16 %v149
    %v301 = vunpack.c.l.b16 %v150
    %v302 = vunpack.c.h.b16 %v150
    %v303 = vunpack.c.l.b16 %v151
    %v304 = vunpack.c.h.b16 %v151
    %v305 = vunpack.c.l.b16 %v152
    %v306 = vunpack.c.h.b16 %v152
    %v307 = vunpack.c.l.b16 %v153
    %v308 = vunpack.c.h.b16 %v153
    %v309 = vunpack.c.l.b16 %v154
    %v310 = vunpack.c.h.b16 %v154
    %v311 = vunpack.c.l.b16 %v155
    %v312 = vunpack.c.h.b16 %v155
    %v313 = vunpack.c.l.b16 %v156
    %v314 = vunpack.c.h.b16 %v156
    %v315 = vunpack.c.l.b16 %v157
    %v316 = vunpack.c.h.b16 %v157
    %v317 = vunpack.c.l.b16 %v158
    %v318 = vunpack.c.h.b16 %v158
    %v319 = vunpack.c.l.b16 %v159
    %v320 = vunpack.c.h.b16 %v159
    %v321 = vunpack.c.l.b16 %v160
    %v322 = vunpack.c.h.b16 %v160
    %v323 = vunpack.c.l.b16 %v161
    %v324 = vunpack.c.h.b16 %v161
    %v325 = vunpack.c.l.b16 %v162
    %v326 = vunpack.c.h.b16 %v162
    %v327 = vunpack.c.l.b16 %v163
    %v328 = vunpack.c.h.b16 %v163
    %v329 = vunpack.c.l.b16 %v164
    %v330 = vunpack.c.h.b16 %v164
    %v331 = vunpack.c.l.b16 %v165
    %v332 = vunpack.c.h.b16 %v165
    %v333 = vunpack.c.l.b16 %v166
    %v334 = vunpack.c.h.b16 %v166
    %v335 = vunpack.c.l.b16 %v167
    %v336 = vunpack.c.h.b16 %v167
    %v337 = vunpack.c.l.b16 %v168
    %v338 = vunpack.c.h.b16 %v168
    %v339 = vunpack.c.l.b16 %v169
    %v340 = vunpack.c.h.b16 %v169
    %v341 = vunpack.c.l.b16 %v170
    %v342 = vunpack.c.h.b16 %v170
    %v343 = vunpack.c.l.b16 %v171
    %v344 = vunpack.c.h.b16 %v171
    %v345 = vunpack.c.l.b16 %v172
    %v346 = vunpack.c.h.b16 %v172
    %v347 = vunpack.c.l.b16 %v173
    %v348 = vunpack.c.h.b16 %v173
    %v349 = vunpack.c.l.b16 %v174
    %v350 = vunpack.c.h.b16 %v174
    %v351 = vunpack.c.l.b16 %v175
    %v352 = vunpack.c.h.b16 %v175
    %v353 = vunpack.c.l.b16 %v176
    %v354 = vunpack.c.h.b16 %v176
    %v355 = vunpack.c.l.b16 %v177
    %v356 = vunpack.c.h.b16 %v177
    %v357 = vunpack.c.l.b16 %v178
    %v358 = vunpack.c.h.b16 %v178
    %v359 = vunpack.c.l.b16 %v179
    %v360 = vunpack.c.h.b16 %v179
    %v361 = vunpack.c.l.b16 %v180
    %v362 = vunpack.c.h.b16 %v180
    %v363 = vunpack.c.l.b16 %v181
    %v364 = vunpack.c.h.b16 %v181
    %v365 = vunpack.c.l.b16 %v182
    %v366 = vunpack.c.h.b16 %v182
    %v367 = vunpack.c.l.b16 %v183
    %v368 = vunpack.c.h.b16 %v183
    %v369 = vunpack.c.l.b16 %v184
    %v370 = vunpack.c.h.b16 %v184
    %v371 = vunpack.c.l.b16 %v185
    %v372 = vunpack.c.h.b16 %v185
    %v373 = vunpack.c.l.b16 %v186
    %v374 = vunpack.c.h.b16 %v186
    %v375 = vunpack.c.l.b16 %v187
    %v376 = vunpack.c.h.b16 %v187
    %v377 = vunpack.c.l.b16 %v188
    %v378 = vunpack.c.h.b16 %v188
    %v379 = vunpack.c.l.b16 %v189
    %v380 = vunpack.c.h.b16 %v189
    %v381 = vunpack.c.l.b16 %v190
    %v382 = vunpack.c.h.b16 %v190
    %v383 = vunpack.c.l.b16 %v191
    %v384 = vunpack.c.h.b16 %v191
    %v385 = vunpack.c.l.b16 %v192
    %v386 = vunpack.c.h.b16 %v192
    %v387 = vunpack.c.l.b16 %v193
    %v388 = vunpack.c.h.b16 %v193
    %v389 = vunpack.c.l.b16 %v194
    %v390 = vunpack.c.h.b16 %v194
    %v391 = vunpack.c.l.b16 %v195
    %v392 = vunpack.c.h.b16 %v195
    %v393 = vunpack.c.l.b16 %v196
    %v394 = vunpack.c.h.b16 %v196
    %v395 = vpack.c.b16 %v275, %v267
    %v396 = vpack.c.b16 %v276, %v268
    %v397 = vpack.c.b16 %v277, %v269
    %v398 = vpack.c.b16 %v278, %v270
    %v399 = vpack.c.b16 %v279, %v271
    %v400 = vpack.c.b16 %v280, %v272
    %v401 = vpack.c.b16 %v281, %v273
    %v402 = vpack.c.b16 %v282, %v274
    %v403 = vpack.c.b16 %v291, %v283
    %v404 = vpack.c.b16 %v292, %v284
    %v405 = vpack.c.b16 %v293, %v285
    %v406 = vpack.c.b16 %v294, %v286
    %v407 = vpack.c.b16 %v295, %v287
    %v408 = vpack.c.b16 %v296, %v288
    %v409 = vpack.c.b16 %v297, %v289
    %v410 = vpack.c.b16 %v298, %v290
    %v411 = vpack.c.b16 %v307, %v299
    %v412 = vpack.c.b16 %v308, %v300
    %v413 = vpack.c.b16 %v309, %v301
    %v414 = vpack.c.b16 %v310, %v302
    %v415 = vpack.c.b16 %v311, %v303
    %v416 = vpack.c.b16 %v312, %v304
    %v417 = vpack.c.b16 %v313, %v305
    %v418 = vpack.c.b16 %v314, %v306
    %v419 = vpack.c.b16 %v323, %v315
    %v420 = vpack.c.b16 %v324, %v316
    %v421 = vpack.c.b16 %v325, %v317
    %v422 = vpack.c.b16 %v326, %v318
    %v423 = vpack.c.b16 %v327, %v319
    %v424 = vpack.c.b16 %v328, %v320
    %v425 = vpack.c.b16 %v329, %v321
    %v426 = vpack.c.b16 %v330, %v322
    %v427 = vpack.c.b16 %v339, %v331
    %v428 = vpack.c.b16 %v340, %v332
    %v429 = vpack.c.b16 %v341, %v333
    %v430 = vpack.c.b16 %v342, %v334
    %v431 = vpack.c.b16 %v343, %v335
    %v432 = vpack.c.b16 %v344, %v336
    %v433 = vpack.c.b16 %v345, %v337
    %v434 = vpack.c.b16 %v346, %v338
    %v435 = vpack.c.b16 %v355, %v347
    %v436 = vpack.c.b16 %v356, %v348
    %v437 = vpack.c.b16 %v357, %v349
    %v438 = vpack.c.b16 %v358, %v350
    %v439 = vpack.c.b16 %v359, %v351
    %v440 = vpack.c.b16 %v360, %v352
    %v441 = vpack.c.b16 %v361, %v353
    %v442 = vpack.c.b16 %v362, %v354
    %v443 = vpack.c.b16 %v371, %v363
    %v444 = vpack.c.b16 %v372, %v364
    %v445 = vpack.c.b16 %v373, %v365
    %v446 = vpack.c.b16 %v374, %v366
    %v447 = vpack.c.b16 %v375, %v367
    %v448 = vpack.c.b16 %v376, %v368
    %v449 = vpack.c.b16 %v377, %v369
    %v450 = vpack.c.b16 %v378, %v370
    %v451 = vpack.c.b16 %v387, %v379
    %v452 = vpack.c.b16 %v388, %v380
    %v453 = vpack.c.b16 %v389, %v381
    %v454 = vpack.c.b16 %v390, %v382
    %v455 = vpack.c.b16 %v391, %v383
    %v456 = vpack.c.b16 %v392, %v384
    %v457 = vpack.c.b16 %v393, %v385
    %v458 = vpack.c.b16 %v394, %v386
    %523 = vmatpush.bf16.msra.mxu0 %v451
    %524 = vmatpush.bf16.msra.mxu0 %v443
    %525 = vmatpush.bf16.msra.mxu0 %v435
    %526 = vmatpush.bf16.msra.mxu0 %v427
    %527 = vmatpush.bf16.msra.mxu0 %v419
    %528 = vmatpush.bf16.msra.mxu0 %v411
    %529 = vmatpush.bf16.msra.mxu0 %v403
    %530 = vmatpush.bf16.msra.mxu0 %v395
    %531 = vmatmul.bf16.gmra.mxu0 %v201
    %v532 = vpop.f32.mrf.mxu0
    %v533 = vadd.f32 0.0, %v532
    %v534 = vpop.f32.mrf.mxu0
    %v535 = vadd.f32 0.0, %v534
    %536 = vdwg.mxu0
    %537 = vmatpush.bf16.msra.mxu0 %v452
    %538 = vmatpush.bf16.msra.mxu0 %v444
    %539 = vmatpush.bf16.msra.mxu0 %v436
    %540 = vmatpush.bf16.msra.mxu0 %v428
    %541 = vmatpush.bf16.msra.mxu0 %v420
    %542 = vmatpush.bf16.msra.mxu0 %v412
    %543 = vmatpush.bf16.msra.mxu0 %v404
    %544 = vmatpush.bf16.msra.mxu0 %v396
    %545 = vmatmul.bf16.gmra.mxu0 %v201
    %v546 = vpop.f32.mrf.mxu0
    %v547 = vadd.f32 0.0, %v546
    %v548 = vpop.f32.mrf.mxu0
    %v549 = vadd.f32 0.0, %v548
    %550 = vdwg.mxu0
    %551 = vmatpush.bf16.msra.mxu0 %v453
    %552 = vmatpush.bf16.msra.mxu0 %v445
    %553 = vmatpush.bf16.msra.mxu0 %v437
    %554 = vmatpush.bf16.msra.mxu0 %v429
    %555 = vmatpush.bf16.msra.mxu0 %v421
    %556 = vmatpush.bf16.msra.mxu0 %v413
    %557 = vmatpush.bf16.msra.mxu0 %v405
    %558 = vmatpush.bf16.msra.mxu0 %v397
    %559 = vmatmul.bf16.gmra.mxu0 %v201
    %v560 = vpop.f32.mrf.mxu0
    %v561 = vadd.f32 0.0, %v560
    %v562 = vpop.f32.mrf.mxu0
    %v563 = vadd.f32 0.0, %v562
    %564 = vdwg.mxu0
    %565 = vmatpush.bf16.msra.mxu0 %v454
    %566 = vmatpush.bf16.msra.mxu0 %v446
    %567 = vmatpush.bf16.msra.mxu0 %v438
    %568 = vmatpush.bf16.msra.mxu0 %v430
    %569 = vmatpush.bf16.msra.mxu0 %v422
    %570 = vmatpush.bf16.msra.mxu0 %v414
    %571 = vmatpush.bf16.msra.mxu0 %v406
    %572 = vmatpush.bf16.msra.mxu0 %v398
    %573 = vmatmul.bf16.gmra.mxu0 %v201
    %v574 = vpop.f32.mrf.mxu0
    %v575 = vadd.f32 0.0, %v574
    %v576 = vpop.f32.mrf.mxu0
    %v577 = vadd.f32 0.0, %v576
    %578 = vdwg.mxu0
    %579 = vmatpush.bf16.msra.mxu0 %v455
    %580 = vmatpush.bf16.msra.mxu0 %v447
    %581 = vmatpush.bf16.msra.mxu0 %v439
    %582 = vmatpush.bf16.msra.mxu0 %v431
    %583 = vmatpush.bf16.msra.mxu0 %v423
    %584 = vmatpush.bf16.msra.mxu0 %v415
    %585 = vmatpush.bf16.msra.mxu0 %v407
    %586 = vmatpush.bf16.msra.mxu0 %v399
    %587 = vmatmul.bf16.gmra.mxu0 %v201
    %v588 = vpop.f32.mrf.mxu0
    %v589 = vadd.f32 0.0, %v588
    %v590 = vpop.f32.mrf.mxu0
    %v591 = vadd.f32 0.0, %v590
    %592 = vdwg.mxu0
    %593 = vmatpush.bf16.msra.mxu0 %v456
    %594 = vmatpush.bf16.msra.mxu0 %v448
    %595 = vmatpush.bf16.msra.mxu0 %v440
    %596 = vmatpush.bf16.msra.mxu0 %v432
    %597 = vmatpush.bf16.msra.mxu0 %v424
    %598 = vmatpush.bf16.msra.mxu0 %v416
    %599 = vmatpush.bf16.msra.mxu0 %v408
    %600 = vmatpush.bf16.msra.mxu0 %v400
    %601 = vmatmul.bf16.gmra.mxu0 %v201
    %v602 = vpop.f32.mrf.mxu0
    %v603 = vadd.f32 0.0, %v602
    %v604 = vpop.f32.mrf.mxu0
    %v605 = vadd.f32 0.0, %v604
    %606 = vdwg.mxu0
    %607 = vmatpush.bf16.msra.mxu0 %v457
    %608 = vmatpush.bf16.msra.mxu0 %v449
    %609 = vmatpush.bf16.msra.mxu0 %v441
    %610 = vmatpush.bf16.msra.mxu0 %v433
    %611 = vmatpush.bf16.msra.mxu0 %v425
    %612 = vmatpush.bf16.msra.mxu0 %v417
    %613 = vmatpush.bf16.msra.mxu0 %v409
    %614 = vmatpush.bf16.msra.mxu0 %v401
    %615 = vmatmul.bf16.gmra.mxu0 %v201
    %v616 = vpop.f32.mrf.mxu0
    %v617 = vadd.f32 0.0, %v616
    %v618 = vpop.f32.mrf.mxu0
    %v619 = vadd.f32 0.0, %v618
    %620 = vdwg.mxu0
    %621 = vmatpush.bf16.msra.mxu0 %v458
    %622 = vmatpush.bf16.msra.mxu0 %v450
    %623 = vmatpush.bf16.msra.mxu0 %v442
    %624 = vmatpush.bf16.msra.mxu0 %v434
    %625 = vmatpush.bf16.msra.mxu0 %v426
    %626 = vmatpush.bf16.msra.mxu0 %v418
    %627 = vmatpush.bf16.msra.mxu0 %v410
    %628 = vmatpush.bf16.msra.mxu0 %v402
    %629 = vmatmul.bf16.gmra.mxu0 %v201
    %v630 = vpop.f32.mrf.mxu0
    %v631 = vadd.f32 0.0, %v630
    %v632 = vpop.f32.mrf.mxu0
    %v633 = vadd.f32 0.0, %v632
    %634 = vdwg.mxu0
    %v637 = vunpack.c.l.b16 %v65
    %v638 = vunpack.c.l.b16 %v66
    %v639 = vpack.c.b16 %v638, %v637
    %v705 = vunpack.c.l.b16 %v67
    %v706 = vunpack.c.h.b16 %v67
    %v707 = vunpack.c.l.b16 %v68
    %v708 = vunpack.c.h.b16 %v68
    %v709 = vunpack.c.l.b16 %v69
    %v710 = vunpack.c.h.b16 %v69
    %v711 = vunpack.c.l.b16 %v70
    %v712 = vunpack.c.h.b16 %v70
    %v713 = vunpack.c.l.b16 %v71
    %v714 = vunpack.c.h.b16 %v71
    %v715 = vunpack.c.l.b16 %v72
    %v716 = vunpack.c.h.b16 %v72
    %v717 = vunpack.c.l.b16 %v73
    %v718 = vunpack.c.h.b16 %v73
    %v719 = vunpack.c.l.b16 %v74
    %v720 = vunpack.c.h.b16 %v74
    %v721 = vunpack.c.l.b16 %v75
    %v722 = vunpack.c.h.b16 %v75
    %v723 = vunpack.c.l.b16 %v76
    %v724 = vunpack.c.h.b16 %v76
    %v725 = vunpack.c.l.b16 %v77
    %v726 = vunpack.c.h.b16 %v77
    %v727 = vunpack.c.l.b16 %v78
    %v728 = vunpack.c.h.b16 %v78
    %v729 = vunpack.c.l.b16 %v79
    %v730 = vunpack.c.h.b16 %v79
    %v731 = vunpack.c.l.b16 %v80
    %v732 = vunpack.c.h.b16 %v80
    %v733 = vunpack.c.l.b16 %v81
    %v734 = vunpack.c.h.b16 %v81
    %v735 = vunpack.c.l.b16 %v82
    %v736 = vunpack.c.h.b16 %v82
    %v737 = vunpack.c.l.b16 %v83
    %v738 = vunpack.c.h.b16 %v83
    %v739 = vunpack.c.l.b16 %v84
    %v740 = vunpack.c.h.b16 %v84
    %v741 = vunpack.c.l.b16 %v85
    %v742 = vunpack.c.h.b16 %v85
    %v743 = vunpack.c.l.b16 %v86
    %v744 = vunpack.c.h.b16 %v86
    %v745 = vunpack.c.l.b16 %v87
    %v746 = vunpack.c.h.b16 %v87
    %v747 = vunpack.c.l.b16 %v88
    %v748 = vunpack.c.h.b16 %v88
    %v749 = vunpack.c.l.b16 %v89
    %v750 = vunpack.c.h.b16 %v89
    %v751 = vunpack.c.l.b16 %v90
    %v752 = vunpack.c.h.b16 %v90
    %v753 = vunpack.c.l.b16 %v91
    %v754 = vunpack.c.h.b16 %v91
    %v755 = vunpack.c.l.b16 %v92
    %v756 = vunpack.c.h.b16 %v92
    %v757 = vunpack.c.l.b16 %v93
    %v758 = vunpack.c.h.b16 %v93
    %v759 = vunpack.c.l.b16 %v94
    %v760 = vunpack.c.h.b16 %v94
    %v761 = vunpack.c.l.b16 %v95
    %v762 = vunpack.c.h.b16 %v95
    %v763 = vunpack.c.l.b16 %v96
    %v764 = vunpack.c.h.b16 %v96
    %v765 = vunpack.c.l.b16 %v97
    %v766 = vunpack.c.h.b16 %v97
    %v767 = vunpack.c.l.b16 %v98
    %v768 = vunpack.c.h.b16 %v98
    %v769 = vunpack.c.l.b16 %v99
    %v770 = vunpack.c.h.b16 %v99
    %v771 = vunpack.c.l.b16 %v100
    %v772 = vunpack.c.h.b16 %v100
    %v773 = vunpack.c.l.b16 %v101
    %v774 = vunpack.c.h.b16 %v101
    %v775 = vunpack.c.l.b16 %v102
    %v776 = vunpack.c.h.b16 %v102
    %v777 = vunpack.c.l.b16 %v103
    %v778 = vunpack.c.h.b16 %v103
    %v779 = vunpack.c.l.b16 %v104
    %v780 = vunpack.c.h.b16 %v104
    %v781 = vunpack.c.l.b16 %v105
    %v782 = vunpack.c.h.b16 %v105
    %v783 = vunpack.c.l.b16 %v106
    %v784 = vunpack.c.h.b16 %v106
    %v785 = vunpack.c.l.b16 %v107
    %v786 = vunpack.c.h.b16 %v107
    %v787 = vunpack.c.l.b16 %v108
    %v788 = vunpack.c.h.b16 %v108
    %v789 = vunpack.c.l.b16 %v109
    %v790 = vunpack.c.h.b16 %v109
    %v791 = vunpack.c.l.b16 %v110
    %v792 = vunpack.c.h.b16 %v110
    %v793 = vunpack.c.l.b16 %v111
    %v794 = vunpack.c.h.b16 %v111
    %v795 = vunpack.c.l.b16 %v112
    %v796 = vunpack.c.h.b16 %v112
    %v797 = vunpack.c.l.b16 %v113
    %v798 = vunpack.c.h.b16 %v113
    %v799 = vunpack.c.l.b16 %v114
    %v800 = vunpack.c.h.b16 %v114
    %v801 = vunpack.c.l.b16 %v115
    %v802 = vunpack.c.h.b16 %v115
    %v803 = vunpack.c.l.b16 %v116
    %v804 = vunpack.c.h.b16 %v116
    %v805 = vunpack.c.l.b16 %v117
    %v806 = vunpack.c.h.b16 %v117
    %v807 = vunpack.c.l.b16 %v118
    %v808 = vunpack.c.h.b16 %v118
    %v809 = vunpack.c.l.b16 %v119
    %v810 = vunpack.c.h.b16 %v119
    %v811 = vunpack.c.l.b16 %v120
    %v812 = vunpack.c.h.b16 %v120
    %v813 = vunpack.c.l.b16 %v121
    %v814 = vunpack.c.h.b16 %v121
    %v815 = vunpack.c.l.b16 %v122
    %v816 = vunpack.c.h.b16 %v122
    %v817 = vunpack.c.l.b16 %v123
    %v818 = vunpack.c.h.b16 %v123
    %v819 = vunpack.c.l.b16 %v124
    %v820 = vunpack.c.h.b16 %v124
    %v821 = vunpack.c.l.b16 %v125
    %v822 = vunpack.c.h.b16 %v125
    %v823 = vunpack.c.l.b16 %v126
    %v824 = vunpack.c.h.b16 %v126
    %v825 = vunpack.c.l.b16 %v127
    %v826 = vunpack.c.h.b16 %v127
    %v827 = vunpack.c.l.b16 %v128
    %v828 = vunpack.c.h.b16 %v128
    %v829 = vunpack.c.l.b16 %v129
    %v830 = vunpack.c.h.b16 %v129
    %v831 = vunpack.c.l.b16 %v130
    %v832 = vunpack.c.h.b16 %v130
    %v833 = vpack.c.b16 %v713, %v705
    %v834 = vpack.c.b16 %v714, %v706
    %v835 = vpack.c.b16 %v715, %v707
    %v836 = vpack.c.b16 %v716, %v708
    %v837 = vpack.c.b16 %v717, %v709
    %v838 = vpack.c.b16 %v718, %v710
    %v839 = vpack.c.b16 %v719, %v711
    %v840 = vpack.c.b16 %v720, %v712
    %v841 = vpack.c.b16 %v729, %v721
    %v842 = vpack.c.b16 %v730, %v722
    %v843 = vpack.c.b16 %v731, %v723
    %v844 = vpack.c.b16 %v732, %v724
    %v845 = vpack.c.b16 %v733, %v725
    %v846 = vpack.c.b16 %v734, %v726
    %v847 = vpack.c.b16 %v735, %v727
    %v848 = vpack.c.b16 %v736, %v728
    %v849 = vpack.c.b16 %v745, %v737
    %v850 = vpack.c.b16 %v746, %v738
    %v851 = vpack.c.b16 %v747, %v739
    %v852 = vpack.c.b16 %v748, %v740
    %v853 = vpack.c.b16 %v749, %v741
    %v854 = vpack.c.b16 %v750, %v742
    %v855 = vpack.c.b16 %v751, %v743
    %v856 = vpack.c.b16 %v752, %v744
    %v857 = vpack.c.b16 %v761, %v753
    %v858 = vpack.c.b16 %v762, %v754
    %v859 = vpack.c.b16 %v763, %v755
    %v860 = vpack.c.b16 %v764, %v756
    %v861 = vpack.c.b16 %v765, %v757
    %v862 = vpack.c.b16 %v766, %v758
    %v863 = vpack.c.b16 %v767, %v759
    %v864 = vpack.c.b16 %v768, %v760
    %v865 = vpack.c.b16 %v777, %v769
    %v866 = vpack.c.b16 %v778, %v770
    %v867 = vpack.c.b16 %v779, %v771
    %v868 = vpack.c.b16 %v780, %v772
    %v869 = vpack.c.b16 %v781, %v773
    %v870 = vpack.c.b16 %v782, %v774
    %v871 = vpack.c.b16 %v783, %v775
    %v872 = vpack.c.b16 %v784, %v776
    %v873 = vpack.c.b16 %v793, %v785
    %v874 = vpack.c.b16 %v794, %v786
    %v875 = vpack.c.b16 %v795, %v787
    %v876 = vpack.c.b16 %v796, %v788
    %v877 = vpack.c.b16 %v797, %v789
    %v878 = vpack.c.b16 %v798, %v790
    %v879 = vpack.c.b16 %v799, %v791
    %v880 = vpack.c.b16 %v800, %v792
    %v881 = vpack.c.b16 %v809, %v801
    %v882 = vpack.c.b16 %v810, %v802
    %v883 = vpack.c.b16 %v811, %v803
    %v884 = vpack.c.b16 %v812, %v804
    %v885 = vpack.c.b16 %v813, %v805
    %v886 = vpack.c.b16 %v814, %v806
    %v887 = vpack.c.b16 %v815, %v807
    %v888 = vpack.c.b16 %v816, %v808
    %v889 = vpack.c.b16 %v825, %v817
    %v890 = vpack.c.b16 %v826, %v818
    %v891 = vpack.c.b16 %v827, %v819
    %v892 = vpack.c.b16 %v828, %v820
    %v893 = vpack.c.b16 %v829, %v821
    %v894 = vpack.c.b16 %v830, %v822
    %v895 = vpack.c.b16 %v831, %v823
    %v896 = vpack.c.b16 %v832, %v824
    %961 = vmatpush.bf16.msra.mxu0 %v889
    %962 = vmatpush.bf16.msra.mxu0 %v881
    %963 = vmatpush.bf16.msra.mxu0 %v873
    %964 = vmatpush.bf16.msra.mxu0 %v865
    %965 = vmatpush.bf16.msra.mxu0 %v857
    %966 = vmatpush.bf16.msra.mxu0 %v849
    %967 = vmatpush.bf16.msra.mxu0 %v841
    %968 = vmatpush.bf16.msra.mxu0 %v833
    %969 = vmatmul.bf16.gmra.mxu0 %v639
    %v970 = vpop.f32.mrf.mxu0
    %v971 = vadd.f32 %v533, %v970
    %v972 = vpop.f32.mrf.mxu0
    %v973 = vadd.f32 %v535, %v972
    %974 = vdwg.mxu0
    %975 = vmatpush.bf16.msra.mxu0 %v890
    %976 = vmatpush.bf16.msra.mxu0 %v882
    %977 = vmatpush.bf16.msra.mxu0 %v874
    %978 = vmatpush.bf16.msra.mxu0 %v866
    %979 = vmatpush.bf16.msra.mxu0 %v858
    %980 = vmatpush.bf16.msra.mxu0 %v850
    %981 = vmatpush.bf16.msra.mxu0 %v842
    %982 = vmatpush.bf16.msra.mxu0 %v834
    %983 = vmatmul.bf16.gmra.mxu0 %v639
    %v984 = vpop.f32.mrf.mxu0
    %v985 = vadd.f32 %v547, %v984
    %v986 = vpop.f32.mrf.mxu0
    %v987 = vadd.f32 %v549, %v986
    %988 = vdwg.mxu0
    %989 = vmatpush.bf16.msra.mxu0 %v891
    %990 = vmatpush.bf16.msra.mxu0 %v883
    %991 = vmatpush.bf16.msra.mxu0 %v875
    %992 = vmatpush.bf16.msra.mxu0 %v867
    %993 = vmatpush.bf16.msra.mxu0 %v859
    %994 = vmatpush.bf16.msra.mxu0 %v851
    %995 = vmatpush.bf16.msra.mxu0 %v843
    %996 = vmatpush.bf16.msra.mxu0 %v835
    %997 = vmatmul.bf16.gmra.mxu0 %v639
    %v998 = vpop.f32.mrf.mxu0
    %v999 = vadd.f32 %v561, %v998
    %v1000 = vpop.f32.mrf.mxu0
    %v1001 = vadd.f32 %v563, %v1000
    %1002 = vdwg.mxu0
    %1003 = vmatpush.bf16.msra.mxu0 %v892
    %1004 = vmatpush.bf16.msra.mxu0 %v884
    %1005 = vmatpush.bf16.msra.mxu0 %v876
    %1006 = vmatpush.bf16.msra.mxu0 %v868
    %1007 = vmatpush.bf16.msra.mxu0 %v860
    %1008 = vmatpush.bf16.msra.mxu0 %v852
    %1009 = vmatpush.bf16.msra.mxu0 %v844
    %1010 = vmatpush.bf16.msra.mxu0 %v836
    %1011 = vmatmul.bf16.gmra.mxu0 %v639
    %v1012 = vpop.f32.mrf.mxu0
    %v1013 = vadd.f32 %v575, %v1012
    %v1014 = vpop.f32.mrf.mxu0
    %v1015 = vadd.f32 %v577, %v1014
    %1016 = vdwg.mxu0
    %1017 = vmatpush.bf16.msra.mxu0 %v893
    %1018 = vmatpush.bf16.msra.mxu0 %v885
    %1019 = vmatpush.bf16.msra.mxu0 %v877
    %1020 = vmatpush.bf16.msra.mxu0 %v869
    %1021 = vmatpush.bf16.msra.mxu0 %v861
    %1022 = vmatpush.bf16.msra.mxu0 %v853
    %1023 = vmatpush.bf16.msra.mxu0 %v845
    %1024 = vmatpush.bf16.msra.mxu0 %v837
    %1025 = vmatmul.bf16.gmra.mxu0 %v639
    %v1026 = vpop.f32.mrf.mxu0
    %v1027 = vadd.f32 %v589, %v1026
    %v1028 = vpop.f32.mrf.mxu0
    %v1029 = vadd.f32 %v591, %v1028
    %1030 = vdwg.mxu0
    %1031 = vmatpush.bf16.msra.mxu0 %v894
    %1032 = vmatpush.bf16.msra.mxu0 %v886
    %1033 = vmatpush.bf16.msra.mxu0 %v878
    %1034 = vmatpush.bf16.msra.mxu0 %v870
    %1035 = vmatpush.bf16.msra.mxu0 %v862
    %1036 = vmatpush.bf16.msra.mxu0 %v854
    %1037 = vmatpush.bf16.msra.mxu0 %v846
    %1038 = vmatpush.bf16.msra.mxu0 %v838
    %1039 = vmatmul.bf16.gmra.mxu0 %v639
    %v1040 = vpop.f32.mrf.mxu0
    %v1041 = vadd.f32 %v603, %v1040
    %v1042 = vpop.f32.mrf.mxu0
    %v1043 = vadd.f32 %v605, %v1042
    %1044 = vdwg.mxu0
    %1045 = vmatpush.bf16.msra.mxu0 %v895
    %1046 = vmatpush.bf16.msra.mxu0 %v887
    %1047 = vmatpush.bf16.msra.mxu0 %v879
    %1048 = vmatpush.bf16.msra.mxu0 %v871
    %1049 = vmatpush.bf16.msra.mxu0 %v863
    %1050 = vmatpush.bf16.msra.mxu0 %v855
    %1051 = vmatpush.bf16.msra.mxu0 %v847
    %1052 = vmatpush.bf16.msra.mxu0 %v839
    %1053 = vmatmul.bf16.gmra.mxu0 %v639
    %v1054 = vpop.f32.mrf.mxu0
    %v1055 = vadd.f32 %v617, %v1054
    %v1056 = vpop.f32.mrf.mxu0
    %v1057 = vadd.f32 %v619, %v1056
    %1058 = vdwg.mxu0
    %1059 = vmatpush.bf16.msra.mxu0 %v896
    %1060 = vmatpush.bf16.msra.mxu0 %v888
    %1061 = vmatpush.bf16.msra.mxu0 %v880
    %1062 = vmatpush.bf16.msra.mxu0 %v872
    %1063 = vmatpush.bf16.msra.mxu0 %v864
    %1064 = vmatpush.bf16.msra.mxu0 %v856
    %1065 = vmatpush.bf16.msra.mxu0 %v848
    %1066 = vmatpush.bf16.msra.mxu0 %v840
    %1067 = vmatmul.bf16.gmra.mxu0 %v639
    %v1068 = vpop.f32.mrf.mxu0
    %v1069 = vadd.f32 %v631, %v1068
    %v1070 = vpop.f32.mrf.mxu0
    %v1071 = vadd.f32 %v633, %v1070
    %1072 = vdwg.mxu0
    %v1073 = vld [vmem:[#allocation6] sm:$0xff]
    %v1075 = vperm.slane %v1073, 0
    %v1076 = vperm.slane %v1073, 1
    %v1077 = vperm.slane %v1073, 2
    %v1078 = vperm.slane %v1073, 3
    %v1079 = vperm.slane %v1073, 4
    %v1080 = vperm.slane %v1073, 5
    %v1081 = vperm.slane %v1073, 6
    %v1082 = vperm.slane %v1073, 7
    %v1091 = vadd.f32 %v971, %v1075
    %v1092 = vadd.f32 %v985, %v1076
    %v1093 = vadd.f32 %v999, %v1077
    %v1094 = vadd.f32 %v1013, %v1078
    %v1095 = vadd.f32 %v1027, %v1079
    %v1096 = vadd.f32 %v1041, %v1080
    %v1097 = vadd.f32 %v1055, %v1081
    %v1098 = vadd.f32 %v1069, %v1082
    %v1099 = vadd.f32 %v973, %v1075
    %v1100 = vadd.f32 %v987, %v1076
    %v1101 = vadd.f32 %v1001, %v1077
    %v1102 = vadd.f32 %v1015, %v1078
    %v1103 = vadd.f32 %v1029, %v1079
    %v1104 = vadd.f32 %v1043, %v1080
    %v1105 = vadd.f32 %v1057, %v1081
    %v1106 = vadd.f32 %v1071, %v1082
    %v1107 = vpack.c.bf16 %v1092, %v1091
    %v1108 = vpack.c.bf16 %v1094, %v1093
    %v1109 = vpack.c.bf16 %v1096, %v1095
    %v1110 = vpack.c.bf16 %v1098, %v1097
    %v1111 = vpack.c.bf16 %v1100, %v1099
    %v1112 = vpack.c.bf16 %v1102, %v1101
    %v1113 = vpack.c.bf16 %v1104, %v1103
    %v1114 = vpack.c.bf16 %v1106, %v1105
    %1115 = vst [vmem:[%s5] sm:$0xff] %v1107
    %1116 = vst [vmem:[%s5 + $0x8] sm:$0xff] %v1108
    %1117 = vst [vmem:[%s5 + $0x10] sm:$0xff] %v1109
    %1118 = vst [vmem:[%s5 + $0x18] sm:$0xff] %v1110
    %1119 = vst [vmem:[%s5 + $0x20] sm:$0xff] %v1111
    %1120 = vst [vmem:[%s5 + $0x28] sm:$0xff] %v1112
    %1121 = vst [vmem:[%s5 + $0x30] sm:$0xff] %v1113
    %1122 = vst [vmem:[%s5 + $0x38] sm:$0xff] %v1114
    // Predicated region
    $region34: #{rnn_fc_forward.7} parent=1 // pred_check
      _
    $region35: #{rnn_fc_forward.7} parent=1 // pred_check_branch
      %1124 = sbr.rel (0) target = $region37
    $region36: #{rnn_fc_forward.7} parent=1 // pred_region
      _
    $region37: #{rnn_fc_forward.7} parent=1 // pred_fallthru
      _
    // Predicated region
    $region38: #{rnn_fc_forward.7} parent=1 // pred_check
      _
    $region39: #{rnn_fc_forward.7} parent=1 // pred_check_branch
      %1126 = sbr.rel (0) target = $region41
    $region40: #{rnn_fc_forward.7} parent=1 // pred_region
      _
    $region41: #{rnn_fc_forward.7} parent=1 // pred_fallthru
      _
    %1127 = vsyncpa [#allocation3], 1
    %1128 = vsyncpa [#allocation5], 1

// kernel: rnn_fc_forward.9
$region0: #{rnn_fc_forward.9}
  #allocation0 [shape = 'u32[]', space=smem, size = 0x4, offset = 0x4, fixed_abs, tag = 'smem constant byte address 0x4 - core index']
  #allocation1 [shape = 'u32[72,128]{1,0:T(1,128)}', space=vmem, size = 0x9000, scoped, tag = 'internal scratch']
  %s0 = inlined_call_operand.vmem [shape: bf16[16,128], index: 0, kind: input, shape index: {}]
  %s1 = inlined_call_operand.vmem [shape: bf16[16,128], index: 1, kind: input, shape index: {}]
  %s2 = inlined_call_operand.hbm [shape: bf16[128,128], index: 2, kind: input, shape index: {}]
  %s3 = inlined_call_operand.hbm [shape: bf16[128,128], index: 3, kind: input, shape index: {}]
  %s4 = inlined_call_operand.vmem [shape: f32[1,128], index: 4, kind: input, shape index: {}]
  %s5 = inlined_call_operand.vmem [shape: f32[16,128], index: 5, kind: output, shape index: {}]
  %s6 = sld [smem:[#allocation0]]
  $region38: #{rnn_fc_forward.9} parent=0
    _
  %s8 = ssub.s32 1, %s6
  %s9 = scalar_select 0, %s8, %s6
  $region1: #{rnn_fc_forward.9} parent=0
    #allocation2 [shape = 'u8[32768]{0}', space=vmem, size = 0x8000, scoped, tag = 'input window, operand 2, single buffered']
    #allocation3 [shape = 's32[1]{0}', space=sflag, size = 0x4, scoped, tag = 'scoped memory for rnn_fc_forward.9']
    #allocation4 [shape = 'u8[32768]{0}', space=vmem, size = 0x8000, scoped, tag = 'input window, operand 3, single buffered']
    #allocation5 [shape = 's32[1]{0}', space=sflag, size = 0x4, scoped, tag = 'scoped memory for rnn_fc_forward.9']
    %10 = vsyncpa [#allocation3], 0
    %11 = vsyncpa [#allocation5], 0
    // Predicated region
    $region2: #{rnn_fc_forward.9} parent=1 // pred_check
      _
    $region3: #{rnn_fc_forward.9} parent=1 // pred_check_branch
      %13 = sbr.rel (0) target = $region5
    $region4: #{rnn_fc_forward.9} parent=1 // pred_region
      _
    $region5: #{rnn_fc_forward.9} parent=1 // pred_fallthru
      _
    // Predicated region
    $region6: #{rnn_fc_forward.9} parent=1 // pred_check
      _
    $region7: #{rnn_fc_forward.9} parent=1 // pred_check_branch
      %15 = sbr.rel (0) target = $region9
    $region8: #{rnn_fc_forward.9} parent=1 // pred_region
      _
    $region9: #{rnn_fc_forward.9} parent=1 // pred_fallthru
      _
    // Predicated region
    $region10: #{rnn_fc_forward.9} parent=1 // pred_check
      _
    $region11: #{rnn_fc_forward.9} parent=1 // pred_check_branch
      %17 = sbr.rel (0) target = $region13
    $region12: #{rnn_fc_forward.9} parent=1 // pred_region
      %19 = vsyncadd [#allocation3], 0
      %s20 = sshll.u32 %s2, 4
      %s21 = int_to_ptr.hbm [resolvable:$true] %s20
      %s22 = sshll.u32 [#allocation2], 4
      %s23 = int_to_ptr.vmem [resolvable:$true] %s22
      %28 = dma.hbm_to_vmem [thread:$0]  %s21, 1024, %s23, [#allocation3], 64, 64, 4
    $region13: #{rnn_fc_forward.9} parent=1 // pred_fallthru
      _
    // Predicated region
    $region14: #{rnn_fc_forward.9} parent=1 // pred_check
      _
    $region15: #{rnn_fc_forward.9} parent=1 // pred_check_branch
      %30 = sbr.rel (0) target = $region17
    $region16: #{rnn_fc_forward.9} parent=1 // pred_region
      %32 = vsyncadd [#allocation5], 0
      %s33 = sshll.u32 %s3, 4
      %s34 = int_to_ptr.hbm [resolvable:$true] %s33
      %s35 = sshll.u32 [#allocation4], 4
      %s36 = int_to_ptr.vmem [resolvable:$true] %s35
      %41 = dma.hbm_to_vmem [thread:$0]  %s34, 1024, %s36, [#allocation5], 64, 64, 4
    $region17: #{rnn_fc_forward.9} parent=1 // pred_fallthru
      _
    // Predicated region
    $region18: #{rnn_fc_forward.9} parent=1 // pred_check
      _
    $region19: #{rnn_fc_forward.9} parent=1 // pred_check_branch
      %43 = sbr.rel (0) target = $region21
    $region20: #{rnn_fc_forward.9} parent=1 // pred_region
      _
    $region21: #{rnn_fc_forward.9} parent=1 // pred_fallthru
      _
    // Predicated region
    $region22: #{rnn_fc_forward.9} parent=1 // pred_check
      _
    $region23: #{rnn_fc_forward.9} parent=1 // pred_check_branch
      %45 = sbr.rel (0) target = $region25
    $region24: #{rnn_fc_forward.9} parent=1 // pred_region
      %47 = dma.done [#allocation3], 1024
    $region25: #{rnn_fc_forward.9} parent=1 // pred_fallthru
      _
    // Predicated region
    $region26: #{rnn_fc_forward.9} parent=1 // pred_check
      _
    $region27: #{rnn_fc_forward.9} parent=1 // pred_check_branch
      %49 = sbr.rel (0) target = $region29
    $region28: #{rnn_fc_forward.9} parent=1 // pred_region
      %51 = dma.done [#allocation5], 1024
    $region29: #{rnn_fc_forward.9} parent=1 // pred_fallthru
      _
    %v52 = vld [vmem:[%s0] sm:$0xf]
    %v53 = vld [vmem:[%s0 + $0x4] sm:$0xf]
    %v54 = vunpack.c.l.bf16 %v52
    %v55 = vunpack.c.l.bf16 %v53
    %v56 = vxor.u32 %v54, 2147483648
    %v57 = vxor.u32 %v55, 2147483648
    %v58 = vmul.f32 %v56, 1.442695
    %v59 = vpow.pop %v58
    %v60 = vmul.f32 %v57, 1.442695
    %v61 = vpow.pop %v60
    %v62 = vadd.f32 %v59, 1.0
    %v63 = vadd.f32 %v61, 1.0
    %v64 = vrcp.pop %v62
    %v65 = vmul.f32 %v62, %v64
    %v66 = vsub.f32 1.0, %v65
    %v67 = vmul.f32 %v64, %v66
    %v68 = vadd.f32 %v64, %v67
    %vm69 = vweird.f32 %v62
    %vm70 = vweird.f32 %v64
    %vm71 = vmor %vm69, %vm70
    %v72 = vsel %vm71, %v64, %v68
    %v73 = vand.u32 2147483647, %v62
    %vm74 = vcmp.eq.f32.partialorder %v73, 8.507059e+37
    %v75 = vand.u32 %v62, 2147483648
    %v76 = vor.u32 1.1754944e-38, %v75
    %v77 = vsel %vm74, %v76, %v72
    %v78 = vmul.f32 1.0, %v77
    %v79 = vrcp.pop %v63
    %v80 = vmul.f32 %v63, %v79
    %v81 = vsub.f32 1.0, %v80
    %v82 = vmul.f32 %v79, %v81
    %v83 = vadd.f32 %v79, %v82
    %vm84 = vweird.f32 %v63
    %vm85 = vweird.f32 %v79
    %vm86 = vmor %vm84, %vm85
    %v87 = vsel %vm86, %v79, %v83
    %v88 = vand.u32 2147483647, %v63
    %vm89 = vcmp.eq.f32.partialorder %v88, 8.507059e+37
    %v90 = vand.u32 %v63, 2147483648
    %v91 = vor.u32 1.1754944e-38, %v90
    %v92 = vsel %vm89, %v91, %v87
    %v93 = vmul.f32 1.0, %v92
    %v94 = vmul.f32 %v54, %v78
    %v95 = vmul.f32 %v55, %v93
    %v96 = vpack.c.bf16 %v95, %v94
    %v97 = vld [vmem:[#allocation2] sm:$0xf]
    %v98 = vld [vmem:[#allocation2 + $0x4] sm:$0xf]
    %v99 = vld [vmem:[#allocation2 + $0x8] sm:$0xf]
    %v100 = vld [vmem:[#allocation2 + $0xc] sm:$0xf]
    %v101 = vld [vmem:[#allocation2 + $0x10] sm:$0xf]
    %v102 = vld [vmem:[#allocation2 + $0x14] sm:$0xf]
    %v103 = vld [vmem:[#allocation2 + $0x18] sm:$0xf]
    %v104 = vld [vmem:[#allocation2 + $0x1c] sm:$0xf]
    %v105 = vld [vmem:[#allocation2 + $0x20] sm:$0xf]
    %v106 = vld [vmem:[#allocation2 + $0x24] sm:$0xf]
    %v107 = vld [vmem:[#allocation2 + $0x28] sm:$0xf]
    %v108 = vld [vmem:[#allocation2 + $0x2c] sm:$0xf]
    %v109 = vld [vmem:[#allocation2 + $0x30] sm:$0xf]
    %v110 = vld [vmem:[#allocation2 + $0x34] sm:$0xf]
    %v111 = vld [vmem:[#allocation2 + $0x38] sm:$0xf]
    %v112 = vld [vmem:[#allocation2 + $0x3c] sm:$0xf]
    %v113 = vld [vmem:[%s1] sm:$0xf]
    %v114 = vld [vmem:[%s1 + $0x4] sm:$0xf]
    %v115 = vunpack.c.l.bf16 %v113
    %v116 = vunpack.c.l.bf16 %v114
    %v117 = vxor.u32 %v115, 2147483648
    %v118 = vxor.u32 %v116, 2147483648
    %v119 = vmul.f32 %v117, 1.442695
    %v120 = vpow.pop %v119
    %v121 = vmul.f32 %v118, 1.442695
    %v122 = vpow.pop %v121
    %v123 = vadd.f32 %v120, 1.0
    %v124 = vadd.f32 %v122, 1.0
    %v125 = vrcp.pop %v123
    %v126 = vmul.f32 %v123, %v125
    %v127 = vsub.f32 1.0, %v126
    %v128 = vmul.f32 %v125, %v127
    %v129 = vadd.f32 %v125, %v128
    %vm130 = vweird.f32 %v123
    %vm131 = vweird.f32 %v125
    %vm132 = vmor %vm130, %vm131
    %v133 = vsel %vm132, %v125, %v129
    %v134 = vand.u32 2147483647, %v123
    %vm135 = vcmp.eq.f32.partialorder %v134, 8.507059e+37
    %v136 = vand.u32 %v123, 2147483648
    %v137 = vor.u32 1.1754944e-38, %v136
    %v138 = vsel %vm135, %v137, %v133
    %v139 = vmul.f32 1.0, %v138
    %v140 = vrcp.pop %v124
    %v141 = vmul.f32 %v124, %v140
    %v142 = vsub.f32 1.0, %v141
    %v143 = vmul.f32 %v140, %v142
    %v144 = vadd.f32 %v140, %v143
    %vm145 = vweird.f32 %v124
    %vm146 = vweird.f32 %v140
    %vm147 = vmor %vm145, %vm146
    %v148 = vsel %vm147, %v140, %v144
    %v149 = vand.u32 2147483647, %v124
    %vm150 = vcmp.eq.f32.partialorder %v149, 8.507059e+37
    %v151 = vand.u32 %v124, 2147483648
    %v152 = vor.u32 1.1754944e-38, %v151
    %v153 = vsel %vm150, %v152, %v148
    %v154 = vmul.f32 1.0, %v153
    %v155 = vmul.f32 %v115, %v139
    %v156 = vmul.f32 %v116, %v154
    %v157 = vpack.c.bf16 %v156, %v155
    %v158 = vld [vmem:[#allocation4] sm:$0xf]
    %v159 = vld [vmem:[#allocation4 + $0x4] sm:$0xf]
    %v160 = vld [vmem:[#allocation4 + $0x8] sm:$0xf]
    %v161 = vld [vmem:[#allocation4 + $0xc] sm:$0xf]
    %v162 = vld [vmem:[#allocation4 + $0x10] sm:$0xf]
    %v163 = vld [vmem:[#allocation4 + $0x14] sm:$0xf]
    %v164 = vld [vmem:[#allocation4 + $0x18] sm:$0xf]
    %v165 = vld [vmem:[#allocation4 + $0x1c] sm:$0xf]
    %v166 = vld [vmem:[#allocation4 + $0x20] sm:$0xf]
    %v167 = vld [vmem:[#allocation4 + $0x24] sm:$0xf]
    %v168 = vld [vmem:[#allocation4 + $0x28] sm:$0xf]
    %v169 = vld [vmem:[#allocation4 + $0x2c] sm:$0xf]
    %v170 = vld [vmem:[#allocation4 + $0x30] sm:$0xf]
    %v171 = vld [vmem:[#allocation4 + $0x34] sm:$0xf]
    %v172 = vld [vmem:[#allocation4 + $0x38] sm:$0xf]
    %v173 = vld [vmem:[#allocation4 + $0x3c] sm:$0xf]
    %v190 = vunpack.c.l.b16 %v158
    %v191 = vunpack.c.l.b16 %v159
    %v192 = vunpack.c.l.b16 %v160
    %v193 = vunpack.c.l.b16 %v161
    %v194 = vunpack.c.l.b16 %v162
    %v195 = vunpack.c.l.b16 %v163
    %v196 = vunpack.c.l.b16 %v164
    %v197 = vunpack.c.l.b16 %v165
    %v198 = vunpack.c.l.b16 %v166
    %v199 = vunpack.c.l.b16 %v167
    %v200 = vunpack.c.l.b16 %v168
    %v201 = vunpack.c.l.b16 %v169
    %v202 = vunpack.c.l.b16 %v170
    %v203 = vunpack.c.l.b16 %v171
    %v204 = vunpack.c.l.b16 %v172
    %v205 = vunpack.c.l.b16 %v173
    %v206 = vpack.c.b16 %v191, %v190
    %v207 = vpack.c.b16 %v193, %v192
    %v208 = vpack.c.b16 %v195, %v194
    %v209 = vpack.c.b16 %v197, %v196
    %v210 = vpack.c.b16 %v199, %v198
    %v211 = vpack.c.b16 %v201, %v200
    %v212 = vpack.c.b16 %v203, %v202
    %v213 = vpack.c.b16 %v205, %v204
    %222 = vmatpush.bf16.msra.mxu0 %v213
    %223 = vmatpush.bf16.msra.mxu0 %v212
    %224 = vmatpush.bf16.msra.mxu0 %v211
    %225 = vmatpush.bf16.msra.mxu0 %v210
    %226 = vmatpush.bf16.msra.mxu0 %v209
    %227 = vmatpush.bf16.msra.mxu0 %v208
    %228 = vmatpush.bf16.msra.mxu0 %v207
    %229 = vmatpush.bf16.msra.mxu0 %v206
    %230 = vmatmul.bf16.gmra.mxu0 %v157
    %v231 = vpop.f32.mrf.mxu0
    %v232 = vadd.f32 0.0, %v231
    %v233 = vpop.f32.mrf.mxu0
    %v234 = vadd.f32 0.0, %v233
    %235 = vdwg.mxu0
    %v252 = vunpack.c.l.b16 %v97
    %v253 = vunpack.c.l.b16 %v98
    %v254 = vunpack.c.l.b16 %v99
    %v255 = vunpack.c.l.b16 %v100
    %v256 = vunpack.c.l.b16 %v101
    %v257 = vunpack.c.l.b16 %v102
    %v258 = vunpack.c.l.b16 %v103
    %v259 = vunpack.c.l.b16 %v104
    %v260 = vunpack.c.l.b16 %v105
    %v261 = vunpack.c.l.b16 %v106
    %v262 = vunpack.c.l.b16 %v107
    %v263 = vunpack.c.l.b16 %v108
    %v264 = vunpack.c.l.b16 %v109
    %v265 = vunpack.c.l.b16 %v110
    %v266 = vunpack.c.l.b16 %v111
    %v267 = vunpack.c.l.b16 %v112
    %v268 = vpack.c.b16 %v253, %v252
    %v269 = vpack.c.b16 %v255, %v254
    %v270 = vpack.c.b16 %v257, %v256
    %v271 = vpack.c.b16 %v259, %v258
    %v272 = vpack.c.b16 %v261, %v260
    %v273 = vpack.c.b16 %v263, %v262
    %v274 = vpack.c.b16 %v265, %v264
    %v275 = vpack.c.b16 %v267, %v266
    %284 = vmatpush.bf16.msra.mxu0 %v275
    %285 = vmatpush.bf16.msra.mxu0 %v274
    %286 = vmatpush.bf16.msra.mxu0 %v273
    %287 = vmatpush.bf16.msra.mxu0 %v272
    %288 = vmatpush.bf16.msra.mxu0 %v271
    %289 = vmatpush.bf16.msra.mxu0 %v270
    %290 = vmatpush.bf16.msra.mxu0 %v269
    %291 = vmatpush.bf16.msra.mxu0 %v268
    %292 = vmatmul.bf16.gmra.mxu0 %v96
    %v293 = vpop.f32.mrf.mxu0
    %v294 = vadd.f32 %v232, %v293
    %v295 = vpop.f32.mrf.mxu0
    %v296 = vadd.f32 %v234, %v295
    %297 = vdwg.mxu0
    %v298 = vld [vmem:[%s4] sm:$0x1]
    %v300 = vperm.slane %v298, 0
    %v302 = vadd.f32 %v294, %v300
    %v303 = vadd.f32 %v296, %v300
    %304 = vst [vmem:[%s5] sm:$0xff] %v302
    %305 = vst [vmem:[%s5 + $0x8] sm:$0xff] %v303
    // Predicated region
    $region30: #{rnn_fc_forward.9} parent=1 // pred_check
      _
    $region31: #{rnn_fc_forward.9} parent=1 // pred_check_branch
      %307 = sbr.rel (0) target = $region33
    $region32: #{rnn_fc_forward.9} parent=1 // pred_region
      _
    $region33: #{rnn_fc_forward.9} parent=1 // pred_fallthru
      _
    // Predicated region
    $region34: #{rnn_fc_forward.9} parent=1 // pred_check
      _
    $region35: #{rnn_fc_forward.9} parent=1 // pred_check_branch
      %309 = sbr.rel (0) target = $region37
    $region36: #{rnn_fc_forward.9} parent=1 // pred_region
      _
    $region37: #{rnn_fc_forward.9} parent=1 // pred_fallthru
      _
    %310 = vsyncpa [#allocation3], 1
    %311 = vsyncpa [#allocation5], 1

</llo_original>
